<compile_context>
chip_gen: v5e
topology: v5e:2x2
jax: 0.10.0
libtpu: 0.0.40
codegen_flags: <defaults>
</compile_context>

<pallas_src>
import enum
import functools
import math

import jax
import jax.numpy as jnp
from jax.experimental import pallas as pl
from jax.experimental.pallas import tpu as pltpu


class SirenLayerType(enum.Enum):
    FIRST = enum.auto()
    HIDDEN = enum.auto()
    LAST = enum.auto()


def _round_up(x, m):
    return ((x + m - 1) // m) * m


# ---------------------------------------------------------------------------
# Pallas kernel: fused linear + (optional) sin(omega_0 * .) activation
# ---------------------------------------------------------------------------
def _siren_kernel(x_ref, wt_ref, b_ref, o_ref, *, omega_0, apply_activation):
    # x_ref : (tm, Kp)  VMEM tile of inputs
    # wt_ref: (Kp, Np)  full transposed weight (constant across grid steps)
    # b_ref : (1, Np)   bias row
    # o_ref : (tm, Np)  output tile
    y = jnp.dot(x_ref[...], wt_ref[...], preferred_element_type=jnp.float32)
    y = y + b_ref[...]                      # broadcast (1, Np) over rows
    if apply_activation:
        y = jnp.sin(omega_0 * y)
    o_ref[...] = y.astype(o_ref.dtype)


_VMEM_LIMIT_BYTES = 32 * 1024 * 1024   # below physical VMEM on v5e/v6e/v7x
_VMEM_TILE_BUDGET = 24 * 1024 * 1024   # headroom under the limit


def _choose_tm(m, k_pad, n_pad, dtype_bytes=4):
    """Largest power-of-two row tile that fits the VMEM budget, keeping >= 2
    grid steps when the batch allows it (v7x has two TensorCores)."""
    def fits(tm):
        io = 2 * tm * (k_pad + n_pad) * dtype_bytes   # double-buffered x + out tiles
        w = 2 * k_pad * n_pad * dtype_bytes           # weight (worst case: double-buffered)
        b = 2 * n_pad * dtype_bytes
        return io + w + b <= _VMEM_TILE_BUDGET

    tm = 8
    for cand in (2048, 1024, 512, 256, 128, 64, 32, 16, 8):
        if fits(cand):
            tm = cand
            break
    while tm > 8 and (m + tm - 1) // tm < 2:
        tm //= 2
    return tm


_SINGLE_BUFFER_OK = None   # cached: does this JAX accept pipeline_mode=pl.Buffered(1)?


def siren_layer_forward(x, weight, bias, *, layer_type=SirenLayerType.HIDDEN,
                        omega_0=30.0, tm=None):
    """Fused SirenLayer forward.

    x:      (M, in_features)  float32
    weight: (out_features, in_features) float32  (PyTorch layout)
    bias:   (out_features,)   float32
    """
    global _SINGLE_BUFFER_OK

    M, K = x.shape
    N, K2 = weight.shape
    assert K == K2, "weight / input feature mismatch"

    # Lane-dense padding: K and N up to multiples of 128 (MXU / vst friendly).
    k_pad = _round_up(K, 128)
    n_pad = _round_up(N, 128)

    if tm is None:
        tm = _choose_tm(M, k_pad, n_pad)
    m_pad = _round_up(M, tm)
    grid_m = m_pad // tm

    x_p = x
    if (m_pad, k_pad) != (M, K):
        x_p = jnp.pad(x, ((0, m_pad - M), (0, k_pad - K)))
    wt = weight.T                                  # (K, N)
    if (k_pad, n_pad) != (K, N):
        wt = jnp.pad(wt, ((0, k_pad - K), (0, n_pad - N)))
    b2 = bias.reshape(1, N)
    if n_pad != N:
        b2 = jnp.pad(b2, ((0, 0), (0, n_pad - N)))

    apply_activation = layer_type in (SirenLayerType.FIRST, SirenLayerType.HIDDEN)
    kernel = functools.partial(
        _siren_kernel, omega_0=float(omega_0), apply_activation=apply_activation
    )

    def build(single_buffer_params):
        extra = {"pipeline_mode": pl.Buffered(1)} if single_buffer_params else {}
        return pl.pallas_call(
            kernel,
            out_shape=jax.ShapeDtypeStruct((m_pad, n_pad), x.dtype),
            grid_spec=pltpu.PrefetchScalarGridSpec(
                num_scalar_prefetch=0,
                grid=(grid_m,),
                in_specs=[
                    pl.BlockSpec((tm, k_pad), lambda i: (i, 0)),               # x tile
                    pl.BlockSpec((k_pad, n_pad), lambda i: (0, 0), **extra),   # W^T (resident)
                    pl.BlockSpec((1, n_pad), lambda i: (0, 0), **extra),       # bias row
                ],
                out_specs=pl.BlockSpec((tm, n_pad), lambda i: (i, 0)),
            ),
            compiler_params=pltpu.CompilerParams(
                dimension_semantics=("parallel",),
                vmem_limit_bytes=_VMEM_LIMIT_BYTES,
            ),
        )

    if _SINGLE_BUFFER_OK is None:
        try:
            out = build(True)(x_p, wt, b2)
            _SINGLE_BUFFER_OK = True
        except Exception:
            _SINGLE_BUFFER_OK = False
            out = build(False)(x_p, wt, b2)
    else:
        out = build(_SINGLE_BUFFER_OK)(x_p, wt, b2)

    return out[:M, :N]


# ---------------------------------------------------------------------------
# Deterministic parameter init (mirrors SirenLayer.reset_parameters)
# ---------------------------------------------------------------------------
def init_siren_params(key, in_features, out_features, layer_type, omega_0=30.0):
    weight_ranges = {
        SirenLayerType.FIRST: 1.0 / in_features,
        SirenLayerType.HIDDEN: math.sqrt(6.0 / in_features) / omega_0,
        SirenLayerType.LAST: math.sqrt(6.0 / in_features),
    }
    wr = weight_ranges[layer_type]
    k_sqrt = math.sqrt(1.0 / in_features)
    kw, kb = jax.random.split(key)
    weight = jax.random.uniform(
        kw, (out_features, in_features), jnp.float32, minval=-wr, maxval=wr
    )
    bias = jax.random.uniform(
        kb, (out_features,), jnp.float32, minval=-k_sqrt, maxval=k_sqrt
    )
    return weight, bias


def _ref_forward(x, weight, bias, layer_type, omega_0):
    y = x @ weight.T + bias
    if layer_type in (SirenLayerType.FIRST, SirenLayerType.HIDDEN):
        y = jnp.sin(omega_0 * y)
    return y


if __name__ == "__main__":
    key = jax.random.PRNGKey(0)
    kx, k1, k2, k3 = jax.random.split(key, 4)

    batch = 200        # deliberately NOT a multiple of the row tile
    coord_dim = 2      # FIRST-layer input coordinates (x, y)
    hidden = 32
    out_dim = 1
    omega_0 = 30.0

    coords = jax.random.uniform(kx, (batch, coord_dim), jnp.float32,
                                minval=-1.0, maxval=1.0)

    layers = [
        (SirenLayerType.FIRST, coord_dim, hidden, k1),
        (SirenLayerType.HIDDEN, hidden, hidden, k2),
        (SirenLayerType.LAST, hidden, out_dim, k3),
    ]

    h = coords
    for layer_type, fin, fout, kp in layers:
        w, b = init_siren_params(kp, fin, fout, layer_type, omega_0)
        out = siren_layer_forward(h, w, b, layer_type=layer_type, omega_0=omega_0)
        out = jax.block_until_ready(out)
        ref = _ref_forward(h, w, b, layer_type, omega_0)
        assert out.shape == (batch, fout)
        assert jnp.allclose(out, ref, atol=1e-4, rtol=1e-4), (
            f"{layer_type} mismatch, max err = {jnp.max(jnp.abs(out - ref))}"
        )
        h = out

    print("KERNEL_OK")
</pallas_src>

<mosaic_0001>
module attributes {stable_mosaic.version = 11 : i64} {
  func.func @_siren_kernel(%arg0: i32, %arg1: memref<128x128xf32, #tpu.memory_space<vmem>>, %arg2: memref<128x128xf32, #tpu.memory_space<vmem>>, %arg3: memref<1x128xf32, #tpu.memory_space<vmem>>, %arg4: memref<128x128xf32, #tpu.memory_space<vmem>>) attributes {dimension_semantics = [#tpu.dimension_semantics<parallel>], iteration_bounds = array<i64: 2>, scalar_prefetch = 0 : i64, scratch_operands = 0 : i64, tpu.core_type = #tpu.core_type<tc>, window_params = [{transform_indices = @transform_0, window_bounds = array<i64: 128, 128>}, {pipeline_mode = #tpu.pipeline_mode<synchronous>, transform_indices = @transform_1, window_bounds = array<i64: 128, 128>}, {pipeline_mode = #tpu.pipeline_mode<synchronous>, transform_indices = @transform_2, window_bounds = array<i64: 1, 128>}, {transform_indices = @transform_3, window_bounds = array<i64: 128, 128>}]} {
    %c0 = arith.constant 0 : index
    %c0_0 = arith.constant 0 : index
    %0 = vector.load %arg1[%c0, %c0_0] : memref<128x128xf32, #tpu.memory_space<vmem>>, vector<128x128xf32>
    %c0_1 = arith.constant 0 : index
    %c0_2 = arith.constant 0 : index
    %1 = vector.load %arg2[%c0_1, %c0_2] : memref<128x128xf32, #tpu.memory_space<vmem>>, vector<128x128xf32>
    %cst = arith.constant dense<0.000000e+00> : vector<128x128xf32>
    %2 = tpu.matmul %0, %1, %cst {dimension_numbers = #tpu.dot_dimension_numbers<[1], [0], [0], [1], [0, 0, 1, 1], [], []>} : vector<128x128xf32>, vector<128x128xf32>, vector<128x128xf32> -> vector<128x128xf32>
    %c0_3 = arith.constant 0 : index
    %c0_4 = arith.constant 0 : index
    %3 = vector.load %arg3[%c0_3, %c0_4] : memref<1x128xf32, #tpu.memory_space<vmem>>, vector<1x128xf32>
    %4 = vector.broadcast %3 : vector<1x128xf32> to vector<128x128xf32>
    %5 = arith.addf %2, %4 : vector<128x128xf32>
    %cst_5 = arith.constant 3.000000e+01 : f32
    %6 = vector.broadcast %cst_5 : f32 to vector<128x128xf32>
    %7 = arith.mulf %6, %5 : vector<128x128xf32>
    %8 = math.sin %7 : vector<128x128xf32>
    %c0_6 = arith.constant 0 : index
    %c0_7 = arith.constant 0 : index
    %9 = vector.load %arg4[%c0_6, %c0_7] : memref<128x128xf32, #tpu.memory_space<vmem>>, vector<128x128xf32>
    tpu.vector_store %arg4[%c0_6, %c0_7], %8 {strides = array<i32>} : memref<128x128xf32, #tpu.memory_space<vmem>>, vector<128x128xf32>,
    return
  }
  func.func @transform_0(%arg0: i32) -> (i32, i32) {
    %c0_i32 = arith.constant 0 : i32
    %c0_i32_0 = arith.constant 0 : i32
    return %arg0, %c0_i32 : i32, i32
  }
  func.func @transform_1(%arg0: i32) -> (i32, i32) {
    %c0_i32 = arith.constant 0 : i32
    %c0_i32_0 = arith.constant 0 : i32
    %c0_i32_1 = arith.constant 0 : i32
    return %c0_i32, %c0_i32_0 : i32, i32
  }
  func.func @transform_2(%arg0: i32) -> (i32, i32) {
    %c0_i32 = arith.constant 0 : i32
    %c0_i32_0 = arith.constant 0 : i32
    %c0_i32_1 = arith.constant 0 : i32
    return %c0_i32, %c0_i32_0 : i32, i32
  }
  func.func @transform_3(%arg0: i32) -> (i32, i32) {
    %c0_i32 = arith.constant 0 : i32
    %c0_i32_0 = arith.constant 0 : i32
    return %arg0, %c0_i32 : i32, i32
  }
}

module attributes {stable_mosaic.version = 11 : i64} {
  func.func @_siren_kernel(%arg0: i32, %arg1: memref<128x128xf32, #tpu.memory_space<vmem>>, %arg2: memref<128x128xf32, #tpu.memory_space<vmem>>, %arg3: memref<1x128xf32, #tpu.memory_space<vmem>>, %arg4: memref<128x128xf32, #tpu.memory_space<vmem>>) attributes {dimension_semantics = [#tpu.dimension_semantics<parallel>], iteration_bounds = array<i64: 2>, scalar_prefetch = 0 : i64, scratch_operands = 0 : i64, tpu.core_type = #tpu.core_type<tc>, window_params = [{transform_indices = @transform_0, window_bounds = array<i64: 128, 128>}, {pipeline_mode = #tpu.pipeline_mode<synchronous>, transform_indices = @transform_1, window_bounds = array<i64: 128, 128>}, {pipeline_mode = #tpu.pipeline_mode<synchronous>, transform_indices = @transform_2, window_bounds = array<i64: 1, 128>}, {transform_indices = @transform_3, window_bounds = array<i64: 128, 128>}]} {
    %c0 = arith.constant 0 : index
    %c0_0 = arith.constant 0 : index
    %0 = vector.load %arg1[%c0, %c0_0] : memref<128x128xf32, #tpu.memory_space<vmem>>, vector<128x128xf32>
    %c0_1 = arith.constant 0 : index
    %c0_2 = arith.constant 0 : index
    %1 = vector.load %arg2[%c0_1, %c0_2] : memref<128x128xf32, #tpu.memory_space<vmem>>, vector<128x128xf32>
    %cst = arith.constant dense<0.000000e+00> : vector<128x128xf32>
    %2 = tpu.matmul %0, %1, %cst {dimension_numbers = #tpu.dot_dimension_numbers<[1], [0], [0], [1], [0, 0, 1, 1], [], []>} : vector<128x128xf32>, vector<128x128xf32>, vector<128x128xf32> -> vector<128x128xf32>
    %c0_3 = arith.constant 0 : index
    %c0_4 = arith.constant 0 : index
    %3 = vector.load %arg3[%c0_3, %c0_4] : memref<1x128xf32, #tpu.memory_space<vmem>>, vector<1x128xf32>
    %4 = vector.broadcast %3 : vector<1x128xf32> to vector<128x128xf32>
    %5 = arith.addf %2, %4 : vector<128x128xf32>
    %cst_5 = arith.constant 3.000000e+01 : f32
    %6 = vector.broadcast %cst_5 : f32 to vector<128x128xf32>
    %7 = arith.mulf %6, %5 : vector<128x128xf32>
    %8 = math.sin %7 : vector<128x128xf32>
    %c0_6 = arith.constant 0 : index
    %c0_7 = arith.constant 0 : index
    %9 = vector.load %arg4[%c0_6, %c0_7] : memref<128x128xf32, #tpu.memory_space<vmem>>, vector<128x128xf32>
    tpu.vector_store %arg4[%c0_6, %c0_7], %8 {strides = array<i32>} : memref<128x128xf32, #tpu.memory_space<vmem>>, vector<128x128xf32>,
    return
  }
  func.func @transform_0(%arg0: i32) -> (i32, i32) {
    %c0_i32 = arith.constant 0 : i32
    %c0_i32_0 = arith.constant 0 : i32
    return %arg0, %c0_i32 : i32, i32
  }
  func.func @transform_1(%arg0: i32) -> (i32, i32) {
    %c0_i32 = arith.constant 0 : i32
    %c0_i32_0 = arith.constant 0 : i32
    %c0_i32_1 = arith.constant 0 : i32
    return %c0_i32, %c0_i32_0 : i32, i32
  }
  func.func @transform_2(%arg0: i32) -> (i32, i32) {
    %c0_i32 = arith.constant 0 : i32
    %c0_i32_0 = arith.constant 0 : i32
    %c0_i32_1 = arith.constant 0 : i32
    return %c0_i32, %c0_i32_0 : i32, i32
  }
  func.func @transform_3(%arg0: i32) -> (i32, i32) {
    %c0_i32 = arith.constant 0 : i32
    %c0_i32_0 = arith.constant 0 : i32
    return %arg0, %c0_i32 : i32, i32
  }
}

</mosaic_0001>

<llo_original>
// kernel: tpu_custom_call.1
$region0: #{tpu_custom_call.1}
  #allocation0 [shape = 'u32[]', space=smem, size = 0x4, offset = 0x4, fixed_abs, tag = 'smem constant byte address 0x4 - core index']
  #allocation1 [shape = 'u32[72,128]{1,0:T(1,128)}', space=vmem, size = 0x9000, scoped, tag = 'internal scratch']
  %s0 = inlined_call_operand.hbm [shape: f32[256,128], index: 0, kind: input, shape index: {}]
  %s1 = inlined_call_operand.hbm [shape: f32[128,128], index: 1, kind: input, shape index: {}]
  %s2 = inlined_call_operand.vmem [shape: f32[1,128], index: 2, kind: input, shape index: {}]
  %s3 = inlined_call_operand.hbm [shape: f32[256,128], index: 3, kind: output, shape index: {}]
  %s4 = sld [smem:[#allocation0]]
  $region53: #{tpu_custom_call.1} parent=0
    _
  %s6 = ssub.s32 1, %s4
  %s7 = scalar_select 0, %s6, %s4
  $region1: #{tpu_custom_call.1} parent=0
    #allocation2 [shape = 'u8[131072]{0}', space=vmem, size = 0x20000, scoped, tag = 'input window, operand 0']
    #allocation3 [shape = 's32[2]{0}', space=sflag, size = 0x8, scoped, tag = 'scoped memory for tpu_custom_call.1']
    #allocation4 [shape = 's32[2]{0}', space=sflag, size = 0x8, scoped, tag = 'scoped memory for tpu_custom_call.1']
    #allocation5 [shape = 'u8[65536]{0}', space=vmem, size = 0x10000, scoped, tag = 'input window, operand 1, single buffered']
    #allocation6 [shape = 's32[1]{0}', space=sflag, size = 0x4, scoped, tag = 'scoped memory for tpu_custom_call.1']
    #allocation7 [shape = 'u8[131072]{0}', space=vmem, size = 0x20000, scoped, tag = 'output window, operand 0']
    %8 = vsyncpa [#allocation3], 0
    %s9 = scalar_lea.sflag [#allocation3], 1
    %10 = vsyncpa %s9, 0
    %11 = vsyncpa [#allocation6], 0
    %12 = vsyncpa [#allocation4], 0
    %s13 = scalar_lea.sflag [#allocation4], 1
    %14 = vsyncpa %s13, 0
    loop: start=0, step=1, limit=4
    $region2: #{tpu_custom_call.1} parent=1 // loop_pre_header
      _
    $region3: #{tpu_custom_call.1} parent=1 // loop_header
      %s16 = sphi 0, %s20
      %p17 = scmp.ge.s32.totalorder %s16, 4
      %s26 = sphi 0, %s28
      %s29 = sphi 0, %s26
      %s30 = sphi 0, %s29
      %s46 = sphi 0, %s30
      %s50 = sphi 0, %s50
      %s52 = sphi 0, %s50
      %s53 = sphi 0, %s52
      %s67 = sphi 0, %s53
      %s71 = sphi 0, %s71
      %s73 = sphi 0, %s71
      %s74 = sphi 0, %s73
      %s88 = sphi 0, %s74
      %s94 = sphi 0, %s96
      %s97 = sphi 0, %s94
      %s98 = sphi 0, %s97
      %s114 = sphi 0, %s98
    $region4: #{tpu_custom_call.1} parent=1 // loop_header_branch
      %19 = sbr.rel (%p17) target = $region8
    $region5: #{tpu_custom_call.1} parent=1 // loop_body
      %s21 = ssub.s32 %s16, 1
      %s22 = ssub.s32 %s16, 2
      %s23 = sadd.s32 %s16, 1
      %s24 = ssub.s32 %s16, %s23
      %p25 = scmp.eq.s32.totalorder %s24, 0
      %s27 = sadd.s32 %s26, 1
      %s28 = scalar_select %p25, %s26, %s27
      %p31 = pneg %p25
      %p32 = scmp.eq.s32.totalorder %s16, 1
      %p33 = por %p31, %p32
      %p34 = scmp.ne.s32.totalorder %s26, %s29
      %p35 = scmp.eq.s32.totalorder %s16, 0
      %p36 = por %p34, %p35
      %p37 = scmp.ne.s32.totalorder %s26, %s29
      %p38 = scmp.eq.s32.totalorder %s21, 1
      %p39 = por %p37, %p38
      %p40 = scmp.ne.s32.totalorder %s29, %s30
      %p41 = scmp.eq.s32.totalorder %s21, 0
      %p42 = por %p40, %p41
      %p43 = scmp.ne.s32.totalorder %s29, %s30
      %p44 = scmp.eq.s32.totalorder %s22, 1
      %p45 = por %p43, %p44
      %p47 = scmp.ne.s32.totalorder %s30, %s46
      %p48 = scmp.eq.s32.totalorder %s22, 0
      %p49 = por %p47, %p48
      %s51 = sadd.s32 %s50, 1
      %p54 = scmp.eq.s32.totalorder %s16, 1
      %p55 = scmp.ne.s32.totalorder %s50, %s52
      %p56 = scmp.eq.s32.totalorder %s16, 0
      %p57 = por %p55, %p56
      %p58 = scmp.ne.s32.totalorder %s50, %s52
      %p59 = scmp.eq.s32.totalorder %s21, 1
      %p60 = por %p58, %p59
      %p61 = scmp.ne.s32.totalorder %s52, %s53
      %p62 = scmp.eq.s32.totalorder %s21, 0
      %p63 = por %p61, %p62
      %p64 = scmp.ne.s32.totalorder %s52, %s53
      %p65 = scmp.eq.s32.totalorder %s22, 1
      %p66 = por %p64, %p65
      %p68 = scmp.ne.s32.totalorder %s53, %s67
      %p69 = scmp.eq.s32.totalorder %s22, 0
      %p70 = por %p68, %p69
      %s72 = sadd.s32 %s71, 1
      %p75 = scmp.eq.s32.totalorder %s16, 1
      %p76 = scmp.ne.s32.totalorder %s71, %s73
      %p77 = scmp.eq.s32.totalorder %s16, 0
      %p78 = por %p76, %p77
      %p79 = scmp.ne.s32.totalorder %s71, %s73
      %p80 = scmp.eq.s32.totalorder %s21, 1
      %p81 = por %p79, %p80
      %p82 = scmp.ne.s32.totalorder %s73, %s74
      %p83 = scmp.eq.s32.totalorder %s21, 0
      %p84 = por %p82, %p83
      %p85 = scmp.ne.s32.totalorder %s73, %s74
      %p86 = scmp.eq.s32.totalorder %s22, 1
      %p87 = por %p85, %p86
      %p89 = scmp.ne.s32.totalorder %s74, %s88
      %p90 = scmp.eq.s32.totalorder %s22, 0
      %p91 = por %p89, %p90
      %s92 = ssub.s32 %s16, %s23
      %p93 = scmp.eq.s32.totalorder %s92, 0
      %s95 = sadd.s32 %s94, 1
      %s96 = scalar_select %p93, %s94, %s95
      %p99 = pneg %p93
      %p100 = scmp.eq.s32.totalorder %s16, 1
      %p101 = por %p99, %p100
      %p102 = scmp.ne.s32.totalorder %s94, %s97
      %p103 = scmp.eq.s32.totalorder %s16, 0
      %p104 = por %p102, %p103
      %p105 = scmp.ne.s32.totalorder %s94, %s97
      %p106 = scmp.eq.s32.totalorder %s21, 1
      %p107 = por %p105, %p106
      %p108 = scmp.ne.s32.totalorder %s97, %s98
      %p109 = scmp.eq.s32.totalorder %s21, 0
      %p110 = por %p108, %p109
      %p111 = scmp.ne.s32.totalorder %s97, %s98
      %p112 = scmp.eq.s32.totalorder %s22, 1
      %p113 = por %p111, %p112
      %p115 = scmp.ne.s32.totalorder %s98, %s114
      %p116 = scmp.eq.s32.totalorder %s22, 0
      %p117 = por %p115, %p116
      %p118 = scmp.le.s32.totalorder 1, %s16
      %p119 = scmp.lt.s32.totalorder %s16, 3
      %p120 = pnand %p118, %p119
      %p121 = pneg %p120
      // Predicated region
      $region9: #{tpu_custom_call.1} parent=5 // pred_check
        _
      $region10: #{tpu_custom_call.1} parent=5 // pred_check_branch
        %123 = sbr.rel (%p120) target = $region12
      $region11: #{tpu_custom_call.1} parent=5 // pred_region
        %s124 = ssub.s32 %s16, 1
        // Predicated region
        $region13: #{tpu_custom_call.1} parent=11 // pred_check
          %p125 = pneg %p63
        $region14: #{tpu_custom_call.1} parent=11 // pred_check_branch
          %127 = sbr.rel (%p125) target = $region16
        $region15: #{tpu_custom_call.1} parent=11 // pred_region
          %129 = vsyncadd [#allocation6], 0
          %s130 = sshll.u32 %s1, 4
          %s131 = int_to_ptr.hbm [resolvable:$true] %s130
          %s132 = sshll.u32 [#allocation5], 4
          %s133 = int_to_ptr.vmem [resolvable:$true] %s132
          %138 = dma.hbm_to_vmem [thread:$0]  %s131, 2048, %s133, [#allocation6], 128, 128, 8
        $region16: #{tpu_custom_call.1} parent=11 // pred_fallthru
          _
        // Predicated region
        $region17: #{tpu_custom_call.1} parent=11 // pred_check
          %p139 = pneg %p84
        $region18: #{tpu_custom_call.1} parent=11 // pred_check_branch
          %141 = sbr.rel (%p139) target = $region20
        $region19: #{tpu_custom_call.1} parent=11 // pred_region
          _
        $region20: #{tpu_custom_call.1} parent=11 // pred_fallthru
          _
      $region12: #{tpu_custom_call.1} parent=5 // pred_fallthru
        _
      %p142 = scmp.lt.s32.totalorder %s16, 2
      // Predicated region
      $region21: #{tpu_custom_call.1} parent=5 // pred_check
        %p143 = pneg %p142
      $region22: #{tpu_custom_call.1} parent=5 // pred_check_branch
        %145 = sbr.rel (%p143) target = $region24
      $region23: #{tpu_custom_call.1} parent=5 // pred_region
        // Predicated region
        $region25: #{tpu_custom_call.1} parent=23 // pred_check
          %p146 = pneg %p36
        $region26: #{tpu_custom_call.1} parent=23 // pred_check_branch
          %148 = sbr.rel (%p146) target = $region28
        $region27: #{tpu_custom_call.1} parent=23 // pred_region
          %s149 = sand.u32 %s26, 1
          %s150 = scalar_lea.sflag [#allocation3], %s149
          %s151 = sand.u32 %s26, 1
          %s152 = smul.addr %s151, 128
          %s153 = scalar_lea.vmem [#allocation2], %s152
          %s154 = smul.u32 16, %s16
          %156 = vsyncadd %s150, 0
          %s157 = smul.addr %s154, 8
          %s158 = scalar_lea.hbm %s0, %s157
          %s159 = sshll.u32 %s158, 4
          %s160 = int_to_ptr.hbm [resolvable:$true] %s159
          %s161 = sshll.u32 %s153, 4
          %s162 = int_to_ptr.vmem [resolvable:$true] %s161
          %167 = dma.hbm_to_vmem [thread:$0]  %s160, 2048, %s162, %s150, 128, 128, 8
        $region28: #{tpu_custom_call.1} parent=23 // pred_fallthru
          _
      $region24: #{tpu_custom_call.1} parent=5 // pred_fallthru
        _
      %p168 = scmp.le.s32.totalorder 1, %s16
      %p169 = scmp.lt.s32.totalorder %s16, 3
      %p170 = pnand %p168, %p169
      %p171 = pneg %p170
      // Predicated region
      $region29: #{tpu_custom_call.1} parent=5 // pred_check
        _
      $region30: #{tpu_custom_call.1} parent=5 // pred_check_branch
        %173 = sbr.rel (%p170) target = $region32
      $region31: #{tpu_custom_call.1} parent=5 // pred_region
        %s174 = ssub.s32 %s16, 1
        %s175 = sand.u32 %s29, 1
        %s176 = scalar_lea.sflag [#allocation3], %s175
        %s177 = sand.u32 %s29, 1
        %s178 = smul.addr %s177, 128
        %s179 = scalar_lea.vmem [#allocation2], %s178
        // Predicated region
        $region33: #{tpu_custom_call.1} parent=31 // pred_check
          %p180 = pneg %p42
        $region34: #{tpu_custom_call.1} parent=31 // pred_check_branch
          %182 = sbr.rel (%p180) target = $region36
        $region35: #{tpu_custom_call.1} parent=31 // pred_region
          %184 = dma.done %s176, 2048
        $region36: #{tpu_custom_call.1} parent=31 // pred_fallthru
          _
        // Predicated region
        $region37: #{tpu_custom_call.1} parent=31 // pred_check
          %p185 = pneg %p63
        $region38: #{tpu_custom_call.1} parent=31 // pred_check_branch
          %187 = sbr.rel (%p185) target = $region40
        $region39: #{tpu_custom_call.1} parent=31 // pred_region
          %189 = dma.done [#allocation6], 2048
        $region40: #{tpu_custom_call.1} parent=31 // pred_fallthru
          _
        %s190 = sand.u32 %s29, 1
        %s191 = scalar_lea.sflag [#allocation3], %s190
        %s192 = sand.u32 %s29, 1
        %s193 = smul.addr %s192, 128
        %s194 = scalar_lea.vmem [#allocation2], %s193
        %p195 = pneg %p42
        %p196 = pneg %p39
        %p197 = pneg %p63
        %p198 = pneg %p60
        %p199 = pneg %p84
        %p200 = pneg %p81
        %p201 = pneg %p110
        %p202 = pneg %p107
        %s203 = sand.u32 %s97, 1
        %s204 = scalar_lea.sflag [#allocation4], %s203
        %s205 = sand.u32 %s97, 1
        %s206 = smul.addr %s205, 128
        %s207 = scalar_lea.vmem [#allocation7], %s206
        %s208 = smul.u32 16, %s21
        %s209 = smul.u32 16, %s21
        %v210 = vld [vmem:[%s179] sm:$0xff]
        %v211 = vld [vmem:[%s179 + $0x8] sm:$0xff]
        %v212 = vld [vmem:[%s179 + $0x10] sm:$0xff]
        %v213 = vld [vmem:[%s179 + $0x18] sm:$0xff]
        %v214 = vld [vmem:[%s179 + $0x20] sm:$0xff]
        %v215 = vld [vmem:[%s179 + $0x28] sm:$0xff]
        %v216 = vld [vmem:[%s179 + $0x30] sm:$0xff]
        %v217 = vld [vmem:[%s179 + $0x38] sm:$0xff]
        %v218 = vld [vmem:[%s179 + $0x40] sm:$0xff]
        %v219 = vld [vmem:[%s179 + $0x48] sm:$0xff]
        %v220 = vld [vmem:[%s179 + $0x50] sm:$0xff]
        %v221 = vld [vmem:[%s179 + $0x58] sm:$0xff]
        %v222 = vld [vmem:[%s179 + $0x60] sm:$0xff]
        %v223 = vld [vmem:[%s179 + $0x68] sm:$0xff]
        %v224 = vld [vmem:[%s179 + $0x70] sm:$0xff]
        %v225 = vld [vmem:[%s179 + $0x78] sm:$0xff]
        %v226 = vld [vmem:[#allocation5] sm:$0xff]
        %v227 = vld [vmem:[#allocation5 + $0x8] sm:$0xff]
        %v228 = vld [vmem:[#allocation5 + $0x10] sm:$0xff]
        %v229 = vld [vmem:[#allocation5 + $0x18] sm:$0xff]
        %v230 = vld [vmem:[#allocation5 + $0x20] sm:$0xff]
        %v231 = vld [vmem:[#allocation5 + $0x28] sm:$0xff]
        %v232 = vld [vmem:[#allocation5 + $0x30] sm:$0xff]
        %v233 = vld [vmem:[#allocation5 + $0x38] sm:$0xff]
        %v234 = vld [vmem:[#allocation5 + $0x40] sm:$0xff]
        %v235 = vld [vmem:[#allocation5 + $0x48] sm:$0xff]
        %v236 = vld [vmem:[#allocation5 + $0x50] sm:$0xff]
        %v237 = vld [vmem:[#allocation5 + $0x58] sm:$0xff]
        %v238 = vld [vmem:[#allocation5 + $0x60] sm:$0xff]
        %v239 = vld [vmem:[#allocation5 + $0x68] sm:$0xff]
        %v240 = vld [vmem:[#allocation5 + $0x70] sm:$0xff]
        %v241 = vld [vmem:[#allocation5 + $0x78] sm:$0xff]
        %v242 = vld [vmem:[%s2] sm:$0x1]
        %v244 = vperm.slane %v242, 0
        %246 = vmatpush.msra.mxu0 %v241
        %247 = vmatpush.msra.mxu0 %v240
        %248 = vmatpush.msra.mxu0 %v239
        %249 = vmatpush.msra.mxu0 %v238
        %250 = vmatpush.msra.mxu0 %v237
        %251 = vmatpush.msra.mxu0 %v236
        %252 = vmatpush.msra.mxu0 %v235
        %253 = vmatpush.msra.mxu0 %v234
        %254 = vmatpush.msra.mxu0 %v233
        %255 = vmatpush.msra.mxu0 %v232
        %256 = vmatpush.msra.mxu0 %v231
        %257 = vmatpush.msra.mxu0 %v230
        %258 = vmatpush.msra.mxu0 %v229
        %259 = vmatpush.msra.mxu0 %v228
        %260 = vmatpush.msra.mxu0 %v227
        %261 = vmatpush.msra.mxu0 %v226
        %262 = vmatmul.f32.gmra.mxu0 %v210
        %v263 = vpop.f32.mrf.mxu0
        %v264 = vadd.f32 %v244, %v263
        %265 = vmatmul.f32.gmra.mxu0 %v211
        %v266 = vpop.f32.mrf.mxu0
        %v267 = vadd.f32 %v244, %v266
        %268 = vmatmul.f32.gmra.mxu0 %v212
        %v269 = vpop.f32.mrf.mxu0
        %v270 = vadd.f32 %v244, %v269
        %271 = vmatmul.f32.gmra.mxu0 %v213
        %v272 = vpop.f32.mrf.mxu0
        %v273 = vadd.f32 %v244, %v272
        %274 = vmatmul.f32.gmra.mxu0 %v214
        %v275 = vpop.f32.mrf.mxu0
        %v276 = vadd.f32 %v244, %v275
        %277 = vmatmul.f32.gmra.mxu0 %v215
        %v278 = vpop.f32.mrf.mxu0
        %v279 = vadd.f32 %v244, %v278
        %280 = vmatmul.f32.gmra.mxu0 %v216
        %v281 = vpop.f32.mrf.mxu0
        %v282 = vadd.f32 %v244, %v281
        %283 = vmatmul.f32.gmra.mxu0 %v217
        %v284 = vpop.f32.mrf.mxu0
        %v285 = vadd.f32 %v244, %v284
        %286 = vmatmul.f32.gmra.mxu0 %v218
        %v287 = vpop.f32.mrf.mxu0
        %v288 = vadd.f32 %v244, %v287
        %289 = vmatmul.f32.gmra.mxu0 %v219
        %v290 = vpop.f32.mrf.mxu0
        %v291 = vadd.f32 %v244, %v290
        %292 = vmatmul.f32.gmra.mxu0 %v220
        %v293 = vpop.f32.mrf.mxu0
        %v294 = vadd.f32 %v244, %v293
        %295 = vmatmul.f32.gmra.mxu0 %v221
        %v296 = vpop.f32.mrf.mxu0
        %v297 = vadd.f32 %v244, %v296
        %298 = vmatmul.f32.gmra.mxu0 %v222
        %v299 = vpop.f32.mrf.mxu0
        %v300 = vadd.f32 %v244, %v299
        %301 = vmatmul.f32.gmra.mxu0 %v223
        %v302 = vpop.f32.mrf.mxu0
        %v303 = vadd.f32 %v244, %v302
        %304 = vmatmul.f32.gmra.mxu0 %v224
        %v305 = vpop.f32.mrf.mxu0
        %v306 = vadd.f32 %v244, %v305
        %307 = vmatmul.f32.gmra.mxu0 %v225
        %v308 = vpop.f32.mrf.mxu0
        %v309 = vadd.f32 %v244, %v308
        %310 = vdwg.mxu0
        %v311 = vmul.f32 %v264, 30.0
        %v312 = vmul.f32 %v267, 30.0
        %v313 = vmul.f32 %v270, 30.0
        %v314 = vmul.f32 %v273, 30.0
        %v315 = vmul.f32 %v276, 30.0
        %v316 = vmul.f32 %v279, 30.0
        %v317 = vmul.f32 %v282, 30.0
        %v318 = vmul.f32 %v285, 30.0
        %v319 = vmul.f32 %v288, 30.0
        %v320 = vmul.f32 %v291, 30.0
        %v321 = vmul.f32 %v294, 30.0
        %v322 = vmul.f32 %v297, 30.0
        %v323 = vmul.f32 %v300, 30.0
        %v324 = vmul.f32 %v303, 30.0
        %v325 = vmul.f32 %v306, 30.0
        %v326 = vmul.f32 %v309, 30.0
        %v327 = vand.u32 2147483647, %v311
        %vm328 = vcmp.le.f32.partialorder %v327, 0.7853982
        %vm329 = vcmp.lt.s32.totalorder %v311, 0
        %v330 = vand.u32 %v311, 2139095040
        %v331 = vshrl.u32 %v330, 23
        %v332 = vsub.s32 %v331, 127
        %v333 = vand.u32 2147483647, %v311
        %v334 = vand.u32 %v333, 8388607
        %v335 = vor.u32 %v334, 8388608
        %v336 = vsub.s32 0, %v335
        %v337 = vadd.s32 %v332, 1
        %vm338 = vcmp.gt.s32.totalorder %v337, 0
        %v339 = vsel %vm338, %v337, 0
        %v340 = vshrl.u32 %v339, 5
        %v341 = vand.u32 %v339, 31
        %v342 = vsub.s32 32, %v341
        %v343 = vshrl.u32 683565275, %v342
        %v344 = vshll.u32 683565275, %v341
        %v345 = vshrl.u32 2475754826, %v342
        %v346 = vor.u32 %v344, %v345
        %v347 = vshll.u32 2475754826, %v341
        %v348 = vshrl.u32 2131351028, %v342
        %v349 = vor.u32 %v347, %v348
        %v350 = vshll.u32 2131351028, %v341
        %v351 = vshrl.u32 2102212464, %v342
        %v352 = vor.u32 %v350, %v351
        %v353 = vshll.u32 2102212464, %v341
        %v354 = vshrl.u32 920167782, %v342
        %v355 = vor.u32 %v353, %v354
        %v356 = vshll.u32 920167782, %v341
        %v357 = vshrl.u32 1326507024, %v342
        %v358 = vor.u32 %v356, %v357
        %vm359 = vcmp.lt.s32.totalorder %v340, 1
        %vm360 = vcmp.lt.s32.totalorder %v340, 2
        %vm361 = vcmp.lt.s32.totalorder %v340, 3
        %vm362 = vcmp.lt.s32.totalorder %v340, 4
        %v363 = vsel %vm359, %v343, %v346
        %v364 = vsel %vm362, %v352, 2102212464
        %v365 = vsel %vm361, %v349, %v364
        %v366 = vsel %vm360, %v363, %v365
        %v367 = vsel %vm359, %v346, %v349
        %v368 = vsel %vm362, %v355, 920167782
        %v369 = vsel %vm361, %v352, %v368
        %v370 = vsel %vm360, %v367, %v369
        %v371 = vsel %vm359, %v349, %v352
        %v372 = vsel %vm362, %v358, 1326507024
        %v373 = vsel %vm361, %v355, %v372
        %v374 = vsel %vm360, %v371, %v373
        %v375 = vshll.u32 %v335, 8
        %v376 = vand.u32 %v375, 65535
        %v377 = vshrl.u32 %v375, 16
        %v378 = vand.u32 %v374, 65535
        %v379 = vshrl.u32 %v374, 16
        %v380 = vmul.u32 %v376, %v378
        %v381 = vmul.u32 %v376, %v379
        %v382 = vmul.u32 %v377, %v378
        %v383 = vmul.u32 %v377, %v379
        %v384 = vshll.u32 %v381, 16
        %v385 = vshrl.u32 %v381, 16
        %v386 = vshll.u32 %v382, 16
        %v387 = vshrl.u32 %v382, 16
        %vm388 = vc.u32 %v380, %v384
        %v389 = vsel %vm388, 1, 0
        %v390 = vadd.s32 %v380, %v384
        %v391 = vadd.s32 %v383, %v389
        %vm392 = vc.u32 %v390, %v386
        %v393 = vsel %vm392, 1, 0
        %v394 = vadd.s32 %v390, %v386
        %v395 = vadd.s32 %v391, %v393
        %v396 = vadd.s32 %v395, %v385
        %v397 = vadd.s32 %v396, %v387
        %v398 = vand.u32 %v375, 65535
        %v399 = vshrl.u32 %v375, 16
        %v400 = vand.u32 %v370, 65535
        %v401 = vshrl.u32 %v370, 16
        %v402 = vmul.u32 %v398, %v400
        %v403 = vmul.u32 %v398, %v401
        %v404 = vmul.u32 %v399, %v400
        %v405 = vmul.u32 %v399, %v401
        %v406 = vshll.u32 %v403, 16
        %v407 = vshrl.u32 %v403, 16
        %v408 = vshll.u32 %v404, 16
        %v409 = vshrl.u32 %v404, 16
        %vm410 = vc.u32 %v402, %v406
        %v411 = vsel %vm410, 1, 0
        %v412 = vadd.s32 %v402, %v406
        %v413 = vadd.s32 %v405, %v411
        %vm414 = vc.u32 %v412, %v408
        %v415 = vsel %vm414, 1, 0
        %v416 = vadd.s32 %v412, %v408
        %v417 = vadd.s32 %v413, %v415
        %v418 = vadd.s32 %v417, %v407
        %v419 = vadd.s32 %v418, %v409
        %v420 = vmul.u32 %v375, %v366
        %v421 = vadd.s32 %v397, %v416
        %vm422 = vc.u32 %v397, %v416
        %v423 = vadd.s32 %v419, 1
        %v424 = vsel %vm422, %v423, %v419
        %v425 = vadd.s32 %v420, %v424
        %v426 = vadd.s32 %v425, 536870912
        %v427 = vshrl.u32 %v426, 30
        %v428 = vshll.u32 %v427, 30
        %v429 = vsub.s32 %v425, %v428
        %vm430 = vcmp.lt.s32.totalorder %v429, 0
        %v431 = vsub.s32 0, %v429
        %v432 = vsel %vm430, %v431, %v429
        %v433 = vclz %v432
        %v434 = vsub.s32 %v433, 2
        %vm435 = vcmp.gt.s32.totalorder 0, %v434
        %v436 = vsel %vm435, 0, %v434
        %v437 = vsub.s32 32, %v436
        %v438 = vshll.u32 %v429, %v436
        %v439 = vshrl.u32 %v421, %v437
        %v440 = vor.u32 %v438, %v439
        %v441 = vsub.s32 4294967266, %v436
        %v442 = vadd.s32 %v441, 127
        %v443 = vshll.u32 %v442, 23
        %v444 = vor.u32 4788187, %v443
        %v445 = vand.u32 2147483647, %v444
        %v447 = vcvt.s32.f32 %v440
        %v448 = vmul.f32 %v447, %v445
        %v449 = vxor.u32 %v448, 2147483648
        %v450 = vsel %vm329, %v449, %v448
        %v451 = vsub.s32 4, %v427
        %v452 = vsel %vm329, %v451, %v427
        %v453 = vsel %vm328, %v311, %v450
        %v454 = vsel %vm328, 0, %v452
        %v455 = vmul.f32 %v453, %v453
        %v456 = vmul.f32 %v455, -0.001358992
        %v457 = vadd.f32 %v456, 0.041655596
        %v458 = vmul.f32 %v455, %v457
        %v459 = vadd.f32 %v458, -0.4999988
        %v460 = vmul.f32 %v455, %v459
        %v461 = vadd.f32 1.0, %v460
        %v462 = vmul.f32 %v453, %v453
        %v463 = vmul.f32 %v462, -0.00019511016
        %v464 = vadd.f32 %v463, 0.008332121
        %v465 = vmul.f32 %v462, %v464
        %v466 = vadd.f32 %v465, -0.16666654
        %v467 = vmul.f32 %v462, %v466
        %v468 = vadd.f32 %v467, 1.0
        %v469 = vmul.f32 %v468, %v453
        %vm470 = vweird.f32 %v311
        %v471 = vadd.s32 %v454, 3
        %v472 = vand.u32 %v471, 3
        %vm473 = vcmp.lt.s32.totalorder %v472, 2
        %vm474 = vcmp.eq.s32.totalorder %v472, 0
        %v475 = vxor.u32 %v469, 2147483648
        %v476 = vsel %vm474, %v461, %v475
        %vm477 = vcmp.eq.s32.totalorder %v472, 2
        %v478 = vxor.u32 %v461, 2147483648
        %v479 = vsel %vm477, %v478, %v469
        %v480 = vsel %vm473, %v476, %v479
        %v481 = vsel %vm470, nan, %v480
        %v482 = vand.u32 2147483647, %v312
        %vm483 = vcmp.le.f32.partialorder %v482, 0.7853982
        %vm484 = vcmp.lt.s32.totalorder %v312, 0
        %v485 = vand.u32 %v312, 2139095040
        %v486 = vshrl.u32 %v485, 23
        %v487 = vsub.s32 %v486, 127
        %v488 = vand.u32 2147483647, %v312
        %v489 = vand.u32 %v488, 8388607
        %v490 = vor.u32 %v489, 8388608
        %v491 = vsub.s32 0, %v490
        %v492 = vadd.s32 %v487, 1
        %vm493 = vcmp.gt.s32.totalorder %v492, 0
        %v494 = vsel %vm493, %v492, 0
        %v495 = vshrl.u32 %v494, 5
        %v496 = vand.u32 %v494, 31
        %v497 = vsub.s32 32, %v496
        %v498 = vshrl.u32 683565275, %v497
        %v499 = vshll.u32 683565275, %v496
        %v500 = vshrl.u32 2475754826, %v497
        %v501 = vor.u32 %v499, %v500
        %v502 = vshll.u32 2475754826, %v496
        %v503 = vshrl.u32 2131351028, %v497
        %v504 = vor.u32 %v502, %v503
        %v505 = vshll.u32 2131351028, %v496
        %v506 = vshrl.u32 2102212464, %v497
        %v507 = vor.u32 %v505, %v506
        %v508 = vshll.u32 2102212464, %v496
        %v509 = vshrl.u32 920167782, %v497
        %v510 = vor.u32 %v508, %v509
        %v511 = vshll.u32 920167782, %v496
        %v512 = vshrl.u32 1326507024, %v497
        %v513 = vor.u32 %v511, %v512
        %vm514 = vcmp.lt.s32.totalorder %v495, 1
        %vm515 = vcmp.lt.s32.totalorder %v495, 2
        %vm516 = vcmp.lt.s32.totalorder %v495, 3
        %vm517 = vcmp.lt.s32.totalorder %v495, 4
        %v518 = vsel %vm514, %v498, %v501
        %v519 = vsel %vm517, %v507, 2102212464
        %v520 = vsel %vm516, %v504, %v519
        %v521 = vsel %vm515, %v518, %v520
        %v522 = vsel %vm514, %v501, %v504
        %v523 = vsel %vm517, %v510, 920167782
        %v524 = vsel %vm516, %v507, %v523
        %v525 = vsel %vm515, %v522, %v524
        %v526 = vsel %vm514, %v504, %v507
        %v527 = vsel %vm517, %v513, 1326507024
        %v528 = vsel %vm516, %v510, %v527
        %v529 = vsel %vm515, %v526, %v528
        %v530 = vshll.u32 %v490, 8
        %v531 = vand.u32 %v530, 65535
        %v532 = vshrl.u32 %v530, 16
        %v533 = vand.u32 %v529, 65535
        %v534 = vshrl.u32 %v529, 16
        %v535 = vmul.u32 %v531, %v533
        %v536 = vmul.u32 %v531, %v534
        %v537 = vmul.u32 %v532, %v533
        %v538 = vmul.u32 %v532, %v534
        %v539 = vshll.u32 %v536, 16
        %v540 = vshrl.u32 %v536, 16
        %v541 = vshll.u32 %v537, 16
        %v542 = vshrl.u32 %v537, 16
        %vm543 = vc.u32 %v535, %v539
        %v544 = vsel %vm543, 1, 0
        %v545 = vadd.s32 %v535, %v539
        %v546 = vadd.s32 %v538, %v544
        %vm547 = vc.u32 %v545, %v541
        %v548 = vsel %vm547, 1, 0
        %v549 = vadd.s32 %v545, %v541
        %v550 = vadd.s32 %v546, %v548
        %v551 = vadd.s32 %v550, %v540
        %v552 = vadd.s32 %v551, %v542
        %v553 = vand.u32 %v530, 65535
        %v554 = vshrl.u32 %v530, 16
        %v555 = vand.u32 %v525, 65535
        %v556 = vshrl.u32 %v525, 16
        %v557 = vmul.u32 %v553, %v555
        %v558 = vmul.u32 %v553, %v556
        %v559 = vmul.u32 %v554, %v555
        %v560 = vmul.u32 %v554, %v556
        %v561 = vshll.u32 %v558, 16
        %v562 = vshrl.u32 %v558, 16
        %v563 = vshll.u32 %v559, 16
        %v564 = vshrl.u32 %v559, 16
        %vm565 = vc.u32 %v557, %v561
        %v566 = vsel %vm565, 1, 0
        %v567 = vadd.s32 %v557, %v561
        %v568 = vadd.s32 %v560, %v566
        %vm569 = vc.u32 %v567, %v563
        %v570 = vsel %vm569, 1, 0
        %v571 = vadd.s32 %v567, %v563
        %v572 = vadd.s32 %v568, %v570
        %v573 = vadd.s32 %v572, %v562
        %v574 = vadd.s32 %v573, %v564
        %v575 = vmul.u32 %v530, %v521
        %v576 = vadd.s32 %v552, %v571
        %vm577 = vc.u32 %v552, %v571
        %v578 = vadd.s32 %v574, 1
        %v579 = vsel %vm577, %v578, %v574
        %v580 = vadd.s32 %v575, %v579
        %v581 = vadd.s32 %v580, 536870912
        %v582 = vshrl.u32 %v581, 30
        %v583 = vshll.u32 %v582, 30
        %v584 = vsub.s32 %v580, %v583
        %vm585 = vcmp.lt.s32.totalorder %v584, 0
        %v586 = vsub.s32 0, %v584
        %v587 = vsel %vm585, %v586, %v584
        %v588 = vclz %v587
        %v589 = vsub.s32 %v588, 2
        %vm590 = vcmp.gt.s32.totalorder 0, %v589
        %v591 = vsel %vm590, 0, %v589
        %v592 = vsub.s32 32, %v591
        %v593 = vshll.u32 %v584, %v591
        %v594 = vshrl.u32 %v576, %v592
        %v595 = vor.u32 %v593, %v594
        %v596 = vsub.s32 4294967266, %v591
        %v597 = vadd.s32 %v596, 127
        %v598 = vshll.u32 %v597, 23
        %v599 = vor.u32 4788187, %v598
        %v600 = vand.u32 2147483647, %v599
        %v602 = vcvt.s32.f32 %v595
        %v603 = vmul.f32 %v602, %v600
        %v604 = vxor.u32 %v603, 2147483648
        %v605 = vsel %vm484, %v604, %v603
        %v606 = vsub.s32 4, %v582
        %v607 = vsel %vm484, %v606, %v582
        %v608 = vsel %vm483, %v312, %v605
        %v609 = vsel %vm483, 0, %v607
        %v610 = vmul.f32 %v608, %v608
        %v611 = vmul.f32 %v610, -0.001358992
        %v612 = vadd.f32 %v611, 0.041655596
        %v613 = vmul.f32 %v610, %v612
        %v614 = vadd.f32 %v613, -0.4999988
        %v615 = vmul.f32 %v610, %v614
        %v616 = vadd.f32 1.0, %v615
        %v617 = vmul.f32 %v608, %v608
        %v618 = vmul.f32 %v617, -0.00019511016
        %v619 = vadd.f32 %v618, 0.008332121
        %v620 = vmul.f32 %v617, %v619
        %v621 = vadd.f32 %v620, -0.16666654
        %v622 = vmul.f32 %v617, %v621
        %v623 = vadd.f32 %v622, 1.0
        %v624 = vmul.f32 %v623, %v608
        %vm625 = vweird.f32 %v312
        %v626 = vadd.s32 %v609, 3
        %v627 = vand.u32 %v626, 3
        %vm628 = vcmp.lt.s32.totalorder %v627, 2
        %vm629 = vcmp.eq.s32.totalorder %v627, 0
        %v630 = vxor.u32 %v624, 2147483648
        %v631 = vsel %vm629, %v616, %v630
        %vm632 = vcmp.eq.s32.totalorder %v627, 2
        %v633 = vxor.u32 %v616, 2147483648
        %v634 = vsel %vm632, %v633, %v624
        %v635 = vsel %vm628, %v631, %v634
        %v636 = vsel %vm625, nan, %v635
        %v637 = vand.u32 2147483647, %v313
        %vm638 = vcmp.le.f32.partialorder %v637, 0.7853982
        %vm639 = vcmp.lt.s32.totalorder %v313, 0
        %v640 = vand.u32 %v313, 2139095040
        %v641 = vshrl.u32 %v640, 23
        %v642 = vsub.s32 %v641, 127
        %v643 = vand.u32 2147483647, %v313
        %v644 = vand.u32 %v643, 8388607
        %v645 = vor.u32 %v644, 8388608
        %v646 = vsub.s32 0, %v645
        %v647 = vadd.s32 %v642, 1
        %vm648 = vcmp.gt.s32.totalorder %v647, 0
        %v649 = vsel %vm648, %v647, 0
        %v650 = vshrl.u32 %v649, 5
        %v651 = vand.u32 %v649, 31
        %v652 = vsub.s32 32, %v651
        %v653 = vshrl.u32 683565275, %v652
        %v654 = vshll.u32 683565275, %v651
        %v655 = vshrl.u32 2475754826, %v652
        %v656 = vor.u32 %v654, %v655
        %v657 = vshll.u32 2475754826, %v651
        %v658 = vshrl.u32 2131351028, %v652
        %v659 = vor.u32 %v657, %v658
        %v660 = vshll.u32 2131351028, %v651
        %v661 = vshrl.u32 2102212464, %v652
        %v662 = vor.u32 %v660, %v661
        %v663 = vshll.u32 2102212464, %v651
        %v664 = vshrl.u32 920167782, %v652
        %v665 = vor.u32 %v663, %v664
        %v666 = vshll.u32 920167782, %v651
        %v667 = vshrl.u32 1326507024, %v652
        %v668 = vor.u32 %v666, %v667
        %vm669 = vcmp.lt.s32.totalorder %v650, 1
        %vm670 = vcmp.lt.s32.totalorder %v650, 2
        %vm671 = vcmp.lt.s32.totalorder %v650, 3
        %vm672 = vcmp.lt.s32.totalorder %v650, 4
        %v673 = vsel %vm669, %v653, %v656
        %v674 = vsel %vm672, %v662, 2102212464
        %v675 = vsel %vm671, %v659, %v674
        %v676 = vsel %vm670, %v673, %v675
        %v677 = vsel %vm669, %v656, %v659
        %v678 = vsel %vm672, %v665, 920167782
        %v679 = vsel %vm671, %v662, %v678
        %v680 = vsel %vm670, %v677, %v679
        %v681 = vsel %vm669, %v659, %v662
        %v682 = vsel %vm672, %v668, 1326507024
        %v683 = vsel %vm671, %v665, %v682
        %v684 = vsel %vm670, %v681, %v683
        %v685 = vshll.u32 %v645, 8
        %v686 = vand.u32 %v685, 65535
        %v687 = vshrl.u32 %v685, 16
        %v688 = vand.u32 %v684, 65535
        %v689 = vshrl.u32 %v684, 16
        %v690 = vmul.u32 %v686, %v688
        %v691 = vmul.u32 %v686, %v689
        %v692 = vmul.u32 %v687, %v688
        %v693 = vmul.u32 %v687, %v689
        %v694 = vshll.u32 %v691, 16
        %v695 = vshrl.u32 %v691, 16
        %v696 = vshll.u32 %v692, 16
        %v697 = vshrl.u32 %v692, 16
        %vm698 = vc.u32 %v690, %v694
        %v699 = vsel %vm698, 1, 0
        %v700 = vadd.s32 %v690, %v694
        %v701 = vadd.s32 %v693, %v699
        %vm702 = vc.u32 %v700, %v696
        %v703 = vsel %vm702, 1, 0
        %v704 = vadd.s32 %v700, %v696
        %v705 = vadd.s32 %v701, %v703
        %v706 = vadd.s32 %v705, %v695
        %v707 = vadd.s32 %v706, %v697
        %v708 = vand.u32 %v685, 65535
        %v709 = vshrl.u32 %v685, 16
        %v710 = vand.u32 %v680, 65535
        %v711 = vshrl.u32 %v680, 16
        %v712 = vmul.u32 %v708, %v710
        %v713 = vmul.u32 %v708, %v711
        %v714 = vmul.u32 %v709, %v710
        %v715 = vmul.u32 %v709, %v711
        %v716 = vshll.u32 %v713, 16
        %v717 = vshrl.u32 %v713, 16
        %v718 = vshll.u32 %v714, 16
        %v719 = vshrl.u32 %v714, 16
        %vm720 = vc.u32 %v712, %v716
        %v721 = vsel %vm720, 1, 0
        %v722 = vadd.s32 %v712, %v716
        %v723 = vadd.s32 %v715, %v721
        %vm724 = vc.u32 %v722, %v718
        %v725 = vsel %vm724, 1, 0
        %v726 = vadd.s32 %v722, %v718
        %v727 = vadd.s32 %v723, %v725
        %v728 = vadd.s32 %v727, %v717
        %v729 = vadd.s32 %v728, %v719
        %v730 = vmul.u32 %v685, %v676
        %v731 = vadd.s32 %v707, %v726
        %vm732 = vc.u32 %v707, %v726
        %v733 = vadd.s32 %v729, 1
        %v734 = vsel %vm732, %v733, %v729
        %v735 = vadd.s32 %v730, %v734
        %v736 = vadd.s32 %v735, 536870912
        %v737 = vshrl.u32 %v736, 30
        %v738 = vshll.u32 %v737, 30
        %v739 = vsub.s32 %v735, %v738
        %vm740 = vcmp.lt.s32.totalorder %v739, 0
        %v741 = vsub.s32 0, %v739
        %v742 = vsel %vm740, %v741, %v739
        %v743 = vclz %v742
        %v744 = vsub.s32 %v743, 2
        %vm745 = vcmp.gt.s32.totalorder 0, %v744
        %v746 = vsel %vm745, 0, %v744
        %v747 = vsub.s32 32, %v746
        %v748 = vshll.u32 %v739, %v746
        %v749 = vshrl.u32 %v731, %v747
        %v750 = vor.u32 %v748, %v749
        %v751 = vsub.s32 4294967266, %v746
        %v752 = vadd.s32 %v751, 127
        %v753 = vshll.u32 %v752, 23
        %v754 = vor.u32 4788187, %v753
        %v755 = vand.u32 2147483647, %v754
        %v757 = vcvt.s32.f32 %v750
        %v758 = vmul.f32 %v757, %v755
        %v759 = vxor.u32 %v758, 2147483648
        %v760 = vsel %vm639, %v759, %v758
        %v761 = vsub.s32 4, %v737
        %v762 = vsel %vm639, %v761, %v737
        %v763 = vsel %vm638, %v313, %v760
        %v764 = vsel %vm638, 0, %v762
        %v765 = vmul.f32 %v763, %v763
        %v766 = vmul.f32 %v765, -0.001358992
        %v767 = vadd.f32 %v766, 0.041655596
        %v768 = vmul.f32 %v765, %v767
        %v769 = vadd.f32 %v768, -0.4999988
        %v770 = vmul.f32 %v765, %v769
        %v771 = vadd.f32 1.0, %v770
        %v772 = vmul.f32 %v763, %v763
        %v773 = vmul.f32 %v772, -0.00019511016
        %v774 = vadd.f32 %v773, 0.008332121
        %v775 = vmul.f32 %v772, %v774
        %v776 = vadd.f32 %v775, -0.16666654
        %v777 = vmul.f32 %v772, %v776
        %v778 = vadd.f32 %v777, 1.0
        %v779 = vmul.f32 %v778, %v763
        %vm780 = vweird.f32 %v313
        %v781 = vadd.s32 %v764, 3
        %v782 = vand.u32 %v781, 3
        %vm783 = vcmp.lt.s32.totalorder %v782, 2
        %vm784 = vcmp.eq.s32.totalorder %v782, 0
        %v785 = vxor.u32 %v779, 2147483648
        %v786 = vsel %vm784, %v771, %v785
        %vm787 = vcmp.eq.s32.totalorder %v782, 2
        %v788 = vxor.u32 %v771, 2147483648
        %v789 = vsel %vm787, %v788, %v779
        %v790 = vsel %vm783, %v786, %v789
        %v791 = vsel %vm780, nan, %v790
        %v792 = vand.u32 2147483647, %v314
        %vm793 = vcmp.le.f32.partialorder %v792, 0.7853982
        %vm794 = vcmp.lt.s32.totalorder %v314, 0
        %v795 = vand.u32 %v314, 2139095040
        %v796 = vshrl.u32 %v795, 23
        %v797 = vsub.s32 %v796, 127
        %v798 = vand.u32 2147483647, %v314
        %v799 = vand.u32 %v798, 8388607
        %v800 = vor.u32 %v799, 8388608
        %v801 = vsub.s32 0, %v800
        %v802 = vadd.s32 %v797, 1
        %vm803 = vcmp.gt.s32.totalorder %v802, 0
        %v804 = vsel %vm803, %v802, 0
        %v805 = vshrl.u32 %v804, 5
        %v806 = vand.u32 %v804, 31
        %v807 = vsub.s32 32, %v806
        %v808 = vshrl.u32 683565275, %v807
        %v809 = vshll.u32 683565275, %v806
        %v810 = vshrl.u32 2475754826, %v807
        %v811 = vor.u32 %v809, %v810
        %v812 = vshll.u32 2475754826, %v806
        %v813 = vshrl.u32 2131351028, %v807
        %v814 = vor.u32 %v812, %v813
        %v815 = vshll.u32 2131351028, %v806
        %v816 = vshrl.u32 2102212464, %v807
        %v817 = vor.u32 %v815, %v816
        %v818 = vshll.u32 2102212464, %v806
        %v819 = vshrl.u32 920167782, %v807
        %v820 = vor.u32 %v818, %v819
        %v821 = vshll.u32 920167782, %v806
        %v822 = vshrl.u32 1326507024, %v807
        %v823 = vor.u32 %v821, %v822
        %vm824 = vcmp.lt.s32.totalorder %v805, 1
        %vm825 = vcmp.lt.s32.totalorder %v805, 2
        %vm826 = vcmp.lt.s32.totalorder %v805, 3
        %vm827 = vcmp.lt.s32.totalorder %v805, 4
        %v828 = vsel %vm824, %v808, %v811
        %v829 = vsel %vm827, %v817, 2102212464
        %v830 = vsel %vm826, %v814, %v829
        %v831 = vsel %vm825, %v828, %v830
        %v832 = vsel %vm824, %v811, %v814
        %v833 = vsel %vm827, %v820, 920167782
        %v834 = vsel %vm826, %v817, %v833
        %v835 = vsel %vm825, %v832, %v834
        %v836 = vsel %vm824, %v814, %v817
        %v837 = vsel %vm827, %v823, 1326507024
        %v838 = vsel %vm826, %v820, %v837
        %v839 = vsel %vm825, %v836, %v838
        %v840 = vshll.u32 %v800, 8
        %v841 = vand.u32 %v840, 65535
        %v842 = vshrl.u32 %v840, 16
        %v843 = vand.u32 %v839, 65535
        %v844 = vshrl.u32 %v839, 16
        %v845 = vmul.u32 %v841, %v843
        %v846 = vmul.u32 %v841, %v844
        %v847 = vmul.u32 %v842, %v843
        %v848 = vmul.u32 %v842, %v844
        %v849 = vshll.u32 %v846, 16
        %v850 = vshrl.u32 %v846, 16
        %v851 = vshll.u32 %v847, 16
        %v852 = vshrl.u32 %v847, 16
        %vm853 = vc.u32 %v845, %v849
        %v854 = vsel %vm853, 1, 0
        %v855 = vadd.s32 %v845, %v849
        %v856 = vadd.s32 %v848, %v854
        %vm857 = vc.u32 %v855, %v851
        %v858 = vsel %vm857, 1, 0
        %v859 = vadd.s32 %v855, %v851
        %v860 = vadd.s32 %v856, %v858
        %v861 = vadd.s32 %v860, %v850
        %v862 = vadd.s32 %v861, %v852
        %v863 = vand.u32 %v840, 65535
        %v864 = vshrl.u32 %v840, 16
        %v865 = vand.u32 %v835, 65535
        %v866 = vshrl.u32 %v835, 16
        %v867 = vmul.u32 %v863, %v865
        %v868 = vmul.u32 %v863, %v866
        %v869 = vmul.u32 %v864, %v865
        %v870 = vmul.u32 %v864, %v866
        %v871 = vshll.u32 %v868, 16
        %v872 = vshrl.u32 %v868, 16
        %v873 = vshll.u32 %v869, 16
        %v874 = vshrl.u32 %v869, 16
        %vm875 = vc.u32 %v867, %v871
        %v876 = vsel %vm875, 1, 0
        %v877 = vadd.s32 %v867, %v871
        %v878 = vadd.s32 %v870, %v876
        %vm879 = vc.u32 %v877, %v873
        %v880 = vsel %vm879, 1, 0
        %v881 = vadd.s32 %v877, %v873
        %v882 = vadd.s32 %v878, %v880
        %v883 = vadd.s32 %v882, %v872
        %v884 = vadd.s32 %v883, %v874
        %v885 = vmul.u32 %v840, %v831
        %v886 = vadd.s32 %v862, %v881
        %vm887 = vc.u32 %v862, %v881
        %v888 = vadd.s32 %v884, 1
        %v889 = vsel %vm887, %v888, %v884
        %v890 = vadd.s32 %v885, %v889
        %v891 = vadd.s32 %v890, 536870912
        %v892 = vshrl.u32 %v891, 30
        %v893 = vshll.u32 %v892, 30
        %v894 = vsub.s32 %v890, %v893
        %vm895 = vcmp.lt.s32.totalorder %v894, 0
        %v896 = vsub.s32 0, %v894
        %v897 = vsel %vm895, %v896, %v894
        %v898 = vclz %v897
        %v899 = vsub.s32 %v898, 2
        %vm900 = vcmp.gt.s32.totalorder 0, %v899
        %v901 = vsel %vm900, 0, %v899
        %v902 = vsub.s32 32, %v901
        %v903 = vshll.u32 %v894, %v901
        %v904 = vshrl.u32 %v886, %v902
        %v905 = vor.u32 %v903, %v904
        %v906 = vsub.s32 4294967266, %v901
        %v907 = vadd.s32 %v906, 127
        %v908 = vshll.u32 %v907, 23
        %v909 = vor.u32 4788187, %v908
        %v910 = vand.u32 2147483647, %v909
        %v912 = vcvt.s32.f32 %v905
        %v913 = vmul.f32 %v912, %v910
        %v914 = vxor.u32 %v913, 2147483648
        %v915 = vsel %vm794, %v914, %v913
        %v916 = vsub.s32 4, %v892
        %v917 = vsel %vm794, %v916, %v892
        %v918 = vsel %vm793, %v314, %v915
        %v919 = vsel %vm793, 0, %v917
        %v920 = vmul.f32 %v918, %v918
        %v921 = vmul.f32 %v920, -0.001358992
        %v922 = vadd.f32 %v921, 0.041655596
        %v923 = vmul.f32 %v920, %v922
        %v924 = vadd.f32 %v923, -0.4999988
        %v925 = vmul.f32 %v920, %v924
        %v926 = vadd.f32 1.0, %v925
        %v927 = vmul.f32 %v918, %v918
        %v928 = vmul.f32 %v927, -0.00019511016
        %v929 = vadd.f32 %v928, 0.008332121
        %v930 = vmul.f32 %v927, %v929
        %v931 = vadd.f32 %v930, -0.16666654
        %v932 = vmul.f32 %v927, %v931
        %v933 = vadd.f32 %v932, 1.0
        %v934 = vmul.f32 %v933, %v918
        %vm935 = vweird.f32 %v314
        %v936 = vadd.s32 %v919, 3
        %v937 = vand.u32 %v936, 3
        %vm938 = vcmp.lt.s32.totalorder %v937, 2
        %vm939 = vcmp.eq.s32.totalorder %v937, 0
        %v940 = vxor.u32 %v934, 2147483648
        %v941 = vsel %vm939, %v926, %v940
        %vm942 = vcmp.eq.s32.totalorder %v937, 2
        %v943 = vxor.u32 %v926, 2147483648
        %v944 = vsel %vm942, %v943, %v934
        %v945 = vsel %vm938, %v941, %v944
        %v946 = vsel %vm935, nan, %v945
        %v947 = vand.u32 2147483647, %v315
        %vm948 = vcmp.le.f32.partialorder %v947, 0.7853982
        %vm949 = vcmp.lt.s32.totalorder %v315, 0
        %v950 = vand.u32 %v315, 2139095040
        %v951 = vshrl.u32 %v950, 23
        %v952 = vsub.s32 %v951, 127
        %v953 = vand.u32 2147483647, %v315
        %v954 = vand.u32 %v953, 8388607
        %v955 = vor.u32 %v954, 8388608
        %v956 = vsub.s32 0, %v955
        %v957 = vadd.s32 %v952, 1
        %vm958 = vcmp.gt.s32.totalorder %v957, 0
        %v959 = vsel %vm958, %v957, 0
        %v960 = vshrl.u32 %v959, 5
        %v961 = vand.u32 %v959, 31
        %v962 = vsub.s32 32, %v961
        %v963 = vshrl.u32 683565275, %v962
        %v964 = vshll.u32 683565275, %v961
        %v965 = vshrl.u32 2475754826, %v962
        %v966 = vor.u32 %v964, %v965
        %v967 = vshll.u32 2475754826, %v961
        %v968 = vshrl.u32 2131351028, %v962
        %v969 = vor.u32 %v967, %v968
        %v970 = vshll.u32 2131351028, %v961
        %v971 = vshrl.u32 2102212464, %v962
        %v972 = vor.u32 %v970, %v971
        %v973 = vshll.u32 2102212464, %v961
        %v974 = vshrl.u32 920167782, %v962
        %v975 = vor.u32 %v973, %v974
        %v976 = vshll.u32 920167782, %v961
        %v977 = vshrl.u32 1326507024, %v962
        %v978 = vor.u32 %v976, %v977
        %vm979 = vcmp.lt.s32.totalorder %v960, 1
        %vm980 = vcmp.lt.s32.totalorder %v960, 2
        %vm981 = vcmp.lt.s32.totalorder %v960, 3
        %vm982 = vcmp.lt.s32.totalorder %v960, 4
        %v983 = vsel %vm979, %v963, %v966
        %v984 = vsel %vm982, %v972, 2102212464
        %v985 = vsel %vm981, %v969, %v984
        %v986 = vsel %vm980, %v983, %v985
        %v987 = vsel %vm979, %v966, %v969
        %v988 = vsel %vm982, %v975, 920167782
        %v989 = vsel %vm981, %v972, %v988
        %v990 = vsel %vm980, %v987, %v989
        %v991 = vsel %vm979, %v969, %v972
        %v992 = vsel %vm982, %v978, 1326507024
        %v993 = vsel %vm981, %v975, %v992
        %v994 = vsel %vm980, %v991, %v993
        %v995 = vshll.u32 %v955, 8
        %v996 = vand.u32 %v995, 65535
        %v997 = vshrl.u32 %v995, 16
        %v998 = vand.u32 %v994, 65535
        %v999 = vshrl.u32 %v994, 16
        %v1000 = vmul.u32 %v996, %v998
        %v1001 = vmul.u32 %v996, %v999
        %v1002 = vmul.u32 %v997, %v998
        %v1003 = vmul.u32 %v997, %v999
        %v1004 = vshll.u32 %v1001, 16
        %v1005 = vshrl.u32 %v1001, 16
        %v1006 = vshll.u32 %v1002, 16
        %v1007 = vshrl.u32 %v1002, 16
        %vm1008 = vc.u32 %v1000, %v1004
        %v1009 = vsel %vm1008, 1, 0
        %v1010 = vadd.s32 %v1000, %v1004
        %v1011 = vadd.s32 %v1003, %v1009
        %vm1012 = vc.u32 %v1010, %v1006
        %v1013 = vsel %vm1012, 1, 0
        %v1014 = vadd.s32 %v1010, %v1006
        %v1015 = vadd.s32 %v1011, %v1013
        %v1016 = vadd.s32 %v1015, %v1005
        %v1017 = vadd.s32 %v1016, %v1007
        %v1018 = vand.u32 %v995, 65535
        %v1019 = vshrl.u32 %v995, 16
        %v1020 = vand.u32 %v990, 65535
        %v1021 = vshrl.u32 %v990, 16
        %v1022 = vmul.u32 %v1018, %v1020
        %v1023 = vmul.u32 %v1018, %v1021
        %v1024 = vmul.u32 %v1019, %v1020
        %v1025 = vmul.u32 %v1019, %v1021
        %v1026 = vshll.u32 %v1023, 16
        %v1027 = vshrl.u32 %v1023, 16
        %v1028 = vshll.u32 %v1024, 16
        %v1029 = vshrl.u32 %v1024, 16
        %vm1030 = vc.u32 %v1022, %v1026
        %v1031 = vsel %vm1030, 1, 0
        %v1032 = vadd.s32 %v1022, %v1026
        %v1033 = vadd.s32 %v1025, %v1031
        %vm1034 = vc.u32 %v1032, %v1028
        %v1035 = vsel %vm1034, 1, 0
        %v1036 = vadd.s32 %v1032, %v1028
        %v1037 = vadd.s32 %v1033, %v1035
        %v1038 = vadd.s32 %v1037, %v1027
        %v1039 = vadd.s32 %v1038, %v1029
        %v1040 = vmul.u32 %v995, %v986
        %v1041 = vadd.s32 %v1017, %v1036
        %vm1042 = vc.u32 %v1017, %v1036
        %v1043 = vadd.s32 %v1039, 1
        %v1044 = vsel %vm1042, %v1043, %v1039
        %v1045 = vadd.s32 %v1040, %v1044
        %v1046 = vadd.s32 %v1045, 536870912
        %v1047 = vshrl.u32 %v1046, 30
        %v1048 = vshll.u32 %v1047, 30
        %v1049 = vsub.s32 %v1045, %v1048
        %vm1050 = vcmp.lt.s32.totalorder %v1049, 0
        %v1051 = vsub.s32 0, %v1049
        %v1052 = vsel %vm1050, %v1051, %v1049
        %v1053 = vclz %v1052
        %v1054 = vsub.s32 %v1053, 2
        %vm1055 = vcmp.gt.s32.totalorder 0, %v1054
        %v1056 = vsel %vm1055, 0, %v1054
        %v1057 = vsub.s32 32, %v1056
        %v1058 = vshll.u32 %v1049, %v1056
        %v1059 = vshrl.u32 %v1041, %v1057
        %v1060 = vor.u32 %v1058, %v1059
        %v1061 = vsub.s32 4294967266, %v1056
        %v1062 = vadd.s32 %v1061, 127
        %v1063 = vshll.u32 %v1062, 23
        %v1064 = vor.u32 4788187, %v1063
        %v1065 = vand.u32 2147483647, %v1064
        %v1067 = vcvt.s32.f32 %v1060
        %v1068 = vmul.f32 %v1067, %v1065
        %v1069 = vxor.u32 %v1068, 2147483648
        %v1070 = vsel %vm949, %v1069, %v1068
        %v1071 = vsub.s32 4, %v1047
        %v1072 = vsel %vm949, %v1071, %v1047
        %v1073 = vsel %vm948, %v315, %v1070
        %v1074 = vsel %vm948, 0, %v1072
        %v1075 = vmul.f32 %v1073, %v1073
        %v1076 = vmul.f32 %v1075, -0.001358992
        %v1077 = vadd.f32 %v1076, 0.041655596
        %v1078 = vmul.f32 %v1075, %v1077
        %v1079 = vadd.f32 %v1078, -0.4999988
        %v1080 = vmul.f32 %v1075, %v1079
        %v1081 = vadd.f32 1.0, %v1080
        %v1082 = vmul.f32 %v1073, %v1073
        %v1083 = vmul.f32 %v1082, -0.00019511016
        %v1084 = vadd.f32 %v1083, 0.008332121
        %v1085 = vmul.f32 %v1082, %v1084
        %v1086 = vadd.f32 %v1085, -0.16666654
        %v1087 = vmul.f32 %v1082, %v1086
        %v1088 = vadd.f32 %v1087, 1.0
        %v1089 = vmul.f32 %v1088, %v1073
        %vm1090 = vweird.f32 %v315
        %v1091 = vadd.s32 %v1074, 3
        %v1092 = vand.u32 %v1091, 3
        %vm1093 = vcmp.lt.s32.totalorder %v1092, 2
        %vm1094 = vcmp.eq.s32.totalorder %v1092, 0
        %v1095 = vxor.u32 %v1089, 2147483648
        %v1096 = vsel %vm1094, %v1081, %v1095
        %vm1097 = vcmp.eq.s32.totalorder %v1092, 2
        %v1098 = vxor.u32 %v1081, 2147483648
        %v1099 = vsel %vm1097, %v1098, %v1089
        %v1100 = vsel %vm1093, %v1096, %v1099
        %v1101 = vsel %vm1090, nan, %v1100
        %v1102 = vand.u32 2147483647, %v316
        %vm1103 = vcmp.le.f32.partialorder %v1102, 0.7853982
        %vm1104 = vcmp.lt.s32.totalorder %v316, 0
        %v1105 = vand.u32 %v316, 2139095040
        %v1106 = vshrl.u32 %v1105, 23
        %v1107 = vsub.s32 %v1106, 127
        %v1108 = vand.u32 2147483647, %v316
        %v1109 = vand.u32 %v1108, 8388607
        %v1110 = vor.u32 %v1109, 8388608
        %v1111 = vsub.s32 0, %v1110
        %v1112 = vadd.s32 %v1107, 1
        %vm1113 = vcmp.gt.s32.totalorder %v1112, 0
        %v1114 = vsel %vm1113, %v1112, 0
        %v1115 = vshrl.u32 %v1114, 5
        %v1116 = vand.u32 %v1114, 31
        %v1117 = vsub.s32 32, %v1116
        %v1118 = vshrl.u32 683565275, %v1117
        %v1119 = vshll.u32 683565275, %v1116
        %v1120 = vshrl.u32 2475754826, %v1117
        %v1121 = vor.u32 %v1119, %v1120
        %v1122 = vshll.u32 2475754826, %v1116
        %v1123 = vshrl.u32 2131351028, %v1117
        %v1124 = vor.u32 %v1122, %v1123
        %v1125 = vshll.u32 2131351028, %v1116
        %v1126 = vshrl.u32 2102212464, %v1117
        %v1127 = vor.u32 %v1125, %v1126
        %v1128 = vshll.u32 2102212464, %v1116
        %v1129 = vshrl.u32 920167782, %v1117
        %v1130 = vor.u32 %v1128, %v1129
        %v1131 = vshll.u32 920167782, %v1116
        %v1132 = vshrl.u32 1326507024, %v1117
        %v1133 = vor.u32 %v1131, %v1132
        %vm1134 = vcmp.lt.s32.totalorder %v1115, 1
        %vm1135 = vcmp.lt.s32.totalorder %v1115, 2
        %vm1136 = vcmp.lt.s32.totalorder %v1115, 3
        %vm1137 = vcmp.lt.s32.totalorder %v1115, 4
        %v1138 = vsel %vm1134, %v1118, %v1121
        %v1139 = vsel %vm1137, %v1127, 2102212464
        %v1140 = vsel %vm1136, %v1124, %v1139
        %v1141 = vsel %vm1135, %v1138, %v1140
        %v1142 = vsel %vm1134, %v1121, %v1124
        %v1143 = vsel %vm1137, %v1130, 920167782
        %v1144 = vsel %vm1136, %v1127, %v1143
        %v1145 = vsel %vm1135, %v1142, %v1144
        %v1146 = vsel %vm1134, %v1124, %v1127
        %v1147 = vsel %vm1137, %v1133, 1326507024
        %v1148 = vsel %vm1136, %v1130, %v1147
        %v1149 = vsel %vm1135, %v1146, %v1148
        %v1150 = vshll.u32 %v1110, 8
        %v1151 = vand.u32 %v1150, 65535
        %v1152 = vshrl.u32 %v1150, 16
        %v1153 = vand.u32 %v1149, 65535
        %v1154 = vshrl.u32 %v1149, 16
        %v1155 = vmul.u32 %v1151, %v1153
        %v1156 = vmul.u32 %v1151, %v1154
        %v1157 = vmul.u32 %v1152, %v1153
        %v1158 = vmul.u32 %v1152, %v1154
        %v1159 = vshll.u32 %v1156, 16
        %v1160 = vshrl.u32 %v1156, 16
        %v1161 = vshll.u32 %v1157, 16
        %v1162 = vshrl.u32 %v1157, 16
        %vm1163 = vc.u32 %v1155, %v1159
        %v1164 = vsel %vm1163, 1, 0
        %v1165 = vadd.s32 %v1155, %v1159
        %v1166 = vadd.s32 %v1158, %v1164
        %vm1167 = vc.u32 %v1165, %v1161
        %v1168 = vsel %vm1167, 1, 0
        %v1169 = vadd.s32 %v1165, %v1161
        %v1170 = vadd.s32 %v1166, %v1168
        %v1171 = vadd.s32 %v1170, %v1160
        %v1172 = vadd.s32 %v1171, %v1162
        %v1173 = vand.u32 %v1150, 65535
        %v1174 = vshrl.u32 %v1150, 16
        %v1175 = vand.u32 %v1145, 65535
        %v1176 = vshrl.u32 %v1145, 16
        %v1177 = vmul.u32 %v1173, %v1175
        %v1178 = vmul.u32 %v1173, %v1176
        %v1179 = vmul.u32 %v1174, %v1175
        %v1180 = vmul.u32 %v1174, %v1176
        %v1181 = vshll.u32 %v1178, 16
        %v1182 = vshrl.u32 %v1178, 16
        %v1183 = vshll.u32 %v1179, 16
        %v1184 = vshrl.u32 %v1179, 16
        %vm1185 = vc.u32 %v1177, %v1181
        %v1186 = vsel %vm1185, 1, 0
        %v1187 = vadd.s32 %v1177, %v1181
        %v1188 = vadd.s32 %v1180, %v1186
        %vm1189 = vc.u32 %v1187, %v1183
        %v1190 = vsel %vm1189, 1, 0
        %v1191 = vadd.s32 %v1187, %v1183
        %v1192 = vadd.s32 %v1188, %v1190
        %v1193 = vadd.s32 %v1192, %v1182
        %v1194 = vadd.s32 %v1193, %v1184
        %v1195 = vmul.u32 %v1150, %v1141
        %v1196 = vadd.s32 %v1172, %v1191
        %vm1197 = vc.u32 %v1172, %v1191
        %v1198 = vadd.s32 %v1194, 1
        %v1199 = vsel %vm1197, %v1198, %v1194
        %v1200 = vadd.s32 %v1195, %v1199
        %v1201 = vadd.s32 %v1200, 536870912
        %v1202 = vshrl.u32 %v1201, 30
        %v1203 = vshll.u32 %v1202, 30
        %v1204 = vsub.s32 %v1200, %v1203
        %vm1205 = vcmp.lt.s32.totalorder %v1204, 0
        %v1206 = vsub.s32 0, %v1204
        %v1207 = vsel %vm1205, %v1206, %v1204
        %v1208 = vclz %v1207
        %v1209 = vsub.s32 %v1208, 2
        %vm1210 = vcmp.gt.s32.totalorder 0, %v1209
        %v1211 = vsel %vm1210, 0, %v1209
        %v1212 = vsub.s32 32, %v1211
        %v1213 = vshll.u32 %v1204, %v1211
        %v1214 = vshrl.u32 %v1196, %v1212
        %v1215 = vor.u32 %v1213, %v1214
        %v1216 = vsub.s32 4294967266, %v1211
        %v1217 = vadd.s32 %v1216, 127
        %v1218 = vshll.u32 %v1217, 23
        %v1219 = vor.u32 4788187, %v1218
        %v1220 = vand.u32 2147483647, %v1219
        %v1222 = vcvt.s32.f32 %v1215
        %v1223 = vmul.f32 %v1222, %v1220
        %v1224 = vxor.u32 %v1223, 2147483648
        %v1225 = vsel %vm1104, %v1224, %v1223
        %v1226 = vsub.s32 4, %v1202
        %v1227 = vsel %vm1104, %v1226, %v1202
        %v1228 = vsel %vm1103, %v316, %v1225
        %v1229 = vsel %vm1103, 0, %v1227
        %v1230 = vmul.f32 %v1228, %v1228
        %v1231 = vmul.f32 %v1230, -0.001358992
        %v1232 = vadd.f32 %v1231, 0.041655596
        %v1233 = vmul.f32 %v1230, %v1232
        %v1234 = vadd.f32 %v1233, -0.4999988
        %v1235 = vmul.f32 %v1230, %v1234
        %v1236 = vadd.f32 1.0, %v1235
        %v1237 = vmul.f32 %v1228, %v1228
        %v1238 = vmul.f32 %v1237, -0.00019511016
        %v1239 = vadd.f32 %v1238, 0.008332121
        %v1240 = vmul.f32 %v1237, %v1239
        %v1241 = vadd.f32 %v1240, -0.16666654
        %v1242 = vmul.f32 %v1237, %v1241
        %v1243 = vadd.f32 %v1242, 1.0
        %v1244 = vmul.f32 %v1243, %v1228
        %vm1245 = vweird.f32 %v316
        %v1246 = vadd.s32 %v1229, 3
        %v1247 = vand.u32 %v1246, 3
        %vm1248 = vcmp.lt.s32.totalorder %v1247, 2
        %vm1249 = vcmp.eq.s32.totalorder %v1247, 0
        %v1250 = vxor.u32 %v1244, 2147483648
        %v1251 = vsel %vm1249, %v1236, %v1250
        %vm1252 = vcmp.eq.s32.totalorder %v1247, 2
        %v1253 = vxor.u32 %v1236, 2147483648
        %v1254 = vsel %vm1252, %v1253, %v1244
        %v1255 = vsel %vm1248, %v1251, %v1254
        %v1256 = vsel %vm1245, nan, %v1255
        %v1257 = vand.u32 2147483647, %v317
        %vm1258 = vcmp.le.f32.partialorder %v1257, 0.7853982
        %vm1259 = vcmp.lt.s32.totalorder %v317, 0
        %v1260 = vand.u32 %v317, 2139095040
        %v1261 = vshrl.u32 %v1260, 23
        %v1262 = vsub.s32 %v1261, 127
        %v1263 = vand.u32 2147483647, %v317
        %v1264 = vand.u32 %v1263, 8388607
        %v1265 = vor.u32 %v1264, 8388608
        %v1266 = vsub.s32 0, %v1265
        %v1267 = vadd.s32 %v1262, 1
        %vm1268 = vcmp.gt.s32.totalorder %v1267, 0
        %v1269 = vsel %vm1268, %v1267, 0
        %v1270 = vshrl.u32 %v1269, 5
        %v1271 = vand.u32 %v1269, 31
        %v1272 = vsub.s32 32, %v1271
        %v1273 = vshrl.u32 683565275, %v1272
        %v1274 = vshll.u32 683565275, %v1271
        %v1275 = vshrl.u32 2475754826, %v1272
        %v1276 = vor.u32 %v1274, %v1275
        %v1277 = vshll.u32 2475754826, %v1271
        %v1278 = vshrl.u32 2131351028, %v1272
        %v1279 = vor.u32 %v1277, %v1278
        %v1280 = vshll.u32 2131351028, %v1271
        %v1281 = vshrl.u32 2102212464, %v1272
        %v1282 = vor.u32 %v1280, %v1281
        %v1283 = vshll.u32 2102212464, %v1271
        %v1284 = vshrl.u32 920167782, %v1272
        %v1285 = vor.u32 %v1283, %v1284
        %v1286 = vshll.u32 920167782, %v1271
        %v1287 = vshrl.u32 1326507024, %v1272
        %v1288 = vor.u32 %v1286, %v1287
        %vm1289 = vcmp.lt.s32.totalorder %v1270, 1
        %vm1290 = vcmp.lt.s32.totalorder %v1270, 2
        %vm1291 = vcmp.lt.s32.totalorder %v1270, 3
        %vm1292 = vcmp.lt.s32.totalorder %v1270, 4
        %v1293 = vsel %vm1289, %v1273, %v1276
        %v1294 = vsel %vm1292, %v1282, 2102212464
        %v1295 = vsel %vm1291, %v1279, %v1294
        %v1296 = vsel %vm1290, %v1293, %v1295
        %v1297 = vsel %vm1289, %v1276, %v1279
        %v1298 = vsel %vm1292, %v1285, 920167782
        %v1299 = vsel %vm1291, %v1282, %v1298
        %v1300 = vsel %vm1290, %v1297, %v1299
        %v1301 = vsel %vm1289, %v1279, %v1282
        %v1302 = vsel %vm1292, %v1288, 1326507024
        %v1303 = vsel %vm1291, %v1285, %v1302
        %v1304 = vsel %vm1290, %v1301, %v1303
        %v1305 = vshll.u32 %v1265, 8
        %v1306 = vand.u32 %v1305, 65535
        %v1307 = vshrl.u32 %v1305, 16
        %v1308 = vand.u32 %v1304, 65535
        %v1309 = vshrl.u32 %v1304, 16
        %v1310 = vmul.u32 %v1306, %v1308
        %v1311 = vmul.u32 %v1306, %v1309
        %v1312 = vmul.u32 %v1307, %v1308
        %v1313 = vmul.u32 %v1307, %v1309
        %v1314 = vshll.u32 %v1311, 16
        %v1315 = vshrl.u32 %v1311, 16
        %v1316 = vshll.u32 %v1312, 16
        %v1317 = vshrl.u32 %v1312, 16
        %vm1318 = vc.u32 %v1310, %v1314
        %v1319 = vsel %vm1318, 1, 0
        %v1320 = vadd.s32 %v1310, %v1314
        %v1321 = vadd.s32 %v1313, %v1319
        %vm1322 = vc.u32 %v1320, %v1316
        %v1323 = vsel %vm1322, 1, 0
        %v1324 = vadd.s32 %v1320, %v1316
        %v1325 = vadd.s32 %v1321, %v1323
        %v1326 = vadd.s32 %v1325, %v1315
        %v1327 = vadd.s32 %v1326, %v1317
        %v1328 = vand.u32 %v1305, 65535
        %v1329 = vshrl.u32 %v1305, 16
        %v1330 = vand.u32 %v1300, 65535
        %v1331 = vshrl.u32 %v1300, 16
        %v1332 = vmul.u32 %v1328, %v1330
        %v1333 = vmul.u32 %v1328, %v1331
        %v1334 = vmul.u32 %v1329, %v1330
        %v1335 = vmul.u32 %v1329, %v1331
        %v1336 = vshll.u32 %v1333, 16
        %v1337 = vshrl.u32 %v1333, 16
        %v1338 = vshll.u32 %v1334, 16
        %v1339 = vshrl.u32 %v1334, 16
        %vm1340 = vc.u32 %v1332, %v1336
        %v1341 = vsel %vm1340, 1, 0
        %v1342 = vadd.s32 %v1332, %v1336
        %v1343 = vadd.s32 %v1335, %v1341
        %vm1344 = vc.u32 %v1342, %v1338
        %v1345 = vsel %vm1344, 1, 0
        %v1346 = vadd.s32 %v1342, %v1338
        %v1347 = vadd.s32 %v1343, %v1345
        %v1348 = vadd.s32 %v1347, %v1337
        %v1349 = vadd.s32 %v1348, %v1339
        %v1350 = vmul.u32 %v1305, %v1296
        %v1351 = vadd.s32 %v1327, %v1346
        %vm1352 = vc.u32 %v1327, %v1346
        %v1353 = vadd.s32 %v1349, 1
        %v1354 = vsel %vm1352, %v1353, %v1349
        %v1355 = vadd.s32 %v1350, %v1354
        %v1356 = vadd.s32 %v1355, 536870912
        %v1357 = vshrl.u32 %v1356, 30
        %v1358 = vshll.u32 %v1357, 30
        %v1359 = vsub.s32 %v1355, %v1358
        %vm1360 = vcmp.lt.s32.totalorder %v1359, 0
        %v1361 = vsub.s32 0, %v1359
        %v1362 = vsel %vm1360, %v1361, %v1359
        %v1363 = vclz %v1362
        %v1364 = vsub.s32 %v1363, 2
        %vm1365 = vcmp.gt.s32.totalorder 0, %v1364
        %v1366 = vsel %vm1365, 0, %v1364
        %v1367 = vsub.s32 32, %v1366
        %v1368 = vshll.u32 %v1359, %v1366
        %v1369 = vshrl.u32 %v1351, %v1367
        %v1370 = vor.u32 %v1368, %v1369
        %v1371 = vsub.s32 4294967266, %v1366
        %v1372 = vadd.s32 %v1371, 127
        %v1373 = vshll.u32 %v1372, 23
        %v1374 = vor.u32 4788187, %v1373
        %v1375 = vand.u32 2147483647, %v1374
        %v1377 = vcvt.s32.f32 %v1370
        %v1378 = vmul.f32 %v1377, %v1375
        %v1379 = vxor.u32 %v1378, 2147483648
        %v1380 = vsel %vm1259, %v1379, %v1378
        %v1381 = vsub.s32 4, %v1357
        %v1382 = vsel %vm1259, %v1381, %v1357
        %v1383 = vsel %vm1258, %v317, %v1380
        %v1384 = vsel %vm1258, 0, %v1382
        %v1385 = vmul.f32 %v1383, %v1383
        %v1386 = vmul.f32 %v1385, -0.001358992
        %v1387 = vadd.f32 %v1386, 0.041655596
        %v1388 = vmul.f32 %v1385, %v1387
        %v1389 = vadd.f32 %v1388, -0.4999988
        %v1390 = vmul.f32 %v1385, %v1389
        %v1391 = vadd.f32 1.0, %v1390
        %v1392 = vmul.f32 %v1383, %v1383
        %v1393 = vmul.f32 %v1392, -0.00019511016
        %v1394 = vadd.f32 %v1393, 0.008332121
        %v1395 = vmul.f32 %v1392, %v1394
        %v1396 = vadd.f32 %v1395, -0.16666654
        %v1397 = vmul.f32 %v1392, %v1396
        %v1398 = vadd.f32 %v1397, 1.0
        %v1399 = vmul.f32 %v1398, %v1383
        %vm1400 = vweird.f32 %v317
        %v1401 = vadd.s32 %v1384, 3
        %v1402 = vand.u32 %v1401, 3
        %vm1403 = vcmp.lt.s32.totalorder %v1402, 2
        %vm1404 = vcmp.eq.s32.totalorder %v1402, 0
        %v1405 = vxor.u32 %v1399, 2147483648
        %v1406 = vsel %vm1404, %v1391, %v1405
        %vm1407 = vcmp.eq.s32.totalorder %v1402, 2
        %v1408 = vxor.u32 %v1391, 2147483648
        %v1409 = vsel %vm1407, %v1408, %v1399
        %v1410 = vsel %vm1403, %v1406, %v1409
        %v1411 = vsel %vm1400, nan, %v1410
        %v1412 = vand.u32 2147483647, %v318
        %vm1413 = vcmp.le.f32.partialorder %v1412, 0.7853982
        %vm1414 = vcmp.lt.s32.totalorder %v318, 0
        %v1415 = vand.u32 %v318, 2139095040
        %v1416 = vshrl.u32 %v1415, 23
        %v1417 = vsub.s32 %v1416, 127
        %v1418 = vand.u32 2147483647, %v318
        %v1419 = vand.u32 %v1418, 8388607
        %v1420 = vor.u32 %v1419, 8388608
        %v1421 = vsub.s32 0, %v1420
        %v1422 = vadd.s32 %v1417, 1
        %vm1423 = vcmp.gt.s32.totalorder %v1422, 0
        %v1424 = vsel %vm1423, %v1422, 0
        %v1425 = vshrl.u32 %v1424, 5
        %v1426 = vand.u32 %v1424, 31
        %v1427 = vsub.s32 32, %v1426
        %v1428 = vshrl.u32 683565275, %v1427
        %v1429 = vshll.u32 683565275, %v1426
        %v1430 = vshrl.u32 2475754826, %v1427
        %v1431 = vor.u32 %v1429, %v1430
        %v1432 = vshll.u32 2475754826, %v1426
        %v1433 = vshrl.u32 2131351028, %v1427
        %v1434 = vor.u32 %v1432, %v1433
        %v1435 = vshll.u32 2131351028, %v1426
        %v1436 = vshrl.u32 2102212464, %v1427
        %v1437 = vor.u32 %v1435, %v1436
        %v1438 = vshll.u32 2102212464, %v1426
        %v1439 = vshrl.u32 920167782, %v1427
        %v1440 = vor.u32 %v1438, %v1439
        %v1441 = vshll.u32 920167782, %v1426
        %v1442 = vshrl.u32 1326507024, %v1427
        %v1443 = vor.u32 %v1441, %v1442
        %vm1444 = vcmp.lt.s32.totalorder %v1425, 1
        %vm1445 = vcmp.lt.s32.totalorder %v1425, 2
        %vm1446 = vcmp.lt.s32.totalorder %v1425, 3
        %vm1447 = vcmp.lt.s32.totalorder %v1425, 4
        %v1448 = vsel %vm1444, %v1428, %v1431
        %v1449 = vsel %vm1447, %v1437, 2102212464
        %v1450 = vsel %vm1446, %v1434, %v1449
        %v1451 = vsel %vm1445, %v1448, %v1450
        %v1452 = vsel %vm1444, %v1431, %v1434
        %v1453 = vsel %vm1447, %v1440, 920167782
        %v1454 = vsel %vm1446, %v1437, %v1453
        %v1455 = vsel %vm1445, %v1452, %v1454
        %v1456 = vsel %vm1444, %v1434, %v1437
        %v1457 = vsel %vm1447, %v1443, 1326507024
        %v1458 = vsel %vm1446, %v1440, %v1457
        %v1459 = vsel %vm1445, %v1456, %v1458
        %v1460 = vshll.u32 %v1420, 8
        %v1461 = vand.u32 %v1460, 65535
        %v1462 = vshrl.u32 %v1460, 16
        %v1463 = vand.u32 %v1459, 65535
        %v1464 = vshrl.u32 %v1459, 16
        %v1465 = vmul.u32 %v1461, %v1463
        %v1466 = vmul.u32 %v1461, %v1464
        %v1467 = vmul.u32 %v1462, %v1463
        %v1468 = vmul.u32 %v1462, %v1464
        %v1469 = vshll.u32 %v1466, 16
        %v1470 = vshrl.u32 %v1466, 16
        %v1471 = vshll.u32 %v1467, 16
        %v1472 = vshrl.u32 %v1467, 16
        %vm1473 = vc.u32 %v1465, %v1469
        %v1474 = vsel %vm1473, 1, 0
        %v1475 = vadd.s32 %v1465, %v1469
        %v1476 = vadd.s32 %v1468, %v1474
        %vm1477 = vc.u32 %v1475, %v1471
        %v1478 = vsel %vm1477, 1, 0
        %v1479 = vadd.s32 %v1475, %v1471
        %v1480 = vadd.s32 %v1476, %v1478
        %v1481 = vadd.s32 %v1480, %v1470
        %v1482 = vadd.s32 %v1481, %v1472
        %v1483 = vand.u32 %v1460, 65535
        %v1484 = vshrl.u32 %v1460, 16
        %v1485 = vand.u32 %v1455, 65535
        %v1486 = vshrl.u32 %v1455, 16
        %v1487 = vmul.u32 %v1483, %v1485
        %v1488 = vmul.u32 %v1483, %v1486
        %v1489 = vmul.u32 %v1484, %v1485
        %v1490 = vmul.u32 %v1484, %v1486
        %v1491 = vshll.u32 %v1488, 16
        %v1492 = vshrl.u32 %v1488, 16
        %v1493 = vshll.u32 %v1489, 16
        %v1494 = vshrl.u32 %v1489, 16
        %vm1495 = vc.u32 %v1487, %v1491
        %v1496 = vsel %vm1495, 1, 0
        %v1497 = vadd.s32 %v1487, %v1491
        %v1498 = vadd.s32 %v1490, %v1496
        %vm1499 = vc.u32 %v1497, %v1493
        %v1500 = vsel %vm1499, 1, 0
        %v1501 = vadd.s32 %v1497, %v1493
        %v1502 = vadd.s32 %v1498, %v1500
        %v1503 = vadd.s32 %v1502, %v1492
        %v1504 = vadd.s32 %v1503, %v1494
        %v1505 = vmul.u32 %v1460, %v1451
        %v1506 = vadd.s32 %v1482, %v1501
        %vm1507 = vc.u32 %v1482, %v1501
        %v1508 = vadd.s32 %v1504, 1
        %v1509 = vsel %vm1507, %v1508, %v1504
        %v1510 = vadd.s32 %v1505, %v1509
        %v1511 = vadd.s32 %v1510, 536870912
        %v1512 = vshrl.u32 %v1511, 30
        %v1513 = vshll.u32 %v1512, 30
        %v1514 = vsub.s32 %v1510, %v1513
        %vm1515 = vcmp.lt.s32.totalorder %v1514, 0
        %v1516 = vsub.s32 0, %v1514
        %v1517 = vsel %vm1515, %v1516, %v1514
        %v1518 = vclz %v1517
        %v1519 = vsub.s32 %v1518, 2
        %vm1520 = vcmp.gt.s32.totalorder 0, %v1519
        %v1521 = vsel %vm1520, 0, %v1519
        %v1522 = vsub.s32 32, %v1521
        %v1523 = vshll.u32 %v1514, %v1521
        %v1524 = vshrl.u32 %v1506, %v1522
        %v1525 = vor.u32 %v1523, %v1524
        %v1526 = vsub.s32 4294967266, %v1521
        %v1527 = vadd.s32 %v1526, 127
        %v1528 = vshll.u32 %v1527, 23
        %v1529 = vor.u32 4788187, %v1528
        %v1530 = vand.u32 2147483647, %v1529
        %v1532 = vcvt.s32.f32 %v1525
        %v1533 = vmul.f32 %v1532, %v1530
        %v1534 = vxor.u32 %v1533, 2147483648
        %v1535 = vsel %vm1414, %v1534, %v1533
        %v1536 = vsub.s32 4, %v1512
        %v1537 = vsel %vm1414, %v1536, %v1512
        %v1538 = vsel %vm1413, %v318, %v1535
        %v1539 = vsel %vm1413, 0, %v1537
        %v1540 = vmul.f32 %v1538, %v1538
        %v1541 = vmul.f32 %v1540, -0.001358992
        %v1542 = vadd.f32 %v1541, 0.041655596
        %v1543 = vmul.f32 %v1540, %v1542
        %v1544 = vadd.f32 %v1543, -0.4999988
        %v1545 = vmul.f32 %v1540, %v1544
        %v1546 = vadd.f32 1.0, %v1545
        %v1547 = vmul.f32 %v1538, %v1538
        %v1548 = vmul.f32 %v1547, -0.00019511016
        %v1549 = vadd.f32 %v1548, 0.008332121
        %v1550 = vmul.f32 %v1547, %v1549
        %v1551 = vadd.f32 %v1550, -0.16666654
        %v1552 = vmul.f32 %v1547, %v1551
        %v1553 = vadd.f32 %v1552, 1.0
        %v1554 = vmul.f32 %v1553, %v1538
        %vm1555 = vweird.f32 %v318
        %v1556 = vadd.s32 %v1539, 3
        %v1557 = vand.u32 %v1556, 3
        %vm1558 = vcmp.lt.s32.totalorder %v1557, 2
        %vm1559 = vcmp.eq.s32.totalorder %v1557, 0
        %v1560 = vxor.u32 %v1554, 2147483648
        %v1561 = vsel %vm1559, %v1546, %v1560
        %vm1562 = vcmp.eq.s32.totalorder %v1557, 2
        %v1563 = vxor.u32 %v1546, 2147483648
        %v1564 = vsel %vm1562, %v1563, %v1554
        %v1565 = vsel %vm1558, %v1561, %v1564
        %v1566 = vsel %vm1555, nan, %v1565
        %v1567 = vand.u32 2147483647, %v319
        %vm1568 = vcmp.le.f32.partialorder %v1567, 0.7853982
        %vm1569 = vcmp.lt.s32.totalorder %v319, 0
        %v1570 = vand.u32 %v319, 2139095040
        %v1571 = vshrl.u32 %v1570, 23
        %v1572 = vsub.s32 %v1571, 127
        %v1573 = vand.u32 2147483647, %v319
        %v1574 = vand.u32 %v1573, 8388607
        %v1575 = vor.u32 %v1574, 8388608
        %v1576 = vsub.s32 0, %v1575
        %v1577 = vadd.s32 %v1572, 1
        %vm1578 = vcmp.gt.s32.totalorder %v1577, 0
        %v1579 = vsel %vm1578, %v1577, 0
        %v1580 = vshrl.u32 %v1579, 5
        %v1581 = vand.u32 %v1579, 31
        %v1582 = vsub.s32 32, %v1581
        %v1583 = vshrl.u32 683565275, %v1582
        %v1584 = vshll.u32 683565275, %v1581
        %v1585 = vshrl.u32 2475754826, %v1582
        %v1586 = vor.u32 %v1584, %v1585
        %v1587 = vshll.u32 2475754826, %v1581
        %v1588 = vshrl.u32 2131351028, %v1582
        %v1589 = vor.u32 %v1587, %v1588
        %v1590 = vshll.u32 2131351028, %v1581
        %v1591 = vshrl.u32 2102212464, %v1582
        %v1592 = vor.u32 %v1590, %v1591
        %v1593 = vshll.u32 2102212464, %v1581
        %v1594 = vshrl.u32 920167782, %v1582
        %v1595 = vor.u32 %v1593, %v1594
        %v1596 = vshll.u32 920167782, %v1581
        %v1597 = vshrl.u32 1326507024, %v1582
        %v1598 = vor.u32 %v1596, %v1597
        %vm1599 = vcmp.lt.s32.totalorder %v1580, 1
        %vm1600 = vcmp.lt.s32.totalorder %v1580, 2
        %vm1601 = vcmp.lt.s32.totalorder %v1580, 3
        %vm1602 = vcmp.lt.s32.totalorder %v1580, 4
        %v1603 = vsel %vm1599, %v1583, %v1586
        %v1604 = vsel %vm1602, %v1592, 2102212464
        %v1605 = vsel %vm1601, %v1589, %v1604
        %v1606 = vsel %vm1600, %v1603, %v1605
        %v1607 = vsel %vm1599, %v1586, %v1589
        %v1608 = vsel %vm1602, %v1595, 920167782
        %v1609 = vsel %vm1601, %v1592, %v1608
        %v1610 = vsel %vm1600, %v1607, %v1609
        %v1611 = vsel %vm1599, %v1589, %v1592
        %v1612 = vsel %vm1602, %v1598, 1326507024
        %v1613 = vsel %vm1601, %v1595, %v1612
        %v1614 = vsel %vm1600, %v1611, %v1613
        %v1615 = vshll.u32 %v1575, 8
        %v1616 = vand.u32 %v1615, 65535
        %v1617 = vshrl.u32 %v1615, 16
        %v1618 = vand.u32 %v1614, 65535
        %v1619 = vshrl.u32 %v1614, 16
        %v1620 = vmul.u32 %v1616, %v1618
        %v1621 = vmul.u32 %v1616, %v1619
        %v1622 = vmul.u32 %v1617, %v1618
        %v1623 = vmul.u32 %v1617, %v1619
        %v1624 = vshll.u32 %v1621, 16
        %v1625 = vshrl.u32 %v1621, 16
        %v1626 = vshll.u32 %v1622, 16
        %v1627 = vshrl.u32 %v1622, 16
        %vm1628 = vc.u32 %v1620, %v1624
        %v1629 = vsel %vm1628, 1, 0
        %v1630 = vadd.s32 %v1620, %v1624
        %v1631 = vadd.s32 %v1623, %v1629
        %vm1632 = vc.u32 %v1630, %v1626
        %v1633 = vsel %vm1632, 1, 0
        %v1634 = vadd.s32 %v1630, %v1626
        %v1635 = vadd.s32 %v1631, %v1633
        %v1636 = vadd.s32 %v1635, %v1625
        %v1637 = vadd.s32 %v1636, %v1627
        %v1638 = vand.u32 %v1615, 65535
        %v1639 = vshrl.u32 %v1615, 16
        %v1640 = vand.u32 %v1610, 65535
        %v1641 = vshrl.u32 %v1610, 16
        %v1642 = vmul.u32 %v1638, %v1640
        %v1643 = vmul.u32 %v1638, %v1641
        %v1644 = vmul.u32 %v1639, %v1640
        %v1645 = vmul.u32 %v1639, %v1641
        %v1646 = vshll.u32 %v1643, 16
        %v1647 = vshrl.u32 %v1643, 16
        %v1648 = vshll.u32 %v1644, 16
        %v1649 = vshrl.u32 %v1644, 16
        %vm1650 = vc.u32 %v1642, %v1646
        %v1651 = vsel %vm1650, 1, 0
        %v1652 = vadd.s32 %v1642, %v1646
        %v1653 = vadd.s32 %v1645, %v1651
        %vm1654 = vc.u32 %v1652, %v1648
        %v1655 = vsel %vm1654, 1, 0
        %v1656 = vadd.s32 %v1652, %v1648
        %v1657 = vadd.s32 %v1653, %v1655
        %v1658 = vadd.s32 %v1657, %v1647
        %v1659 = vadd.s32 %v1658, %v1649
        %v1660 = vmul.u32 %v1615, %v1606
        %v1661 = vadd.s32 %v1637, %v1656
        %vm1662 = vc.u32 %v1637, %v1656
        %v1663 = vadd.s32 %v1659, 1
        %v1664 = vsel %vm1662, %v1663, %v1659
        %v1665 = vadd.s32 %v1660, %v1664
        %v1666 = vadd.s32 %v1665, 536870912
        %v1667 = vshrl.u32 %v1666, 30
        %v1668 = vshll.u32 %v1667, 30
        %v1669 = vsub.s32 %v1665, %v1668
        %vm1670 = vcmp.lt.s32.totalorder %v1669, 0
        %v1671 = vsub.s32 0, %v1669
        %v1672 = vsel %vm1670, %v1671, %v1669
        %v1673 = vclz %v1672
        %v1674 = vsub.s32 %v1673, 2
        %vm1675 = vcmp.gt.s32.totalorder 0, %v1674
        %v1676 = vsel %vm1675, 0, %v1674
        %v1677 = vsub.s32 32, %v1676
        %v1678 = vshll.u32 %v1669, %v1676
        %v1679 = vshrl.u32 %v1661, %v1677
        %v1680 = vor.u32 %v1678, %v1679
        %v1681 = vsub.s32 4294967266, %v1676
        %v1682 = vadd.s32 %v1681, 127
        %v1683 = vshll.u32 %v1682, 23
        %v1684 = vor.u32 4788187, %v1683
        %v1685 = vand.u32 2147483647, %v1684
        %v1687 = vcvt.s32.f32 %v1680
        %v1688 = vmul.f32 %v1687, %v1685
        %v1689 = vxor.u32 %v1688, 2147483648
        %v1690 = vsel %vm1569, %v1689, %v1688
        %v1691 = vsub.s32 4, %v1667
        %v1692 = vsel %vm1569, %v1691, %v1667
        %v1693 = vsel %vm1568, %v319, %v1690
        %v1694 = vsel %vm1568, 0, %v1692
        %v1695 = vmul.f32 %v1693, %v1693
        %v1696 = vmul.f32 %v1695, -0.001358992
        %v1697 = vadd.f32 %v1696, 0.041655596
        %v1698 = vmul.f32 %v1695, %v1697
        %v1699 = vadd.f32 %v1698, -0.4999988
        %v1700 = vmul.f32 %v1695, %v1699
        %v1701 = vadd.f32 1.0, %v1700
        %v1702 = vmul.f32 %v1693, %v1693
        %v1703 = vmul.f32 %v1702, -0.00019511016
        %v1704 = vadd.f32 %v1703, 0.008332121
        %v1705 = vmul.f32 %v1702, %v1704
        %v1706 = vadd.f32 %v1705, -0.16666654
        %v1707 = vmul.f32 %v1702, %v1706
        %v1708 = vadd.f32 %v1707, 1.0
        %v1709 = vmul.f32 %v1708, %v1693
        %vm1710 = vweird.f32 %v319
        %v1711 = vadd.s32 %v1694, 3
        %v1712 = vand.u32 %v1711, 3
        %vm1713 = vcmp.lt.s32.totalorder %v1712, 2
        %vm1714 = vcmp.eq.s32.totalorder %v1712, 0
        %v1715 = vxor.u32 %v1709, 2147483648
        %v1716 = vsel %vm1714, %v1701, %v1715
        %vm1717 = vcmp.eq.s32.totalorder %v1712, 2
        %v1718 = vxor.u32 %v1701, 2147483648
        %v1719 = vsel %vm1717, %v1718, %v1709
        %v1720 = vsel %vm1713, %v1716, %v1719
        %v1721 = vsel %vm1710, nan, %v1720
        %v1722 = vand.u32 2147483647, %v320
        %vm1723 = vcmp.le.f32.partialorder %v1722, 0.7853982
        %vm1724 = vcmp.lt.s32.totalorder %v320, 0
        %v1725 = vand.u32 %v320, 2139095040
        %v1726 = vshrl.u32 %v1725, 23
        %v1727 = vsub.s32 %v1726, 127
        %v1728 = vand.u32 2147483647, %v320
        %v1729 = vand.u32 %v1728, 8388607
        %v1730 = vor.u32 %v1729, 8388608
        %v1731 = vsub.s32 0, %v1730
        %v1732 = vadd.s32 %v1727, 1
        %vm1733 = vcmp.gt.s32.totalorder %v1732, 0
        %v1734 = vsel %vm1733, %v1732, 0
        %v1735 = vshrl.u32 %v1734, 5
        %v1736 = vand.u32 %v1734, 31
        %v1737 = vsub.s32 32, %v1736
        %v1738 = vshrl.u32 683565275, %v1737
        %v1739 = vshll.u32 683565275, %v1736
        %v1740 = vshrl.u32 2475754826, %v1737
        %v1741 = vor.u32 %v1739, %v1740
        %v1742 = vshll.u32 2475754826, %v1736
        %v1743 = vshrl.u32 2131351028, %v1737
        %v1744 = vor.u32 %v1742, %v1743
        %v1745 = vshll.u32 2131351028, %v1736
        %v1746 = vshrl.u32 2102212464, %v1737
        %v1747 = vor.u32 %v1745, %v1746
        %v1748 = vshll.u32 2102212464, %v1736
        %v1749 = vshrl.u32 920167782, %v1737
        %v1750 = vor.u32 %v1748, %v1749
        %v1751 = vshll.u32 920167782, %v1736
        %v1752 = vshrl.u32 1326507024, %v1737
        %v1753 = vor.u32 %v1751, %v1752
        %vm1754 = vcmp.lt.s32.totalorder %v1735, 1
        %vm1755 = vcmp.lt.s32.totalorder %v1735, 2
        %vm1756 = vcmp.lt.s32.totalorder %v1735, 3
        %vm1757 = vcmp.lt.s32.totalorder %v1735, 4
        %v1758 = vsel %vm1754, %v1738, %v1741
        %v1759 = vsel %vm1757, %v1747, 2102212464
        %v1760 = vsel %vm1756, %v1744, %v1759
        %v1761 = vsel %vm1755, %v1758, %v1760
        %v1762 = vsel %vm1754, %v1741, %v1744
        %v1763 = vsel %vm1757, %v1750, 920167782
        %v1764 = vsel %vm1756, %v1747, %v1763
        %v1765 = vsel %vm1755, %v1762, %v1764
        %v1766 = vsel %vm1754, %v1744, %v1747
        %v1767 = vsel %vm1757, %v1753, 1326507024
        %v1768 = vsel %vm1756, %v1750, %v1767
        %v1769 = vsel %vm1755, %v1766, %v1768
        %v1770 = vshll.u32 %v1730, 8
        %v1771 = vand.u32 %v1770, 65535
        %v1772 = vshrl.u32 %v1770, 16
        %v1773 = vand.u32 %v1769, 65535
        %v1774 = vshrl.u32 %v1769, 16
        %v1775 = vmul.u32 %v1771, %v1773
        %v1776 = vmul.u32 %v1771, %v1774
        %v1777 = vmul.u32 %v1772, %v1773
        %v1778 = vmul.u32 %v1772, %v1774
        %v1779 = vshll.u32 %v1776, 16
        %v1780 = vshrl.u32 %v1776, 16
        %v1781 = vshll.u32 %v1777, 16
        %v1782 = vshrl.u32 %v1777, 16
        %vm1783 = vc.u32 %v1775, %v1779
        %v1784 = vsel %vm1783, 1, 0
        %v1785 = vadd.s32 %v1775, %v1779
        %v1786 = vadd.s32 %v1778, %v1784
        %vm1787 = vc.u32 %v1785, %v1781
        %v1788 = vsel %vm1787, 1, 0
        %v1789 = vadd.s32 %v1785, %v1781
        %v1790 = vadd.s32 %v1786, %v1788
        %v1791 = vadd.s32 %v1790, %v1780
        %v1792 = vadd.s32 %v1791, %v1782
        %v1793 = vand.u32 %v1770, 65535
        %v1794 = vshrl.u32 %v1770, 16
        %v1795 = vand.u32 %v1765, 65535
        %v1796 = vshrl.u32 %v1765, 16
        %v1797 = vmul.u32 %v1793, %v1795
        %v1798 = vmul.u32 %v1793, %v1796
        %v1799 = vmul.u32 %v1794, %v1795
        %v1800 = vmul.u32 %v1794, %v1796
        %v1801 = vshll.u32 %v1798, 16
        %v1802 = vshrl.u32 %v1798, 16
        %v1803 = vshll.u32 %v1799, 16
        %v1804 = vshrl.u32 %v1799, 16
        %vm1805 = vc.u32 %v1797, %v1801
        %v1806 = vsel %vm1805, 1, 0
        %v1807 = vadd.s32 %v1797, %v1801
        %v1808 = vadd.s32 %v1800, %v1806
        %vm1809 = vc.u32 %v1807, %v1803
        %v1810 = vsel %vm1809, 1, 0
        %v1811 = vadd.s32 %v1807, %v1803
        %v1812 = vadd.s32 %v1808, %v1810
        %v1813 = vadd.s32 %v1812, %v1802
        %v1814 = vadd.s32 %v1813, %v1804
        %v1815 = vmul.u32 %v1770, %v1761
        %v1816 = vadd.s32 %v1792, %v1811
        %vm1817 = vc.u32 %v1792, %v1811
        %v1818 = vadd.s32 %v1814, 1
        %v1819 = vsel %vm1817, %v1818, %v1814
        %v1820 = vadd.s32 %v1815, %v1819
        %v1821 = vadd.s32 %v1820, 536870912
        %v1822 = vshrl.u32 %v1821, 30
        %v1823 = vshll.u32 %v1822, 30
        %v1824 = vsub.s32 %v1820, %v1823
        %vm1825 = vcmp.lt.s32.totalorder %v1824, 0
        %v1826 = vsub.s32 0, %v1824
        %v1827 = vsel %vm1825, %v1826, %v1824
        %v1828 = vclz %v1827
        %v1829 = vsub.s32 %v1828, 2
        %vm1830 = vcmp.gt.s32.totalorder 0, %v1829
        %v1831 = vsel %vm1830, 0, %v1829
        %v1832 = vsub.s32 32, %v1831
        %v1833 = vshll.u32 %v1824, %v1831
        %v1834 = vshrl.u32 %v1816, %v1832
        %v1835 = vor.u32 %v1833, %v1834
        %v1836 = vsub.s32 4294967266, %v1831
        %v1837 = vadd.s32 %v1836, 127
        %v1838 = vshll.u32 %v1837, 23
        %v1839 = vor.u32 4788187, %v1838
        %v1840 = vand.u32 2147483647, %v1839
        %v1842 = vcvt.s32.f32 %v1835
        %v1843 = vmul.f32 %v1842, %v1840
        %v1844 = vxor.u32 %v1843, 2147483648
        %v1845 = vsel %vm1724, %v1844, %v1843
        %v1846 = vsub.s32 4, %v1822
        %v1847 = vsel %vm1724, %v1846, %v1822
        %v1848 = vsel %vm1723, %v320, %v1845
        %v1849 = vsel %vm1723, 0, %v1847
        %v1850 = vmul.f32 %v1848, %v1848
        %v1851 = vmul.f32 %v1850, -0.001358992
        %v1852 = vadd.f32 %v1851, 0.041655596
        %v1853 = vmul.f32 %v1850, %v1852
        %v1854 = vadd.f32 %v1853, -0.4999988
        %v1855 = vmul.f32 %v1850, %v1854
        %v1856 = vadd.f32 1.0, %v1855
        %v1857 = vmul.f32 %v1848, %v1848
        %v1858 = vmul.f32 %v1857, -0.00019511016
        %v1859 = vadd.f32 %v1858, 0.008332121
        %v1860 = vmul.f32 %v1857, %v1859
        %v1861 = vadd.f32 %v1860, -0.16666654
        %v1862 = vmul.f32 %v1857, %v1861
        %v1863 = vadd.f32 %v1862, 1.0
        %v1864 = vmul.f32 %v1863, %v1848
        %vm1865 = vweird.f32 %v320
        %v1866 = vadd.s32 %v1849, 3
        %v1867 = vand.u32 %v1866, 3
        %vm1868 = vcmp.lt.s32.totalorder %v1867, 2
        %vm1869 = vcmp.eq.s32.totalorder %v1867, 0
        %v1870 = vxor.u32 %v1864, 2147483648
        %v1871 = vsel %vm1869, %v1856, %v1870
        %vm1872 = vcmp.eq.s32.totalorder %v1867, 2
        %v1873 = vxor.u32 %v1856, 2147483648
        %v1874 = vsel %vm1872, %v1873, %v1864
        %v1875 = vsel %vm1868, %v1871, %v1874
        %v1876 = vsel %vm1865, nan, %v1875
        %v1877 = vand.u32 2147483647, %v321
        %vm1878 = vcmp.le.f32.partialorder %v1877, 0.7853982
        %vm1879 = vcmp.lt.s32.totalorder %v321, 0
        %v1880 = vand.u32 %v321, 2139095040
        %v1881 = vshrl.u32 %v1880, 23
        %v1882 = vsub.s32 %v1881, 127
        %v1883 = vand.u32 2147483647, %v321
        %v1884 = vand.u32 %v1883, 8388607
        %v1885 = vor.u32 %v1884, 8388608
        %v1886 = vsub.s32 0, %v1885
        %v1887 = vadd.s32 %v1882, 1
        %vm1888 = vcmp.gt.s32.totalorder %v1887, 0
        %v1889 = vsel %vm1888, %v1887, 0
        %v1890 = vshrl.u32 %v1889, 5
        %v1891 = vand.u32 %v1889, 31
        %v1892 = vsub.s32 32, %v1891
        %v1893 = vshrl.u32 683565275, %v1892
        %v1894 = vshll.u32 683565275, %v1891
        %v1895 = vshrl.u32 2475754826, %v1892
        %v1896 = vor.u32 %v1894, %v1895
        %v1897 = vshll.u32 2475754826, %v1891
        %v1898 = vshrl.u32 2131351028, %v1892
        %v1899 = vor.u32 %v1897, %v1898
        %v1900 = vshll.u32 2131351028, %v1891
        %v1901 = vshrl.u32 2102212464, %v1892
        %v1902 = vor.u32 %v1900, %v1901
        %v1903 = vshll.u32 2102212464, %v1891
        %v1904 = vshrl.u32 920167782, %v1892
        %v1905 = vor.u32 %v1903, %v1904
        %v1906 = vshll.u32 920167782, %v1891
        %v1907 = vshrl.u32 1326507024, %v1892
        %v1908 = vor.u32 %v1906, %v1907
        %vm1909 = vcmp.lt.s32.totalorder %v1890, 1
        %vm1910 = vcmp.lt.s32.totalorder %v1890, 2
        %vm1911 = vcmp.lt.s32.totalorder %v1890, 3
        %vm1912 = vcmp.lt.s32.totalorder %v1890, 4
        %v1913 = vsel %vm1909, %v1893, %v1896
        %v1914 = vsel %vm1912, %v1902, 2102212464
        %v1915 = vsel %vm1911, %v1899, %v1914
        %v1916 = vsel %vm1910, %v1913, %v1915
        %v1917 = vsel %vm1909, %v1896, %v1899
        %v1918 = vsel %vm1912, %v1905, 920167782
        %v1919 = vsel %vm1911, %v1902, %v1918
        %v1920 = vsel %vm1910, %v1917, %v1919
        %v1921 = vsel %vm1909, %v1899, %v1902
        %v1922 = vsel %vm1912, %v1908, 1326507024
        %v1923 = vsel %vm1911, %v1905, %v1922
        %v1924 = vsel %vm1910, %v1921, %v1923
        %v1925 = vshll.u32 %v1885, 8
        %v1926 = vand.u32 %v1925, 65535
        %v1927 = vshrl.u32 %v1925, 16
        %v1928 = vand.u32 %v1924, 65535
        %v1929 = vshrl.u32 %v1924, 16
        %v1930 = vmul.u32 %v1926, %v1928
        %v1931 = vmul.u32 %v1926, %v1929
        %v1932 = vmul.u32 %v1927, %v1928
        %v1933 = vmul.u32 %v1927, %v1929
        %v1934 = vshll.u32 %v1931, 16
        %v1935 = vshrl.u32 %v1931, 16
        %v1936 = vshll.u32 %v1932, 16
        %v1937 = vshrl.u32 %v1932, 16
        %vm1938 = vc.u32 %v1930, %v1934
        %v1939 = vsel %vm1938, 1, 0
        %v1940 = vadd.s32 %v1930, %v1934
        %v1941 = vadd.s32 %v1933, %v1939
        %vm1942 = vc.u32 %v1940, %v1936
        %v1943 = vsel %vm1942, 1, 0
        %v1944 = vadd.s32 %v1940, %v1936
        %v1945 = vadd.s32 %v1941, %v1943
        %v1946 = vadd.s32 %v1945, %v1935
        %v1947 = vadd.s32 %v1946, %v1937
        %v1948 = vand.u32 %v1925, 65535
        %v1949 = vshrl.u32 %v1925, 16
        %v1950 = vand.u32 %v1920, 65535
        %v1951 = vshrl.u32 %v1920, 16
        %v1952 = vmul.u32 %v1948, %v1950
        %v1953 = vmul.u32 %v1948, %v1951
        %v1954 = vmul.u32 %v1949, %v1950
        %v1955 = vmul.u32 %v1949, %v1951
        %v1956 = vshll.u32 %v1953, 16
        %v1957 = vshrl.u32 %v1953, 16
        %v1958 = vshll.u32 %v1954, 16
        %v1959 = vshrl.u32 %v1954, 16
        %vm1960 = vc.u32 %v1952, %v1956
        %v1961 = vsel %vm1960, 1, 0
        %v1962 = vadd.s32 %v1952, %v1956
        %v1963 = vadd.s32 %v1955, %v1961
        %vm1964 = vc.u32 %v1962, %v1958
        %v1965 = vsel %vm1964, 1, 0
        %v1966 = vadd.s32 %v1962, %v1958
        %v1967 = vadd.s32 %v1963, %v1965
        %v1968 = vadd.s32 %v1967, %v1957
        %v1969 = vadd.s32 %v1968, %v1959
        %v1970 = vmul.u32 %v1925, %v1916
        %v1971 = vadd.s32 %v1947, %v1966
        %vm1972 = vc.u32 %v1947, %v1966
        %v1973 = vadd.s32 %v1969, 1
        %v1974 = vsel %vm1972, %v1973, %v1969
        %v1975 = vadd.s32 %v1970, %v1974
        %v1976 = vadd.s32 %v1975, 536870912
        %v1977 = vshrl.u32 %v1976, 30
        %v1978 = vshll.u32 %v1977, 30
        %v1979 = vsub.s32 %v1975, %v1978
        %vm1980 = vcmp.lt.s32.totalorder %v1979, 0
        %v1981 = vsub.s32 0, %v1979
        %v1982 = vsel %vm1980, %v1981, %v1979
        %v1983 = vclz %v1982
        %v1984 = vsub.s32 %v1983, 2
        %vm1985 = vcmp.gt.s32.totalorder 0, %v1984
        %v1986 = vsel %vm1985, 0, %v1984
        %v1987 = vsub.s32 32, %v1986
        %v1988 = vshll.u32 %v1979, %v1986
        %v1989 = vshrl.u32 %v1971, %v1987
        %v1990 = vor.u32 %v1988, %v1989
        %v1991 = vsub.s32 4294967266, %v1986
        %v1992 = vadd.s32 %v1991, 127
        %v1993 = vshll.u32 %v1992, 23
        %v1994 = vor.u32 4788187, %v1993
        %v1995 = vand.u32 2147483647, %v1994
        %v1997 = vcvt.s32.f32 %v1990
        %v1998 = vmul.f32 %v1997, %v1995
        %v1999 = vxor.u32 %v1998, 2147483648
        %v2000 = vsel %vm1879, %v1999, %v1998
        %v2001 = vsub.s32 4, %v1977
        %v2002 = vsel %vm1879, %v2001, %v1977
        %v2003 = vsel %vm1878, %v321, %v2000
        %v2004 = vsel %vm1878, 0, %v2002
        %v2005 = vmul.f32 %v2003, %v2003
        %v2006 = vmul.f32 %v2005, -0.001358992
        %v2007 = vadd.f32 %v2006, 0.041655596
        %v2008 = vmul.f32 %v2005, %v2007
        %v2009 = vadd.f32 %v2008, -0.4999988
        %v2010 = vmul.f32 %v2005, %v2009
        %v2011 = vadd.f32 1.0, %v2010
        %v2012 = vmul.f32 %v2003, %v2003
        %v2013 = vmul.f32 %v2012, -0.00019511016
        %v2014 = vadd.f32 %v2013, 0.008332121
        %v2015 = vmul.f32 %v2012, %v2014
        %v2016 = vadd.f32 %v2015, -0.16666654
        %v2017 = vmul.f32 %v2012, %v2016
        %v2018 = vadd.f32 %v2017, 1.0
        %v2019 = vmul.f32 %v2018, %v2003
        %vm2020 = vweird.f32 %v321
        %v2021 = vadd.s32 %v2004, 3
        %v2022 = vand.u32 %v2021, 3
        %vm2023 = vcmp.lt.s32.totalorder %v2022, 2
        %vm2024 = vcmp.eq.s32.totalorder %v2022, 0
        %v2025 = vxor.u32 %v2019, 2147483648
        %v2026 = vsel %vm2024, %v2011, %v2025
        %vm2027 = vcmp.eq.s32.totalorder %v2022, 2
        %v2028 = vxor.u32 %v2011, 2147483648
        %v2029 = vsel %vm2027, %v2028, %v2019
        %v2030 = vsel %vm2023, %v2026, %v2029
        %v2031 = vsel %vm2020, nan, %v2030
        %v2032 = vand.u32 2147483647, %v322
        %vm2033 = vcmp.le.f32.partialorder %v2032, 0.7853982
        %vm2034 = vcmp.lt.s32.totalorder %v322, 0
        %v2035 = vand.u32 %v322, 2139095040
        %v2036 = vshrl.u32 %v2035, 23
        %v2037 = vsub.s32 %v2036, 127
        %v2038 = vand.u32 2147483647, %v322
        %v2039 = vand.u32 %v2038, 8388607
        %v2040 = vor.u32 %v2039, 8388608
        %v2041 = vsub.s32 0, %v2040
        %v2042 = vadd.s32 %v2037, 1
        %vm2043 = vcmp.gt.s32.totalorder %v2042, 0
        %v2044 = vsel %vm2043, %v2042, 0
        %v2045 = vshrl.u32 %v2044, 5
        %v2046 = vand.u32 %v2044, 31
        %v2047 = vsub.s32 32, %v2046
        %v2048 = vshrl.u32 683565275, %v2047
        %v2049 = vshll.u32 683565275, %v2046
        %v2050 = vshrl.u32 2475754826, %v2047
        %v2051 = vor.u32 %v2049, %v2050
        %v2052 = vshll.u32 2475754826, %v2046
        %v2053 = vshrl.u32 2131351028, %v2047
        %v2054 = vor.u32 %v2052, %v2053
        %v2055 = vshll.u32 2131351028, %v2046
        %v2056 = vshrl.u32 2102212464, %v2047
        %v2057 = vor.u32 %v2055, %v2056
        %v2058 = vshll.u32 2102212464, %v2046
        %v2059 = vshrl.u32 920167782, %v2047
        %v2060 = vor.u32 %v2058, %v2059
        %v2061 = vshll.u32 920167782, %v2046
        %v2062 = vshrl.u32 1326507024, %v2047
        %v2063 = vor.u32 %v2061, %v2062
        %vm2064 = vcmp.lt.s32.totalorder %v2045, 1
        %vm2065 = vcmp.lt.s32.totalorder %v2045, 2
        %vm2066 = vcmp.lt.s32.totalorder %v2045, 3
        %vm2067 = vcmp.lt.s32.totalorder %v2045, 4
        %v2068 = vsel %vm2064, %v2048, %v2051
        %v2069 = vsel %vm2067, %v2057, 2102212464
        %v2070 = vsel %vm2066, %v2054, %v2069
        %v2071 = vsel %vm2065, %v2068, %v2070
        %v2072 = vsel %vm2064, %v2051, %v2054
        %v2073 = vsel %vm2067, %v2060, 920167782
        %v2074 = vsel %vm2066, %v2057, %v2073
        %v2075 = vsel %vm2065, %v2072, %v2074
        %v2076 = vsel %vm2064, %v2054, %v2057
        %v2077 = vsel %vm2067, %v2063, 1326507024
        %v2078 = vsel %vm2066, %v2060, %v2077
        %v2079 = vsel %vm2065, %v2076, %v2078
        %v2080 = vshll.u32 %v2040, 8
        %v2081 = vand.u32 %v2080, 65535
        %v2082 = vshrl.u32 %v2080, 16
        %v2083 = vand.u32 %v2079, 65535
        %v2084 = vshrl.u32 %v2079, 16
        %v2085 = vmul.u32 %v2081, %v2083
        %v2086 = vmul.u32 %v2081, %v2084
        %v2087 = vmul.u32 %v2082, %v2083
        %v2088 = vmul.u32 %v2082, %v2084
        %v2089 = vshll.u32 %v2086, 16
        %v2090 = vshrl.u32 %v2086, 16
        %v2091 = vshll.u32 %v2087, 16
        %v2092 = vshrl.u32 %v2087, 16
        %vm2093 = vc.u32 %v2085, %v2089
        %v2094 = vsel %vm2093, 1, 0
        %v2095 = vadd.s32 %v2085, %v2089
        %v2096 = vadd.s32 %v2088, %v2094
        %vm2097 = vc.u32 %v2095, %v2091
        %v2098 = vsel %vm2097, 1, 0
        %v2099 = vadd.s32 %v2095, %v2091
        %v2100 = vadd.s32 %v2096, %v2098
        %v2101 = vadd.s32 %v2100, %v2090
        %v2102 = vadd.s32 %v2101, %v2092
        %v2103 = vand.u32 %v2080, 65535
        %v2104 = vshrl.u32 %v2080, 16
        %v2105 = vand.u32 %v2075, 65535
        %v2106 = vshrl.u32 %v2075, 16
        %v2107 = vmul.u32 %v2103, %v2105
        %v2108 = vmul.u32 %v2103, %v2106
        %v2109 = vmul.u32 %v2104, %v2105
        %v2110 = vmul.u32 %v2104, %v2106
        %v2111 = vshll.u32 %v2108, 16
        %v2112 = vshrl.u32 %v2108, 16
        %v2113 = vshll.u32 %v2109, 16
        %v2114 = vshrl.u32 %v2109, 16
        %vm2115 = vc.u32 %v2107, %v2111
        %v2116 = vsel %vm2115, 1, 0
        %v2117 = vadd.s32 %v2107, %v2111
        %v2118 = vadd.s32 %v2110, %v2116
        %vm2119 = vc.u32 %v2117, %v2113
        %v2120 = vsel %vm2119, 1, 0
        %v2121 = vadd.s32 %v2117, %v2113
        %v2122 = vadd.s32 %v2118, %v2120
        %v2123 = vadd.s32 %v2122, %v2112
        %v2124 = vadd.s32 %v2123, %v2114
        %v2125 = vmul.u32 %v2080, %v2071
        %v2126 = vadd.s32 %v2102, %v2121
        %vm2127 = vc.u32 %v2102, %v2121
        %v2128 = vadd.s32 %v2124, 1
        %v2129 = vsel %vm2127, %v2128, %v2124
        %v2130 = vadd.s32 %v2125, %v2129
        %v2131 = vadd.s32 %v2130, 536870912
        %v2132 = vshrl.u32 %v2131, 30
        %v2133 = vshll.u32 %v2132, 30
        %v2134 = vsub.s32 %v2130, %v2133
        %vm2135 = vcmp.lt.s32.totalorder %v2134, 0
        %v2136 = vsub.s32 0, %v2134
        %v2137 = vsel %vm2135, %v2136, %v2134
        %v2138 = vclz %v2137
        %v2139 = vsub.s32 %v2138, 2
        %vm2140 = vcmp.gt.s32.totalorder 0, %v2139
        %v2141 = vsel %vm2140, 0, %v2139
        %v2142 = vsub.s32 32, %v2141
        %v2143 = vshll.u32 %v2134, %v2141
        %v2144 = vshrl.u32 %v2126, %v2142
        %v2145 = vor.u32 %v2143, %v2144
        %v2146 = vsub.s32 4294967266, %v2141
        %v2147 = vadd.s32 %v2146, 127
        %v2148 = vshll.u32 %v2147, 23
        %v2149 = vor.u32 4788187, %v2148
        %v2150 = vand.u32 2147483647, %v2149
        %v2152 = vcvt.s32.f32 %v2145
        %v2153 = vmul.f32 %v2152, %v2150
        %v2154 = vxor.u32 %v2153, 2147483648
        %v2155 = vsel %vm2034, %v2154, %v2153
        %v2156 = vsub.s32 4, %v2132
        %v2157 = vsel %vm2034, %v2156, %v2132
        %v2158 = vsel %vm2033, %v322, %v2155
        %v2159 = vsel %vm2033, 0, %v2157
        %v2160 = vmul.f32 %v2158, %v2158
        %v2161 = vmul.f32 %v2160, -0.001358992
        %v2162 = vadd.f32 %v2161, 0.041655596
        %v2163 = vmul.f32 %v2160, %v2162
        %v2164 = vadd.f32 %v2163, -0.4999988
        %v2165 = vmul.f32 %v2160, %v2164
        %v2166 = vadd.f32 1.0, %v2165
        %v2167 = vmul.f32 %v2158, %v2158
        %v2168 = vmul.f32 %v2167, -0.00019511016
        %v2169 = vadd.f32 %v2168, 0.008332121
        %v2170 = vmul.f32 %v2167, %v2169
        %v2171 = vadd.f32 %v2170, -0.16666654
        %v2172 = vmul.f32 %v2167, %v2171
        %v2173 = vadd.f32 %v2172, 1.0
        %v2174 = vmul.f32 %v2173, %v2158
        %vm2175 = vweird.f32 %v322
        %v2176 = vadd.s32 %v2159, 3
        %v2177 = vand.u32 %v2176, 3
        %vm2178 = vcmp.lt.s32.totalorder %v2177, 2
        %vm2179 = vcmp.eq.s32.totalorder %v2177, 0
        %v2180 = vxor.u32 %v2174, 2147483648
        %v2181 = vsel %vm2179, %v2166, %v2180
        %vm2182 = vcmp.eq.s32.totalorder %v2177, 2
        %v2183 = vxor.u32 %v2166, 2147483648
        %v2184 = vsel %vm2182, %v2183, %v2174
        %v2185 = vsel %vm2178, %v2181, %v2184
        %v2186 = vsel %vm2175, nan, %v2185
        %v2187 = vand.u32 2147483647, %v323
        %vm2188 = vcmp.le.f32.partialorder %v2187, 0.7853982
        %vm2189 = vcmp.lt.s32.totalorder %v323, 0
        %v2190 = vand.u32 %v323, 2139095040
        %v2191 = vshrl.u32 %v2190, 23
        %v2192 = vsub.s32 %v2191, 127
        %v2193 = vand.u32 2147483647, %v323
        %v2194 = vand.u32 %v2193, 8388607
        %v2195 = vor.u32 %v2194, 8388608
        %v2196 = vsub.s32 0, %v2195
        %v2197 = vadd.s32 %v2192, 1
        %vm2198 = vcmp.gt.s32.totalorder %v2197, 0
        %v2199 = vsel %vm2198, %v2197, 0
        %v2200 = vshrl.u32 %v2199, 5
        %v2201 = vand.u32 %v2199, 31
        %v2202 = vsub.s32 32, %v2201
        %v2203 = vshrl.u32 683565275, %v2202
        %v2204 = vshll.u32 683565275, %v2201
        %v2205 = vshrl.u32 2475754826, %v2202
        %v2206 = vor.u32 %v2204, %v2205
        %v2207 = vshll.u32 2475754826, %v2201
        %v2208 = vshrl.u32 2131351028, %v2202
        %v2209 = vor.u32 %v2207, %v2208
        %v2210 = vshll.u32 2131351028, %v2201
        %v2211 = vshrl.u32 2102212464, %v2202
        %v2212 = vor.u32 %v2210, %v2211
        %v2213 = vshll.u32 2102212464, %v2201
        %v2214 = vshrl.u32 920167782, %v2202
        %v2215 = vor.u32 %v2213, %v2214
        %v2216 = vshll.u32 920167782, %v2201
        %v2217 = vshrl.u32 1326507024, %v2202
        %v2218 = vor.u32 %v2216, %v2217
        %vm2219 = vcmp.lt.s32.totalorder %v2200, 1
        %vm2220 = vcmp.lt.s32.totalorder %v2200, 2
        %vm2221 = vcmp.lt.s32.totalorder %v2200, 3
        %vm2222 = vcmp.lt.s32.totalorder %v2200, 4
        %v2223 = vsel %vm2219, %v2203, %v2206
        %v2224 = vsel %vm2222, %v2212, 2102212464
        %v2225 = vsel %vm2221, %v2209, %v2224
        %v2226 = vsel %vm2220, %v2223, %v2225
        %v2227 = vsel %vm2219, %v2206, %v2209
        %v2228 = vsel %vm2222, %v2215, 920167782
        %v2229 = vsel %vm2221, %v2212, %v2228
        %v2230 = vsel %vm2220, %v2227, %v2229
        %v2231 = vsel %vm2219, %v2209, %v2212
        %v2232 = vsel %vm2222, %v2218, 1326507024
        %v2233 = vsel %vm2221, %v2215, %v2232
        %v2234 = vsel %vm2220, %v2231, %v2233
        %v2235 = vshll.u32 %v2195, 8
        %v2236 = vand.u32 %v2235, 65535
        %v2237 = vshrl.u32 %v2235, 16
        %v2238 = vand.u32 %v2234, 65535
        %v2239 = vshrl.u32 %v2234, 16
        %v2240 = vmul.u32 %v2236, %v2238
        %v2241 = vmul.u32 %v2236, %v2239
        %v2242 = vmul.u32 %v2237, %v2238
        %v2243 = vmul.u32 %v2237, %v2239
        %v2244 = vshll.u32 %v2241, 16
        %v2245 = vshrl.u32 %v2241, 16
        %v2246 = vshll.u32 %v2242, 16
        %v2247 = vshrl.u32 %v2242, 16
        %vm2248 = vc.u32 %v2240, %v2244
        %v2249 = vsel %vm2248, 1, 0
        %v2250 = vadd.s32 %v2240, %v2244
        %v2251 = vadd.s32 %v2243, %v2249
        %vm2252 = vc.u32 %v2250, %v2246
        %v2253 = vsel %vm2252, 1, 0
        %v2254 = vadd.s32 %v2250, %v2246
        %v2255 = vadd.s32 %v2251, %v2253
        %v2256 = vadd.s32 %v2255, %v2245
        %v2257 = vadd.s32 %v2256, %v2247
        %v2258 = vand.u32 %v2235, 65535
        %v2259 = vshrl.u32 %v2235, 16
        %v2260 = vand.u32 %v2230, 65535
        %v2261 = vshrl.u32 %v2230, 16
        %v2262 = vmul.u32 %v2258, %v2260
        %v2263 = vmul.u32 %v2258, %v2261
        %v2264 = vmul.u32 %v2259, %v2260
        %v2265 = vmul.u32 %v2259, %v2261
        %v2266 = vshll.u32 %v2263, 16
        %v2267 = vshrl.u32 %v2263, 16
        %v2268 = vshll.u32 %v2264, 16
        %v2269 = vshrl.u32 %v2264, 16
        %vm2270 = vc.u32 %v2262, %v2266
        %v2271 = vsel %vm2270, 1, 0
        %v2272 = vadd.s32 %v2262, %v2266
        %v2273 = vadd.s32 %v2265, %v2271
        %vm2274 = vc.u32 %v2272, %v2268
        %v2275 = vsel %vm2274, 1, 0
        %v2276 = vadd.s32 %v2272, %v2268
        %v2277 = vadd.s32 %v2273, %v2275
        %v2278 = vadd.s32 %v2277, %v2267
        %v2279 = vadd.s32 %v2278, %v2269
        %v2280 = vmul.u32 %v2235, %v2226
        %v2281 = vadd.s32 %v2257, %v2276
        %vm2282 = vc.u32 %v2257, %v2276
        %v2283 = vadd.s32 %v2279, 1
        %v2284 = vsel %vm2282, %v2283, %v2279
        %v2285 = vadd.s32 %v2280, %v2284
        %v2286 = vadd.s32 %v2285, 536870912
        %v2287 = vshrl.u32 %v2286, 30
        %v2288 = vshll.u32 %v2287, 30
        %v2289 = vsub.s32 %v2285, %v2288
        %vm2290 = vcmp.lt.s32.totalorder %v2289, 0
        %v2291 = vsub.s32 0, %v2289
        %v2292 = vsel %vm2290, %v2291, %v2289
        %v2293 = vclz %v2292
        %v2294 = vsub.s32 %v2293, 2
        %vm2295 = vcmp.gt.s32.totalorder 0, %v2294
        %v2296 = vsel %vm2295, 0, %v2294
        %v2297 = vsub.s32 32, %v2296
        %v2298 = vshll.u32 %v2289, %v2296
        %v2299 = vshrl.u32 %v2281, %v2297
        %v2300 = vor.u32 %v2298, %v2299
        %v2301 = vsub.s32 4294967266, %v2296
        %v2302 = vadd.s32 %v2301, 127
        %v2303 = vshll.u32 %v2302, 23
        %v2304 = vor.u32 4788187, %v2303
        %v2305 = vand.u32 2147483647, %v2304
        %v2307 = vcvt.s32.f32 %v2300
        %v2308 = vmul.f32 %v2307, %v2305
        %v2309 = vxor.u32 %v2308, 2147483648
        %v2310 = vsel %vm2189, %v2309, %v2308
        %v2311 = vsub.s32 4, %v2287
        %v2312 = vsel %vm2189, %v2311, %v2287
        %v2313 = vsel %vm2188, %v323, %v2310
        %v2314 = vsel %vm2188, 0, %v2312
        %v2315 = vmul.f32 %v2313, %v2313
        %v2316 = vmul.f32 %v2315, -0.001358992
        %v2317 = vadd.f32 %v2316, 0.041655596
        %v2318 = vmul.f32 %v2315, %v2317
        %v2319 = vadd.f32 %v2318, -0.4999988
        %v2320 = vmul.f32 %v2315, %v2319
        %v2321 = vadd.f32 1.0, %v2320
        %v2322 = vmul.f32 %v2313, %v2313
        %v2323 = vmul.f32 %v2322, -0.00019511016
        %v2324 = vadd.f32 %v2323, 0.008332121
        %v2325 = vmul.f32 %v2322, %v2324
        %v2326 = vadd.f32 %v2325, -0.16666654
        %v2327 = vmul.f32 %v2322, %v2326
        %v2328 = vadd.f32 %v2327, 1.0
        %v2329 = vmul.f32 %v2328, %v2313
        %vm2330 = vweird.f32 %v323
        %v2331 = vadd.s32 %v2314, 3
        %v2332 = vand.u32 %v2331, 3
        %vm2333 = vcmp.lt.s32.totalorder %v2332, 2
        %vm2334 = vcmp.eq.s32.totalorder %v2332, 0
        %v2335 = vxor.u32 %v2329, 2147483648
        %v2336 = vsel %vm2334, %v2321, %v2335
        %vm2337 = vcmp.eq.s32.totalorder %v2332, 2
        %v2338 = vxor.u32 %v2321, 2147483648
        %v2339 = vsel %vm2337, %v2338, %v2329
        %v2340 = vsel %vm2333, %v2336, %v2339
        %v2341 = vsel %vm2330, nan, %v2340
        %v2342 = vand.u32 2147483647, %v324
        %vm2343 = vcmp.le.f32.partialorder %v2342, 0.7853982
        %vm2344 = vcmp.lt.s32.totalorder %v324, 0
        %v2345 = vand.u32 %v324, 2139095040
        %v2346 = vshrl.u32 %v2345, 23
        %v2347 = vsub.s32 %v2346, 127
        %v2348 = vand.u32 2147483647, %v324
        %v2349 = vand.u32 %v2348, 8388607
        %v2350 = vor.u32 %v2349, 8388608
        %v2351 = vsub.s32 0, %v2350
        %v2352 = vadd.s32 %v2347, 1
        %vm2353 = vcmp.gt.s32.totalorder %v2352, 0
        %v2354 = vsel %vm2353, %v2352, 0
        %v2355 = vshrl.u32 %v2354, 5
        %v2356 = vand.u32 %v2354, 31
        %v2357 = vsub.s32 32, %v2356
        %v2358 = vshrl.u32 683565275, %v2357
        %v2359 = vshll.u32 683565275, %v2356
        %v2360 = vshrl.u32 2475754826, %v2357
        %v2361 = vor.u32 %v2359, %v2360
        %v2362 = vshll.u32 2475754826, %v2356
        %v2363 = vshrl.u32 2131351028, %v2357
        %v2364 = vor.u32 %v2362, %v2363
        %v2365 = vshll.u32 2131351028, %v2356
        %v2366 = vshrl.u32 2102212464, %v2357
        %v2367 = vor.u32 %v2365, %v2366
        %v2368 = vshll.u32 2102212464, %v2356
        %v2369 = vshrl.u32 920167782, %v2357
        %v2370 = vor.u32 %v2368, %v2369
        %v2371 = vshll.u32 920167782, %v2356
        %v2372 = vshrl.u32 1326507024, %v2357
        %v2373 = vor.u32 %v2371, %v2372
        %vm2374 = vcmp.lt.s32.totalorder %v2355, 1
        %vm2375 = vcmp.lt.s32.totalorder %v2355, 2
        %vm2376 = vcmp.lt.s32.totalorder %v2355, 3
        %vm2377 = vcmp.lt.s32.totalorder %v2355, 4
        %v2378 = vsel %vm2374, %v2358, %v2361
        %v2379 = vsel %vm2377, %v2367, 2102212464
        %v2380 = vsel %vm2376, %v2364, %v2379
        %v2381 = vsel %vm2375, %v2378, %v2380
        %v2382 = vsel %vm2374, %v2361, %v2364
        %v2383 = vsel %vm2377, %v2370, 920167782
        %v2384 = vsel %vm2376, %v2367, %v2383
        %v2385 = vsel %vm2375, %v2382, %v2384
        %v2386 = vsel %vm2374, %v2364, %v2367
        %v2387 = vsel %vm2377, %v2373, 1326507024
        %v2388 = vsel %vm2376, %v2370, %v2387
        %v2389 = vsel %vm2375, %v2386, %v2388
        %v2390 = vshll.u32 %v2350, 8
        %v2391 = vand.u32 %v2390, 65535
        %v2392 = vshrl.u32 %v2390, 16
        %v2393 = vand.u32 %v2389, 65535
        %v2394 = vshrl.u32 %v2389, 16
        %v2395 = vmul.u32 %v2391, %v2393
        %v2396 = vmul.u32 %v2391, %v2394
        %v2397 = vmul.u32 %v2392, %v2393
        %v2398 = vmul.u32 %v2392, %v2394
        %v2399 = vshll.u32 %v2396, 16
        %v2400 = vshrl.u32 %v2396, 16
        %v2401 = vshll.u32 %v2397, 16
        %v2402 = vshrl.u32 %v2397, 16
        %vm2403 = vc.u32 %v2395, %v2399
        %v2404 = vsel %vm2403, 1, 0
        %v2405 = vadd.s32 %v2395, %v2399
        %v2406 = vadd.s32 %v2398, %v2404
        %vm2407 = vc.u32 %v2405, %v2401
        %v2408 = vsel %vm2407, 1, 0
        %v2409 = vadd.s32 %v2405, %v2401
        %v2410 = vadd.s32 %v2406, %v2408
        %v2411 = vadd.s32 %v2410, %v2400
        %v2412 = vadd.s32 %v2411, %v2402
        %v2413 = vand.u32 %v2390, 65535
        %v2414 = vshrl.u32 %v2390, 16
        %v2415 = vand.u32 %v2385, 65535
        %v2416 = vshrl.u32 %v2385, 16
        %v2417 = vmul.u32 %v2413, %v2415
        %v2418 = vmul.u32 %v2413, %v2416
        %v2419 = vmul.u32 %v2414, %v2415
        %v2420 = vmul.u32 %v2414, %v2416
        %v2421 = vshll.u32 %v2418, 16
        %v2422 = vshrl.u32 %v2418, 16
        %v2423 = vshll.u32 %v2419, 16
        %v2424 = vshrl.u32 %v2419, 16
        %vm2425 = vc.u32 %v2417, %v2421
        %v2426 = vsel %vm2425, 1, 0
        %v2427 = vadd.s32 %v2417, %v2421
        %v2428 = vadd.s32 %v2420, %v2426
        %vm2429 = vc.u32 %v2427, %v2423
        %v2430 = vsel %vm2429, 1, 0
        %v2431 = vadd.s32 %v2427, %v2423
        %v2432 = vadd.s32 %v2428, %v2430
        %v2433 = vadd.s32 %v2432, %v2422
        %v2434 = vadd.s32 %v2433, %v2424
        %v2435 = vmul.u32 %v2390, %v2381
        %v2436 = vadd.s32 %v2412, %v2431
        %vm2437 = vc.u32 %v2412, %v2431
        %v2438 = vadd.s32 %v2434, 1
        %v2439 = vsel %vm2437, %v2438, %v2434
        %v2440 = vadd.s32 %v2435, %v2439
        %v2441 = vadd.s32 %v2440, 536870912
        %v2442 = vshrl.u32 %v2441, 30
        %v2443 = vshll.u32 %v2442, 30
        %v2444 = vsub.s32 %v2440, %v2443
        %vm2445 = vcmp.lt.s32.totalorder %v2444, 0
        %v2446 = vsub.s32 0, %v2444
        %v2447 = vsel %vm2445, %v2446, %v2444
        %v2448 = vclz %v2447
        %v2449 = vsub.s32 %v2448, 2
        %vm2450 = vcmp.gt.s32.totalorder 0, %v2449
        %v2451 = vsel %vm2450, 0, %v2449
        %v2452 = vsub.s32 32, %v2451
        %v2453 = vshll.u32 %v2444, %v2451
        %v2454 = vshrl.u32 %v2436, %v2452
        %v2455 = vor.u32 %v2453, %v2454
        %v2456 = vsub.s32 4294967266, %v2451
        %v2457 = vadd.s32 %v2456, 127
        %v2458 = vshll.u32 %v2457, 23
        %v2459 = vor.u32 4788187, %v2458
        %v2460 = vand.u32 2147483647, %v2459
        %v2462 = vcvt.s32.f32 %v2455
        %v2463 = vmul.f32 %v2462, %v2460
        %v2464 = vxor.u32 %v2463, 2147483648
        %v2465 = vsel %vm2344, %v2464, %v2463
        %v2466 = vsub.s32 4, %v2442
        %v2467 = vsel %vm2344, %v2466, %v2442
        %v2468 = vsel %vm2343, %v324, %v2465
        %v2469 = vsel %vm2343, 0, %v2467
        %v2470 = vmul.f32 %v2468, %v2468
        %v2471 = vmul.f32 %v2470, -0.001358992
        %v2472 = vadd.f32 %v2471, 0.041655596
        %v2473 = vmul.f32 %v2470, %v2472
        %v2474 = vadd.f32 %v2473, -0.4999988
        %v2475 = vmul.f32 %v2470, %v2474
        %v2476 = vadd.f32 1.0, %v2475
        %v2477 = vmul.f32 %v2468, %v2468
        %v2478 = vmul.f32 %v2477, -0.00019511016
        %v2479 = vadd.f32 %v2478, 0.008332121
        %v2480 = vmul.f32 %v2477, %v2479
        %v2481 = vadd.f32 %v2480, -0.16666654
        %v2482 = vmul.f32 %v2477, %v2481
        %v2483 = vadd.f32 %v2482, 1.0
        %v2484 = vmul.f32 %v2483, %v2468
        %vm2485 = vweird.f32 %v324
        %v2486 = vadd.s32 %v2469, 3
        %v2487 = vand.u32 %v2486, 3
        %vm2488 = vcmp.lt.s32.totalorder %v2487, 2
        %vm2489 = vcmp.eq.s32.totalorder %v2487, 0
        %v2490 = vxor.u32 %v2484, 2147483648
        %v2491 = vsel %vm2489, %v2476, %v2490
        %vm2492 = vcmp.eq.s32.totalorder %v2487, 2
        %v2493 = vxor.u32 %v2476, 2147483648
        %v2494 = vsel %vm2492, %v2493, %v2484
        %v2495 = vsel %vm2488, %v2491, %v2494
        %v2496 = vsel %vm2485, nan, %v2495
        %v2497 = vand.u32 2147483647, %v325
        %vm2498 = vcmp.le.f32.partialorder %v2497, 0.7853982
        %vm2499 = vcmp.lt.s32.totalorder %v325, 0
        %v2500 = vand.u32 %v325, 2139095040
        %v2501 = vshrl.u32 %v2500, 23
        %v2502 = vsub.s32 %v2501, 127
        %v2503 = vand.u32 2147483647, %v325
        %v2504 = vand.u32 %v2503, 8388607
        %v2505 = vor.u32 %v2504, 8388608
        %v2506 = vsub.s32 0, %v2505
        %v2507 = vadd.s32 %v2502, 1
        %vm2508 = vcmp.gt.s32.totalorder %v2507, 0
        %v2509 = vsel %vm2508, %v2507, 0
        %v2510 = vshrl.u32 %v2509, 5
        %v2511 = vand.u32 %v2509, 31
        %v2512 = vsub.s32 32, %v2511
        %v2513 = vshrl.u32 683565275, %v2512
        %v2514 = vshll.u32 683565275, %v2511
        %v2515 = vshrl.u32 2475754826, %v2512
        %v2516 = vor.u32 %v2514, %v2515
        %v2517 = vshll.u32 2475754826, %v2511
        %v2518 = vshrl.u32 2131351028, %v2512
        %v2519 = vor.u32 %v2517, %v2518
        %v2520 = vshll.u32 2131351028, %v2511
        %v2521 = vshrl.u32 2102212464, %v2512
        %v2522 = vor.u32 %v2520, %v2521
        %v2523 = vshll.u32 2102212464, %v2511
        %v2524 = vshrl.u32 920167782, %v2512
        %v2525 = vor.u32 %v2523, %v2524
        %v2526 = vshll.u32 920167782, %v2511
        %v2527 = vshrl.u32 1326507024, %v2512
        %v2528 = vor.u32 %v2526, %v2527
        %vm2529 = vcmp.lt.s32.totalorder %v2510, 1
        %vm2530 = vcmp.lt.s32.totalorder %v2510, 2
        %vm2531 = vcmp.lt.s32.totalorder %v2510, 3
        %vm2532 = vcmp.lt.s32.totalorder %v2510, 4
        %v2533 = vsel %vm2529, %v2513, %v2516
        %v2534 = vsel %vm2532, %v2522, 2102212464
        %v2535 = vsel %vm2531, %v2519, %v2534
        %v2536 = vsel %vm2530, %v2533, %v2535
        %v2537 = vsel %vm2529, %v2516, %v2519
        %v2538 = vsel %vm2532, %v2525, 920167782
        %v2539 = vsel %vm2531, %v2522, %v2538
        %v2540 = vsel %vm2530, %v2537, %v2539
        %v2541 = vsel %vm2529, %v2519, %v2522
        %v2542 = vsel %vm2532, %v2528, 1326507024
        %v2543 = vsel %vm2531, %v2525, %v2542
        %v2544 = vsel %vm2530, %v2541, %v2543
        %v2545 = vshll.u32 %v2505, 8
        %v2546 = vand.u32 %v2545, 65535
        %v2547 = vshrl.u32 %v2545, 16
        %v2548 = vand.u32 %v2544, 65535
        %v2549 = vshrl.u32 %v2544, 16
        %v2550 = vmul.u32 %v2546, %v2548
        %v2551 = vmul.u32 %v2546, %v2549
        %v2552 = vmul.u32 %v2547, %v2548
        %v2553 = vmul.u32 %v2547, %v2549
        %v2554 = vshll.u32 %v2551, 16
        %v2555 = vshrl.u32 %v2551, 16
        %v2556 = vshll.u32 %v2552, 16
        %v2557 = vshrl.u32 %v2552, 16
        %vm2558 = vc.u32 %v2550, %v2554
        %v2559 = vsel %vm2558, 1, 0
        %v2560 = vadd.s32 %v2550, %v2554
        %v2561 = vadd.s32 %v2553, %v2559
        %vm2562 = vc.u32 %v2560, %v2556
        %v2563 = vsel %vm2562, 1, 0
        %v2564 = vadd.s32 %v2560, %v2556
        %v2565 = vadd.s32 %v2561, %v2563
        %v2566 = vadd.s32 %v2565, %v2555
        %v2567 = vadd.s32 %v2566, %v2557
        %v2568 = vand.u32 %v2545, 65535
        %v2569 = vshrl.u32 %v2545, 16
        %v2570 = vand.u32 %v2540, 65535
        %v2571 = vshrl.u32 %v2540, 16
        %v2572 = vmul.u32 %v2568, %v2570
        %v2573 = vmul.u32 %v2568, %v2571
        %v2574 = vmul.u32 %v2569, %v2570
        %v2575 = vmul.u32 %v2569, %v2571
        %v2576 = vshll.u32 %v2573, 16
        %v2577 = vshrl.u32 %v2573, 16
        %v2578 = vshll.u32 %v2574, 16
        %v2579 = vshrl.u32 %v2574, 16
        %vm2580 = vc.u32 %v2572, %v2576
        %v2581 = vsel %vm2580, 1, 0
        %v2582 = vadd.s32 %v2572, %v2576
        %v2583 = vadd.s32 %v2575, %v2581
        %vm2584 = vc.u32 %v2582, %v2578
        %v2585 = vsel %vm2584, 1, 0
        %v2586 = vadd.s32 %v2582, %v2578
        %v2587 = vadd.s32 %v2583, %v2585
        %v2588 = vadd.s32 %v2587, %v2577
        %v2589 = vadd.s32 %v2588, %v2579
        %v2590 = vmul.u32 %v2545, %v2536
        %v2591 = vadd.s32 %v2567, %v2586
        %vm2592 = vc.u32 %v2567, %v2586
        %v2593 = vadd.s32 %v2589, 1
        %v2594 = vsel %vm2592, %v2593, %v2589
        %v2595 = vadd.s32 %v2590, %v2594
        %v2596 = vadd.s32 %v2595, 536870912
        %v2597 = vshrl.u32 %v2596, 30
        %v2598 = vshll.u32 %v2597, 30
        %v2599 = vsub.s32 %v2595, %v2598
        %vm2600 = vcmp.lt.s32.totalorder %v2599, 0
        %v2601 = vsub.s32 0, %v2599
        %v2602 = vsel %vm2600, %v2601, %v2599
        %v2603 = vclz %v2602
        %v2604 = vsub.s32 %v2603, 2
        %vm2605 = vcmp.gt.s32.totalorder 0, %v2604
        %v2606 = vsel %vm2605, 0, %v2604
        %v2607 = vsub.s32 32, %v2606
        %v2608 = vshll.u32 %v2599, %v2606
        %v2609 = vshrl.u32 %v2591, %v2607
        %v2610 = vor.u32 %v2608, %v2609
        %v2611 = vsub.s32 4294967266, %v2606
        %v2612 = vadd.s32 %v2611, 127
        %v2613 = vshll.u32 %v2612, 23
        %v2614 = vor.u32 4788187, %v2613
        %v2615 = vand.u32 2147483647, %v2614
        %v2617 = vcvt.s32.f32 %v2610
        %v2618 = vmul.f32 %v2617, %v2615
        %v2619 = vxor.u32 %v2618, 2147483648
        %v2620 = vsel %vm2499, %v2619, %v2618
        %v2621 = vsub.s32 4, %v2597
        %v2622 = vsel %vm2499, %v2621, %v2597
        %v2623 = vsel %vm2498, %v325, %v2620
        %v2624 = vsel %vm2498, 0, %v2622
        %v2625 = vmul.f32 %v2623, %v2623
        %v2626 = vmul.f32 %v2625, -0.001358992
        %v2627 = vadd.f32 %v2626, 0.041655596
        %v2628 = vmul.f32 %v2625, %v2627
        %v2629 = vadd.f32 %v2628, -0.4999988
        %v2630 = vmul.f32 %v2625, %v2629
        %v2631 = vadd.f32 1.0, %v2630
        %v2632 = vmul.f32 %v2623, %v2623
        %v2633 = vmul.f32 %v2632, -0.00019511016
        %v2634 = vadd.f32 %v2633, 0.008332121
        %v2635 = vmul.f32 %v2632, %v2634
        %v2636 = vadd.f32 %v2635, -0.16666654
        %v2637 = vmul.f32 %v2632, %v2636
        %v2638 = vadd.f32 %v2637, 1.0
        %v2639 = vmul.f32 %v2638, %v2623
        %vm2640 = vweird.f32 %v325
        %v2641 = vadd.s32 %v2624, 3
        %v2642 = vand.u32 %v2641, 3
        %vm2643 = vcmp.lt.s32.totalorder %v2642, 2
        %vm2644 = vcmp.eq.s32.totalorder %v2642, 0
        %v2645 = vxor.u32 %v2639, 2147483648
        %v2646 = vsel %vm2644, %v2631, %v2645
        %vm2647 = vcmp.eq.s32.totalorder %v2642, 2
        %v2648 = vxor.u32 %v2631, 2147483648
        %v2649 = vsel %vm2647, %v2648, %v2639
        %v2650 = vsel %vm2643, %v2646, %v2649
        %v2651 = vsel %vm2640, nan, %v2650
        %v2652 = vand.u32 2147483647, %v326
        %vm2653 = vcmp.le.f32.partialorder %v2652, 0.7853982
        %vm2654 = vcmp.lt.s32.totalorder %v326, 0
        %v2655 = vand.u32 %v326, 2139095040
        %v2656 = vshrl.u32 %v2655, 23
        %v2657 = vsub.s32 %v2656, 127
        %v2658 = vand.u32 2147483647, %v326
        %v2659 = vand.u32 %v2658, 8388607
        %v2660 = vor.u32 %v2659, 8388608
        %v2661 = vsub.s32 0, %v2660
        %v2662 = vadd.s32 %v2657, 1
        %vm2663 = vcmp.gt.s32.totalorder %v2662, 0
        %v2664 = vsel %vm2663, %v2662, 0
        %v2665 = vshrl.u32 %v2664, 5
        %v2666 = vand.u32 %v2664, 31
        %v2667 = vsub.s32 32, %v2666
        %v2668 = vshrl.u32 683565275, %v2667
        %v2669 = vshll.u32 683565275, %v2666
        %v2670 = vshrl.u32 2475754826, %v2667
        %v2671 = vor.u32 %v2669, %v2670
        %v2672 = vshll.u32 2475754826, %v2666
        %v2673 = vshrl.u32 2131351028, %v2667
        %v2674 = vor.u32 %v2672, %v2673
        %v2675 = vshll.u32 2131351028, %v2666
        %v2676 = vshrl.u32 2102212464, %v2667
        %v2677 = vor.u32 %v2675, %v2676
        %v2678 = vshll.u32 2102212464, %v2666
        %v2679 = vshrl.u32 920167782, %v2667
        %v2680 = vor.u32 %v2678, %v2679
        %v2681 = vshll.u32 920167782, %v2666
        %v2682 = vshrl.u32 1326507024, %v2667
        %v2683 = vor.u32 %v2681, %v2682
        %vm2684 = vcmp.lt.s32.totalorder %v2665, 1
        %vm2685 = vcmp.lt.s32.totalorder %v2665, 2
        %vm2686 = vcmp.lt.s32.totalorder %v2665, 3
        %vm2687 = vcmp.lt.s32.totalorder %v2665, 4
        %v2688 = vsel %vm2684, %v2668, %v2671
        %v2689 = vsel %vm2687, %v2677, 2102212464
        %v2690 = vsel %vm2686, %v2674, %v2689
        %v2691 = vsel %vm2685, %v2688, %v2690
        %v2692 = vsel %vm2684, %v2671, %v2674
        %v2693 = vsel %vm2687, %v2680, 920167782
        %v2694 = vsel %vm2686, %v2677, %v2693
        %v2695 = vsel %vm2685, %v2692, %v2694
        %v2696 = vsel %vm2684, %v2674, %v2677
        %v2697 = vsel %vm2687, %v2683, 1326507024
        %v2698 = vsel %vm2686, %v2680, %v2697
        %v2699 = vsel %vm2685, %v2696, %v2698
        %v2700 = vshll.u32 %v2660, 8
        %v2701 = vand.u32 %v2700, 65535
        %v2702 = vshrl.u32 %v2700, 16
        %v2703 = vand.u32 %v2699, 65535
        %v2704 = vshrl.u32 %v2699, 16
        %v2705 = vmul.u32 %v2701, %v2703
        %v2706 = vmul.u32 %v2701, %v2704
        %v2707 = vmul.u32 %v2702, %v2703
        %v2708 = vmul.u32 %v2702, %v2704
        %v2709 = vshll.u32 %v2706, 16
        %v2710 = vshrl.u32 %v2706, 16
        %v2711 = vshll.u32 %v2707, 16
        %v2712 = vshrl.u32 %v2707, 16
        %vm2713 = vc.u32 %v2705, %v2709
        %v2714 = vsel %vm2713, 1, 0
        %v2715 = vadd.s32 %v2705, %v2709
        %v2716 = vadd.s32 %v2708, %v2714
        %vm2717 = vc.u32 %v2715, %v2711
        %v2718 = vsel %vm2717, 1, 0
        %v2719 = vadd.s32 %v2715, %v2711
        %v2720 = vadd.s32 %v2716, %v2718
        %v2721 = vadd.s32 %v2720, %v2710
        %v2722 = vadd.s32 %v2721, %v2712
        %v2723 = vand.u32 %v2700, 65535
        %v2724 = vshrl.u32 %v2700, 16
        %v2725 = vand.u32 %v2695, 65535
        %v2726 = vshrl.u32 %v2695, 16
        %v2727 = vmul.u32 %v2723, %v2725
        %v2728 = vmul.u32 %v2723, %v2726
        %v2729 = vmul.u32 %v2724, %v2725
        %v2730 = vmul.u32 %v2724, %v2726
        %v2731 = vshll.u32 %v2728, 16
        %v2732 = vshrl.u32 %v2728, 16
        %v2733 = vshll.u32 %v2729, 16
        %v2734 = vshrl.u32 %v2729, 16
        %vm2735 = vc.u32 %v2727, %v2731
        %v2736 = vsel %vm2735, 1, 0
        %v2737 = vadd.s32 %v2727, %v2731
        %v2738 = vadd.s32 %v2730, %v2736
        %vm2739 = vc.u32 %v2737, %v2733
        %v2740 = vsel %vm2739, 1, 0
        %v2741 = vadd.s32 %v2737, %v2733
        %v2742 = vadd.s32 %v2738, %v2740
        %v2743 = vadd.s32 %v2742, %v2732
        %v2744 = vadd.s32 %v2743, %v2734
        %v2745 = vmul.u32 %v2700, %v2691
        %v2746 = vadd.s32 %v2722, %v2741
        %vm2747 = vc.u32 %v2722, %v2741
        %v2748 = vadd.s32 %v2744, 1
        %v2749 = vsel %vm2747, %v2748, %v2744
        %v2750 = vadd.s32 %v2745, %v2749
        %v2751 = vadd.s32 %v2750, 536870912
        %v2752 = vshrl.u32 %v2751, 30
        %v2753 = vshll.u32 %v2752, 30
        %v2754 = vsub.s32 %v2750, %v2753
        %vm2755 = vcmp.lt.s32.totalorder %v2754, 0
        %v2756 = vsub.s32 0, %v2754
        %v2757 = vsel %vm2755, %v2756, %v2754
        %v2758 = vclz %v2757
        %v2759 = vsub.s32 %v2758, 2
        %vm2760 = vcmp.gt.s32.totalorder 0, %v2759
        %v2761 = vsel %vm2760, 0, %v2759
        %v2762 = vsub.s32 32, %v2761
        %v2763 = vshll.u32 %v2754, %v2761
        %v2764 = vshrl.u32 %v2746, %v2762
        %v2765 = vor.u32 %v2763, %v2764
        %v2766 = vsub.s32 4294967266, %v2761
        %v2767 = vadd.s32 %v2766, 127
        %v2768 = vshll.u32 %v2767, 23
        %v2769 = vor.u32 4788187, %v2768
        %v2770 = vand.u32 2147483647, %v2769
        %v2772 = vcvt.s32.f32 %v2765
        %v2773 = vmul.f32 %v2772, %v2770
        %v2774 = vxor.u32 %v2773, 2147483648
        %v2775 = vsel %vm2654, %v2774, %v2773
        %v2776 = vsub.s32 4, %v2752
        %v2777 = vsel %vm2654, %v2776, %v2752
        %v2778 = vsel %vm2653, %v326, %v2775
        %v2779 = vsel %vm2653, 0, %v2777
        %v2780 = vmul.f32 %v2778, %v2778
        %v2781 = vmul.f32 %v2780, -0.001358992
        %v2782 = vadd.f32 %v2781, 0.041655596
        %v2783 = vmul.f32 %v2780, %v2782
        %v2784 = vadd.f32 %v2783, -0.4999988
        %v2785 = vmul.f32 %v2780, %v2784
        %v2786 = vadd.f32 1.0, %v2785
        %v2787 = vmul.f32 %v2778, %v2778
        %v2788 = vmul.f32 %v2787, -0.00019511016
        %v2789 = vadd.f32 %v2788, 0.008332121
        %v2790 = vmul.f32 %v2787, %v2789
        %v2791 = vadd.f32 %v2790, -0.16666654
        %v2792 = vmul.f32 %v2787, %v2791
        %v2793 = vadd.f32 %v2792, 1.0
        %v2794 = vmul.f32 %v2793, %v2778
        %vm2795 = vweird.f32 %v326
        %v2796 = vadd.s32 %v2779, 3
        %v2797 = vand.u32 %v2796, 3
        %vm2798 = vcmp.lt.s32.totalorder %v2797, 2
        %vm2799 = vcmp.eq.s32.totalorder %v2797, 0
        %v2800 = vxor.u32 %v2794, 2147483648
        %v2801 = vsel %vm2799, %v2786, %v2800
        %vm2802 = vcmp.eq.s32.totalorder %v2797, 2
        %v2803 = vxor.u32 %v2786, 2147483648
        %v2804 = vsel %vm2802, %v2803, %v2794
        %v2805 = vsel %vm2798, %v2801, %v2804
        %v2806 = vsel %vm2795, nan, %v2805
        %2807 = vst [vmem:[%s207] sm:$0xff] %v481
        %2808 = vst [vmem:[%s207 + $0x8] sm:$0xff] %v636
        %2809 = vst [vmem:[%s207 + $0x10] sm:$0xff] %v791
        %2810 = vst [vmem:[%s207 + $0x18] sm:$0xff] %v946
        %2811 = vst [vmem:[%s207 + $0x20] sm:$0xff] %v1101
        %2812 = vst [vmem:[%s207 + $0x28] sm:$0xff] %v1256
        %2813 = vst [vmem:[%s207 + $0x30] sm:$0xff] %v1411
        %2814 = vst [vmem:[%s207 + $0x38] sm:$0xff] %v1566
        %2815 = vst [vmem:[%s207 + $0x40] sm:$0xff] %v1721
        %2816 = vst [vmem:[%s207 + $0x48] sm:$0xff] %v1876
        %2817 = vst [vmem:[%s207 + $0x50] sm:$0xff] %v2031
        %2818 = vst [vmem:[%s207 + $0x58] sm:$0xff] %v2186
        %2819 = vst [vmem:[%s207 + $0x60] sm:$0xff] %v2341
        %2820 = vst [vmem:[%s207 + $0x68] sm:$0xff] %v2496
        %2821 = vst [vmem:[%s207 + $0x70] sm:$0xff] %v2651
        %2822 = vst [vmem:[%s207 + $0x78] sm:$0xff] %v2806
        %s2823 = sand.u32 %s97, 1
        %s2824 = scalar_lea.sflag [#allocation4], %s2823
        %s2825 = sand.u32 %s97, 1
        %s2826 = smul.addr %s2825, 128
        %s2827 = scalar_lea.vmem [#allocation7], %s2826
        // Predicated region
        $region41: #{tpu_custom_call.1} parent=31 // pred_check
          %p2828 = pneg %p107
        $region42: #{tpu_custom_call.1} parent=31 // pred_check_branch
          %2830 = sbr.rel (%p2828) target = $region44
        $region43: #{tpu_custom_call.1} parent=31 // pred_region
          %s2831 = smul.u32 16, %s21
          %2833 = vsyncadd %s2824, 0
          %s2834 = smul.addr %s2831, 8
          %s2835 = scalar_lea.hbm %s3, %s2834
          %s2836 = sshll.u32 %s2827, 4
          %s2837 = int_to_ptr.vmem [resolvable:$true] %s2836
          %s2838 = sshll.u32 %s2835, 4
          %s2839 = int_to_ptr.hbm [resolvable:$true] %s2838
          %2844 = dma.vmem_to_hbm [thread:$0]  %s2837, 2048, %s2839, %s2824, 128, 128, 8
        $region44: #{tpu_custom_call.1} parent=31 // pred_fallthru
          _
      $region32: #{tpu_custom_call.1} parent=5 // pred_fallthru
        _
      %p2845 = scmp.le.s32.totalorder 2, %s16
      // Predicated region
      $region45: #{tpu_custom_call.1} parent=5 // pred_check
        %p2846 = pneg %p2845
      $region46: #{tpu_custom_call.1} parent=5 // pred_check_branch
        %2848 = sbr.rel (%p2846) target = $region48
      $region47: #{tpu_custom_call.1} parent=5 // pred_region
        %s2849 = ssub.s32 %s16, 2
        // Predicated region
        $region49: #{tpu_custom_call.1} parent=47 // pred_check
          %p2850 = pneg %p113
        $region50: #{tpu_custom_call.1} parent=47 // pred_check_branch
          %2852 = sbr.rel (%p2850) target = $region52
        $region51: #{tpu_custom_call.1} parent=47 // pred_region
          %s2853 = sand.u32 %s98, 1
          %s2854 = scalar_lea.sflag [#allocation4], %s2853
          %s2855 = sand.u32 %s98, 1
          %s2856 = smul.addr %s2855, 128
          %s2857 = scalar_lea.vmem [#allocation7], %s2856
          %2859 = dma.done %s2854, 2048
        $region52: #{tpu_custom_call.1} parent=47 // pred_fallthru
          _
      $region48: #{tpu_custom_call.1} parent=5 // pred_fallthru
        _
    $region6: #{tpu_custom_call.1} parent=1 // loop_footer
      %s20 = sadd.s32 1, %s16
    $region7: #{tpu_custom_call.1} parent=1 // loop_footer_branch
      %15 = sbr.rel target = $region3
    $region8: #{tpu_custom_call.1} parent=1 // loop_exit
      _
    %2860 = vsyncpa [#allocation3], 1
    %s2861 = scalar_lea.sflag [#allocation3], 1
    %2862 = vsyncpa %s2861, 1
    %2863 = vsyncpa [#allocation6], 1
    %2864 = vsyncpa [#allocation4], 1
    %s2865 = scalar_lea.sflag [#allocation4], 1
    %2866 = vsyncpa %s2865, 1

// kernel: tpu_custom_call.1
$region0: #{tpu_custom_call.1}
  #allocation0 [shape = 'u32[]', space=smem, size = 0x4, offset = 0x4, fixed_abs, tag = 'smem constant byte address 0x4 - core index']
  #allocation1 [shape = 'u32[72,128]{1,0:T(1,128)}', space=vmem, size = 0x9000, scoped, tag = 'internal scratch']
  %s0 = inlined_call_operand.hbm [shape: f32[256,128], index: 0, kind: input, shape index: {}]
  %s1 = inlined_call_operand.hbm [shape: f32[128,128], index: 1, kind: input, shape index: {}]
  %s2 = inlined_call_operand.vmem [shape: f32[1,128], index: 2, kind: input, shape index: {}]
  %s3 = inlined_call_operand.hbm [shape: f32[256,128], index: 3, kind: output, shape index: {}]
  %s4 = sld [smem:[#allocation0]]
  $region53: #{tpu_custom_call.1} parent=0
    _
  %s6 = ssub.s32 1, %s4
  %s7 = scalar_select 0, %s6, %s4
  $region1: #{tpu_custom_call.1} parent=0
    #allocation2 [shape = 'u8[131072]{0}', space=vmem, size = 0x20000, scoped, tag = 'input window, operand 0']
    #allocation3 [shape = 's32[2]{0}', space=sflag, size = 0x8, scoped, tag = 'scoped memory for tpu_custom_call.1']
    #allocation4 [shape = 's32[2]{0}', space=sflag, size = 0x8, scoped, tag = 'scoped memory for tpu_custom_call.1']
    #allocation5 [shape = 'u8[65536]{0}', space=vmem, size = 0x10000, scoped, tag = 'input window, operand 1, single buffered']
    #allocation6 [shape = 's32[1]{0}', space=sflag, size = 0x4, scoped, tag = 'scoped memory for tpu_custom_call.1']
    #allocation7 [shape = 'u8[131072]{0}', space=vmem, size = 0x20000, scoped, tag = 'output window, operand 0']
    %8 = vsyncpa [#allocation3], 0
    %s9 = scalar_lea.sflag [#allocation3], 1
    %10 = vsyncpa %s9, 0
    %11 = vsyncpa [#allocation6], 0
    %12 = vsyncpa [#allocation4], 0
    %s13 = scalar_lea.sflag [#allocation4], 1
    %14 = vsyncpa %s13, 0
    loop: start=0, step=1, limit=4
    $region2: #{tpu_custom_call.1} parent=1 // loop_pre_header
      _
    $region3: #{tpu_custom_call.1} parent=1 // loop_header
      %s16 = sphi 0, %s20
      %p17 = scmp.ge.s32.totalorder %s16, 4
      %s26 = sphi 0, %s28
      %s29 = sphi 0, %s26
      %s30 = sphi 0, %s29
      %s46 = sphi 0, %s30
      %s50 = sphi 0, %s50
      %s52 = sphi 0, %s50
      %s53 = sphi 0, %s52
      %s67 = sphi 0, %s53
      %s71 = sphi 0, %s71
      %s73 = sphi 0, %s71
      %s74 = sphi 0, %s73
      %s88 = sphi 0, %s74
      %s94 = sphi 0, %s96
      %s97 = sphi 0, %s94
      %s98 = sphi 0, %s97
      %s114 = sphi 0, %s98
    $region4: #{tpu_custom_call.1} parent=1 // loop_header_branch
      %19 = sbr.rel (%p17) target = $region8
    $region5: #{tpu_custom_call.1} parent=1 // loop_body
      %s21 = ssub.s32 %s16, 1
      %s22 = ssub.s32 %s16, 2
      %s23 = sadd.s32 %s16, 1
      %s24 = ssub.s32 %s16, %s23
      %p25 = scmp.eq.s32.totalorder %s24, 0
      %s27 = sadd.s32 %s26, 1
      %s28 = scalar_select %p25, %s26, %s27
      %p31 = pneg %p25
      %p32 = scmp.eq.s32.totalorder %s16, 1
      %p33 = por %p31, %p32
      %p34 = scmp.ne.s32.totalorder %s26, %s29
      %p35 = scmp.eq.s32.totalorder %s16, 0
      %p36 = por %p34, %p35
      %p37 = scmp.ne.s32.totalorder %s26, %s29
      %p38 = scmp.eq.s32.totalorder %s21, 1
      %p39 = por %p37, %p38
      %p40 = scmp.ne.s32.totalorder %s29, %s30
      %p41 = scmp.eq.s32.totalorder %s21, 0
      %p42 = por %p40, %p41
      %p43 = scmp.ne.s32.totalorder %s29, %s30
      %p44 = scmp.eq.s32.totalorder %s22, 1
      %p45 = por %p43, %p44
      %p47 = scmp.ne.s32.totalorder %s30, %s46
      %p48 = scmp.eq.s32.totalorder %s22, 0
      %p49 = por %p47, %p48
      %s51 = sadd.s32 %s50, 1
      %p54 = scmp.eq.s32.totalorder %s16, 1
      %p55 = scmp.ne.s32.totalorder %s50, %s52
      %p56 = scmp.eq.s32.totalorder %s16, 0
      %p57 = por %p55, %p56
      %p58 = scmp.ne.s32.totalorder %s50, %s52
      %p59 = scmp.eq.s32.totalorder %s21, 1
      %p60 = por %p58, %p59
      %p61 = scmp.ne.s32.totalorder %s52, %s53
      %p62 = scmp.eq.s32.totalorder %s21, 0
      %p63 = por %p61, %p62
      %p64 = scmp.ne.s32.totalorder %s52, %s53
      %p65 = scmp.eq.s32.totalorder %s22, 1
      %p66 = por %p64, %p65
      %p68 = scmp.ne.s32.totalorder %s53, %s67
      %p69 = scmp.eq.s32.totalorder %s22, 0
      %p70 = por %p68, %p69
      %s72 = sadd.s32 %s71, 1
      %p75 = scmp.eq.s32.totalorder %s16, 1
      %p76 = scmp.ne.s32.totalorder %s71, %s73
      %p77 = scmp.eq.s32.totalorder %s16, 0
      %p78 = por %p76, %p77
      %p79 = scmp.ne.s32.totalorder %s71, %s73
      %p80 = scmp.eq.s32.totalorder %s21, 1
      %p81 = por %p79, %p80
      %p82 = scmp.ne.s32.totalorder %s73, %s74
      %p83 = scmp.eq.s32.totalorder %s21, 0
      %p84 = por %p82, %p83
      %p85 = scmp.ne.s32.totalorder %s73, %s74
      %p86 = scmp.eq.s32.totalorder %s22, 1
      %p87 = por %p85, %p86
      %p89 = scmp.ne.s32.totalorder %s74, %s88
      %p90 = scmp.eq.s32.totalorder %s22, 0
      %p91 = por %p89, %p90
      %s92 = ssub.s32 %s16, %s23
      %p93 = scmp.eq.s32.totalorder %s92, 0
      %s95 = sadd.s32 %s94, 1
      %s96 = scalar_select %p93, %s94, %s95
      %p99 = pneg %p93
      %p100 = scmp.eq.s32.totalorder %s16, 1
      %p101 = por %p99, %p100
      %p102 = scmp.ne.s32.totalorder %s94, %s97
      %p103 = scmp.eq.s32.totalorder %s16, 0
      %p104 = por %p102, %p103
      %p105 = scmp.ne.s32.totalorder %s94, %s97
      %p106 = scmp.eq.s32.totalorder %s21, 1
      %p107 = por %p105, %p106
      %p108 = scmp.ne.s32.totalorder %s97, %s98
      %p109 = scmp.eq.s32.totalorder %s21, 0
      %p110 = por %p108, %p109
      %p111 = scmp.ne.s32.totalorder %s97, %s98
      %p112 = scmp.eq.s32.totalorder %s22, 1
      %p113 = por %p111, %p112
      %p115 = scmp.ne.s32.totalorder %s98, %s114
      %p116 = scmp.eq.s32.totalorder %s22, 0
      %p117 = por %p115, %p116
      %p118 = scmp.le.s32.totalorder 1, %s16
      %p119 = scmp.lt.s32.totalorder %s16, 3
      %p120 = pnand %p118, %p119
      %p121 = pneg %p120
      // Predicated region
      $region9: #{tpu_custom_call.1} parent=5 // pred_check
        _
      $region10: #{tpu_custom_call.1} parent=5 // pred_check_branch
        %123 = sbr.rel (%p120) target = $region12
      $region11: #{tpu_custom_call.1} parent=5 // pred_region
        %s124 = ssub.s32 %s16, 1
        // Predicated region
        $region13: #{tpu_custom_call.1} parent=11 // pred_check
          %p125 = pneg %p63
        $region14: #{tpu_custom_call.1} parent=11 // pred_check_branch
          %127 = sbr.rel (%p125) target = $region16
        $region15: #{tpu_custom_call.1} parent=11 // pred_region
          %129 = vsyncadd [#allocation6], 0
          %s130 = sshll.u32 %s1, 4
          %s131 = int_to_ptr.hbm [resolvable:$true] %s130
          %s132 = sshll.u32 [#allocation5], 4
          %s133 = int_to_ptr.vmem [resolvable:$true] %s132
          %138 = dma.hbm_to_vmem [thread:$0]  %s131, 2048, %s133, [#allocation6], 128, 128, 8
        $region16: #{tpu_custom_call.1} parent=11 // pred_fallthru
          _
        // Predicated region
        $region17: #{tpu_custom_call.1} parent=11 // pred_check
          %p139 = pneg %p84
        $region18: #{tpu_custom_call.1} parent=11 // pred_check_branch
          %141 = sbr.rel (%p139) target = $region20
        $region19: #{tpu_custom_call.1} parent=11 // pred_region
          _
        $region20: #{tpu_custom_call.1} parent=11 // pred_fallthru
          _
      $region12: #{tpu_custom_call.1} parent=5 // pred_fallthru
        _
      %p142 = scmp.lt.s32.totalorder %s16, 2
      // Predicated region
      $region21: #{tpu_custom_call.1} parent=5 // pred_check
        %p143 = pneg %p142
      $region22: #{tpu_custom_call.1} parent=5 // pred_check_branch
        %145 = sbr.rel (%p143) target = $region24
      $region23: #{tpu_custom_call.1} parent=5 // pred_region
        // Predicated region
        $region25: #{tpu_custom_call.1} parent=23 // pred_check
          %p146 = pneg %p36
        $region26: #{tpu_custom_call.1} parent=23 // pred_check_branch
          %148 = sbr.rel (%p146) target = $region28
        $region27: #{tpu_custom_call.1} parent=23 // pred_region
          %s149 = sand.u32 %s26, 1
          %s150 = scalar_lea.sflag [#allocation3], %s149
          %s151 = sand.u32 %s26, 1
          %s152 = smul.addr %s151, 128
          %s153 = scalar_lea.vmem [#allocation2], %s152
          %s154 = smul.u32 16, %s16
          %156 = vsyncadd %s150, 0
          %s157 = smul.addr %s154, 8
          %s158 = scalar_lea.hbm %s0, %s157
          %s159 = sshll.u32 %s158, 4
          %s160 = int_to_ptr.hbm [resolvable:$true] %s159
          %s161 = sshll.u32 %s153, 4
          %s162 = int_to_ptr.vmem [resolvable:$true] %s161
          %167 = dma.hbm_to_vmem [thread:$0]  %s160, 2048, %s162, %s150, 128, 128, 8
        $region28: #{tpu_custom_call.1} parent=23 // pred_fallthru
          _
      $region24: #{tpu_custom_call.1} parent=5 // pred_fallthru
        _
      %p168 = scmp.le.s32.totalorder 1, %s16
      %p169 = scmp.lt.s32.totalorder %s16, 3
      %p170 = pnand %p168, %p169
      %p171 = pneg %p170
      // Predicated region
      $region29: #{tpu_custom_call.1} parent=5 // pred_check
        _
      $region30: #{tpu_custom_call.1} parent=5 // pred_check_branch
        %173 = sbr.rel (%p170) target = $region32
      $region31: #{tpu_custom_call.1} parent=5 // pred_region
        %s174 = ssub.s32 %s16, 1
        %s175 = sand.u32 %s29, 1
        %s176 = scalar_lea.sflag [#allocation3], %s175
        %s177 = sand.u32 %s29, 1
        %s178 = smul.addr %s177, 128
        %s179 = scalar_lea.vmem [#allocation2], %s178
        // Predicated region
        $region33: #{tpu_custom_call.1} parent=31 // pred_check
          %p180 = pneg %p42
        $region34: #{tpu_custom_call.1} parent=31 // pred_check_branch
          %182 = sbr.rel (%p180) target = $region36
        $region35: #{tpu_custom_call.1} parent=31 // pred_region
          %184 = dma.done %s176, 2048
        $region36: #{tpu_custom_call.1} parent=31 // pred_fallthru
          _
        // Predicated region
        $region37: #{tpu_custom_call.1} parent=31 // pred_check
          %p185 = pneg %p63
        $region38: #{tpu_custom_call.1} parent=31 // pred_check_branch
          %187 = sbr.rel (%p185) target = $region40
        $region39: #{tpu_custom_call.1} parent=31 // pred_region
          %189 = dma.done [#allocation6], 2048
        $region40: #{tpu_custom_call.1} parent=31 // pred_fallthru
          _
        %s190 = sand.u32 %s29, 1
        %s191 = scalar_lea.sflag [#allocation3], %s190
        %s192 = sand.u32 %s29, 1
        %s193 = smul.addr %s192, 128
        %s194 = scalar_lea.vmem [#allocation2], %s193
        %p195 = pneg %p42
        %p196 = pneg %p39
        %p197 = pneg %p63
        %p198 = pneg %p60
        %p199 = pneg %p84
        %p200 = pneg %p81
        %p201 = pneg %p110
        %p202 = pneg %p107
        %s203 = sand.u32 %s97, 1
        %s204 = scalar_lea.sflag [#allocation4], %s203
        %s205 = sand.u32 %s97, 1
        %s206 = smul.addr %s205, 128
        %s207 = scalar_lea.vmem [#allocation7], %s206
        %s208 = smul.u32 16, %s21
        %s209 = smul.u32 16, %s21
        %v210 = vld [vmem:[%s179] sm:$0xff]
        %v211 = vld [vmem:[%s179 + $0x8] sm:$0xff]
        %v212 = vld [vmem:[%s179 + $0x10] sm:$0xff]
        %v213 = vld [vmem:[%s179 + $0x18] sm:$0xff]
        %v214 = vld [vmem:[%s179 + $0x20] sm:$0xff]
        %v215 = vld [vmem:[%s179 + $0x28] sm:$0xff]
        %v216 = vld [vmem:[%s179 + $0x30] sm:$0xff]
        %v217 = vld [vmem:[%s179 + $0x38] sm:$0xff]
        %v218 = vld [vmem:[%s179 + $0x40] sm:$0xff]
        %v219 = vld [vmem:[%s179 + $0x48] sm:$0xff]
        %v220 = vld [vmem:[%s179 + $0x50] sm:$0xff]
        %v221 = vld [vmem:[%s179 + $0x58] sm:$0xff]
        %v222 = vld [vmem:[%s179 + $0x60] sm:$0xff]
        %v223 = vld [vmem:[%s179 + $0x68] sm:$0xff]
        %v224 = vld [vmem:[%s179 + $0x70] sm:$0xff]
        %v225 = vld [vmem:[%s179 + $0x78] sm:$0xff]
        %v226 = vld [vmem:[#allocation5] sm:$0xff]
        %v227 = vld [vmem:[#allocation5 + $0x8] sm:$0xff]
        %v228 = vld [vmem:[#allocation5 + $0x10] sm:$0xff]
        %v229 = vld [vmem:[#allocation5 + $0x18] sm:$0xff]
        %v230 = vld [vmem:[#allocation5 + $0x20] sm:$0xff]
        %v231 = vld [vmem:[#allocation5 + $0x28] sm:$0xff]
        %v232 = vld [vmem:[#allocation5 + $0x30] sm:$0xff]
        %v233 = vld [vmem:[#allocation5 + $0x38] sm:$0xff]
        %v234 = vld [vmem:[#allocation5 + $0x40] sm:$0xff]
        %v235 = vld [vmem:[#allocation5 + $0x48] sm:$0xff]
        %v236 = vld [vmem:[#allocation5 + $0x50] sm:$0xff]
        %v237 = vld [vmem:[#allocation5 + $0x58] sm:$0xff]
        %v238 = vld [vmem:[#allocation5 + $0x60] sm:$0xff]
        %v239 = vld [vmem:[#allocation5 + $0x68] sm:$0xff]
        %v240 = vld [vmem:[#allocation5 + $0x70] sm:$0xff]
        %v241 = vld [vmem:[#allocation5 + $0x78] sm:$0xff]
        %v242 = vld [vmem:[%s2] sm:$0x1]
        %v244 = vperm.slane %v242, 0
        %246 = vmatpush.msra.mxu0 %v241
        %247 = vmatpush.msra.mxu0 %v240
        %248 = vmatpush.msra.mxu0 %v239
        %249 = vmatpush.msra.mxu0 %v238
        %250 = vmatpush.msra.mxu0 %v237
        %251 = vmatpush.msra.mxu0 %v236
        %252 = vmatpush.msra.mxu0 %v235
        %253 = vmatpush.msra.mxu0 %v234
        %254 = vmatpush.msra.mxu0 %v233
        %255 = vmatpush.msra.mxu0 %v232
        %256 = vmatpush.msra.mxu0 %v231
        %257 = vmatpush.msra.mxu0 %v230
        %258 = vmatpush.msra.mxu0 %v229
        %259 = vmatpush.msra.mxu0 %v228
        %260 = vmatpush.msra.mxu0 %v227
        %261 = vmatpush.msra.mxu0 %v226
        %262 = vmatmul.f32.gmra.mxu0 %v210
        %v263 = vpop.f32.mrf.mxu0
        %v264 = vadd.f32 %v244, %v263
        %265 = vmatmul.f32.gmra.mxu0 %v211
        %v266 = vpop.f32.mrf.mxu0
        %v267 = vadd.f32 %v244, %v266
        %268 = vmatmul.f32.gmra.mxu0 %v212
        %v269 = vpop.f32.mrf.mxu0
        %v270 = vadd.f32 %v244, %v269
        %271 = vmatmul.f32.gmra.mxu0 %v213
        %v272 = vpop.f32.mrf.mxu0
        %v273 = vadd.f32 %v244, %v272
        %274 = vmatmul.f32.gmra.mxu0 %v214
        %v275 = vpop.f32.mrf.mxu0
        %v276 = vadd.f32 %v244, %v275
        %277 = vmatmul.f32.gmra.mxu0 %v215
        %v278 = vpop.f32.mrf.mxu0
        %v279 = vadd.f32 %v244, %v278
        %280 = vmatmul.f32.gmra.mxu0 %v216
        %v281 = vpop.f32.mrf.mxu0
        %v282 = vadd.f32 %v244, %v281
        %283 = vmatmul.f32.gmra.mxu0 %v217
        %v284 = vpop.f32.mrf.mxu0
        %v285 = vadd.f32 %v244, %v284
        %286 = vmatmul.f32.gmra.mxu0 %v218
        %v287 = vpop.f32.mrf.mxu0
        %v288 = vadd.f32 %v244, %v287
        %289 = vmatmul.f32.gmra.mxu0 %v219
        %v290 = vpop.f32.mrf.mxu0
        %v291 = vadd.f32 %v244, %v290
        %292 = vmatmul.f32.gmra.mxu0 %v220
        %v293 = vpop.f32.mrf.mxu0
        %v294 = vadd.f32 %v244, %v293
        %295 = vmatmul.f32.gmra.mxu0 %v221
        %v296 = vpop.f32.mrf.mxu0
        %v297 = vadd.f32 %v244, %v296
        %298 = vmatmul.f32.gmra.mxu0 %v222
        %v299 = vpop.f32.mrf.mxu0
        %v300 = vadd.f32 %v244, %v299
        %301 = vmatmul.f32.gmra.mxu0 %v223
        %v302 = vpop.f32.mrf.mxu0
        %v303 = vadd.f32 %v244, %v302
        %304 = vmatmul.f32.gmra.mxu0 %v224
        %v305 = vpop.f32.mrf.mxu0
        %v306 = vadd.f32 %v244, %v305
        %307 = vmatmul.f32.gmra.mxu0 %v225
        %v308 = vpop.f32.mrf.mxu0
        %v309 = vadd.f32 %v244, %v308
        %310 = vdwg.mxu0
        %v311 = vmul.f32 %v264, 30.0
        %v312 = vmul.f32 %v267, 30.0
        %v313 = vmul.f32 %v270, 30.0
        %v314 = vmul.f32 %v273, 30.0
        %v315 = vmul.f32 %v276, 30.0
        %v316 = vmul.f32 %v279, 30.0
        %v317 = vmul.f32 %v282, 30.0
        %v318 = vmul.f32 %v285, 30.0
        %v319 = vmul.f32 %v288, 30.0
        %v320 = vmul.f32 %v291, 30.0
        %v321 = vmul.f32 %v294, 30.0
        %v322 = vmul.f32 %v297, 30.0
        %v323 = vmul.f32 %v300, 30.0
        %v324 = vmul.f32 %v303, 30.0
        %v325 = vmul.f32 %v306, 30.0
        %v326 = vmul.f32 %v309, 30.0
        %v327 = vand.u32 2147483647, %v311
        %vm328 = vcmp.le.f32.partialorder %v327, 0.7853982
        %vm329 = vcmp.lt.s32.totalorder %v311, 0
        %v330 = vand.u32 %v311, 2139095040
        %v331 = vshrl.u32 %v330, 23
        %v332 = vsub.s32 %v331, 127
        %v333 = vand.u32 2147483647, %v311
        %v334 = vand.u32 %v333, 8388607
        %v335 = vor.u32 %v334, 8388608
        %v336 = vsub.s32 0, %v335
        %v337 = vadd.s32 %v332, 1
        %vm338 = vcmp.gt.s32.totalorder %v337, 0
        %v339 = vsel %vm338, %v337, 0
        %v340 = vshrl.u32 %v339, 5
        %v341 = vand.u32 %v339, 31
        %v342 = vsub.s32 32, %v341
        %v343 = vshrl.u32 683565275, %v342
        %v344 = vshll.u32 683565275, %v341
        %v345 = vshrl.u32 2475754826, %v342
        %v346 = vor.u32 %v344, %v345
        %v347 = vshll.u32 2475754826, %v341
        %v348 = vshrl.u32 2131351028, %v342
        %v349 = vor.u32 %v347, %v348
        %v350 = vshll.u32 2131351028, %v341
        %v351 = vshrl.u32 2102212464, %v342
        %v352 = vor.u32 %v350, %v351
        %v353 = vshll.u32 2102212464, %v341
        %v354 = vshrl.u32 920167782, %v342
        %v355 = vor.u32 %v353, %v354
        %v356 = vshll.u32 920167782, %v341
        %v357 = vshrl.u32 1326507024, %v342
        %v358 = vor.u32 %v356, %v357
        %vm359 = vcmp.lt.s32.totalorder %v340, 1
        %vm360 = vcmp.lt.s32.totalorder %v340, 2
        %vm361 = vcmp.lt.s32.totalorder %v340, 3
        %vm362 = vcmp.lt.s32.totalorder %v340, 4
        %v363 = vsel %vm359, %v343, %v346
        %v364 = vsel %vm362, %v352, 2102212464
        %v365 = vsel %vm361, %v349, %v364
        %v366 = vsel %vm360, %v363, %v365
        %v367 = vsel %vm359, %v346, %v349
        %v368 = vsel %vm362, %v355, 920167782
        %v369 = vsel %vm361, %v352, %v368
        %v370 = vsel %vm360, %v367, %v369
        %v371 = vsel %vm359, %v349, %v352
        %v372 = vsel %vm362, %v358, 1326507024
        %v373 = vsel %vm361, %v355, %v372
        %v374 = vsel %vm360, %v371, %v373
        %v375 = vshll.u32 %v335, 8
        %v376 = vand.u32 %v375, 65535
        %v377 = vshrl.u32 %v375, 16
        %v378 = vand.u32 %v374, 65535
        %v379 = vshrl.u32 %v374, 16
        %v380 = vmul.u32 %v376, %v378
        %v381 = vmul.u32 %v376, %v379
        %v382 = vmul.u32 %v377, %v378
        %v383 = vmul.u32 %v377, %v379
        %v384 = vshll.u32 %v381, 16
        %v385 = vshrl.u32 %v381, 16
        %v386 = vshll.u32 %v382, 16
        %v387 = vshrl.u32 %v382, 16
        %vm388 = vc.u32 %v380, %v384
        %v389 = vsel %vm388, 1, 0
        %v390 = vadd.s32 %v380, %v384
        %v391 = vadd.s32 %v383, %v389
        %vm392 = vc.u32 %v390, %v386
        %v393 = vsel %vm392, 1, 0
        %v394 = vadd.s32 %v390, %v386
        %v395 = vadd.s32 %v391, %v393
        %v396 = vadd.s32 %v395, %v385
        %v397 = vadd.s32 %v396, %v387
        %v398 = vand.u32 %v375, 65535
        %v399 = vshrl.u32 %v375, 16
        %v400 = vand.u32 %v370, 65535
        %v401 = vshrl.u32 %v370, 16
        %v402 = vmul.u32 %v398, %v400
        %v403 = vmul.u32 %v398, %v401
        %v404 = vmul.u32 %v399, %v400
        %v405 = vmul.u32 %v399, %v401
        %v406 = vshll.u32 %v403, 16
        %v407 = vshrl.u32 %v403, 16
        %v408 = vshll.u32 %v404, 16
        %v409 = vshrl.u32 %v404, 16
        %vm410 = vc.u32 %v402, %v406
        %v411 = vsel %vm410, 1, 0
        %v412 = vadd.s32 %v402, %v406
        %v413 = vadd.s32 %v405, %v411
        %vm414 = vc.u32 %v412, %v408
        %v415 = vsel %vm414, 1, 0
        %v416 = vadd.s32 %v412, %v408
        %v417 = vadd.s32 %v413, %v415
        %v418 = vadd.s32 %v417, %v407
        %v419 = vadd.s32 %v418, %v409
        %v420 = vmul.u32 %v375, %v366
        %v421 = vadd.s32 %v397, %v416
        %vm422 = vc.u32 %v397, %v416
        %v423 = vadd.s32 %v419, 1
        %v424 = vsel %vm422, %v423, %v419
        %v425 = vadd.s32 %v420, %v424
        %v426 = vadd.s32 %v425, 536870912
        %v427 = vshrl.u32 %v426, 30
        %v428 = vshll.u32 %v427, 30
        %v429 = vsub.s32 %v425, %v428
        %vm430 = vcmp.lt.s32.totalorder %v429, 0
        %v431 = vsub.s32 0, %v429
        %v432 = vsel %vm430, %v431, %v429
        %v433 = vclz %v432
        %v434 = vsub.s32 %v433, 2
        %vm435 = vcmp.gt.s32.totalorder 0, %v434
        %v436 = vsel %vm435, 0, %v434
        %v437 = vsub.s32 32, %v436
        %v438 = vshll.u32 %v429, %v436
        %v439 = vshrl.u32 %v421, %v437
        %v440 = vor.u32 %v438, %v439
        %v441 = vsub.s32 4294967266, %v436
        %v442 = vadd.s32 %v441, 127
        %v443 = vshll.u32 %v442, 23
        %v444 = vor.u32 4788187, %v443
        %v445 = vand.u32 2147483647, %v444
        %v447 = vcvt.s32.f32 %v440
        %v448 = vmul.f32 %v447, %v445
        %v449 = vxor.u32 %v448, 2147483648
        %v450 = vsel %vm329, %v449, %v448
        %v451 = vsub.s32 4, %v427
        %v452 = vsel %vm329, %v451, %v427
        %v453 = vsel %vm328, %v311, %v450
        %v454 = vsel %vm328, 0, %v452
        %v455 = vmul.f32 %v453, %v453
        %v456 = vmul.f32 %v455, -0.001358992
        %v457 = vadd.f32 %v456, 0.041655596
        %v458 = vmul.f32 %v455, %v457
        %v459 = vadd.f32 %v458, -0.4999988
        %v460 = vmul.f32 %v455, %v459
        %v461 = vadd.f32 1.0, %v460
        %v462 = vmul.f32 %v453, %v453
        %v463 = vmul.f32 %v462, -0.00019511016
        %v464 = vadd.f32 %v463, 0.008332121
        %v465 = vmul.f32 %v462, %v464
        %v466 = vadd.f32 %v465, -0.16666654
        %v467 = vmul.f32 %v462, %v466
        %v468 = vadd.f32 %v467, 1.0
        %v469 = vmul.f32 %v468, %v453
        %vm470 = vweird.f32 %v311
        %v471 = vadd.s32 %v454, 3
        %v472 = vand.u32 %v471, 3
        %vm473 = vcmp.lt.s32.totalorder %v472, 2
        %vm474 = vcmp.eq.s32.totalorder %v472, 0
        %v475 = vxor.u32 %v469, 2147483648
        %v476 = vsel %vm474, %v461, %v475
        %vm477 = vcmp.eq.s32.totalorder %v472, 2
        %v478 = vxor.u32 %v461, 2147483648
        %v479 = vsel %vm477, %v478, %v469
        %v480 = vsel %vm473, %v476, %v479
        %v481 = vsel %vm470, nan, %v480
        %v482 = vand.u32 2147483647, %v312
        %vm483 = vcmp.le.f32.partialorder %v482, 0.7853982
        %vm484 = vcmp.lt.s32.totalorder %v312, 0
        %v485 = vand.u32 %v312, 2139095040
        %v486 = vshrl.u32 %v485, 23
        %v487 = vsub.s32 %v486, 127
        %v488 = vand.u32 2147483647, %v312
        %v489 = vand.u32 %v488, 8388607
        %v490 = vor.u32 %v489, 8388608
        %v491 = vsub.s32 0, %v490
        %v492 = vadd.s32 %v487, 1
        %vm493 = vcmp.gt.s32.totalorder %v492, 0
        %v494 = vsel %vm493, %v492, 0
        %v495 = vshrl.u32 %v494, 5
        %v496 = vand.u32 %v494, 31
        %v497 = vsub.s32 32, %v496
        %v498 = vshrl.u32 683565275, %v497
        %v499 = vshll.u32 683565275, %v496
        %v500 = vshrl.u32 2475754826, %v497
        %v501 = vor.u32 %v499, %v500
        %v502 = vshll.u32 2475754826, %v496
        %v503 = vshrl.u32 2131351028, %v497
        %v504 = vor.u32 %v502, %v503
        %v505 = vshll.u32 2131351028, %v496
        %v506 = vshrl.u32 2102212464, %v497
        %v507 = vor.u32 %v505, %v506
        %v508 = vshll.u32 2102212464, %v496
        %v509 = vshrl.u32 920167782, %v497
        %v510 = vor.u32 %v508, %v509
        %v511 = vshll.u32 920167782, %v496
        %v512 = vshrl.u32 1326507024, %v497
        %v513 = vor.u32 %v511, %v512
        %vm514 = vcmp.lt.s32.totalorder %v495, 1
        %vm515 = vcmp.lt.s32.totalorder %v495, 2
        %vm516 = vcmp.lt.s32.totalorder %v495, 3
        %vm517 = vcmp.lt.s32.totalorder %v495, 4
        %v518 = vsel %vm514, %v498, %v501
        %v519 = vsel %vm517, %v507, 2102212464
        %v520 = vsel %vm516, %v504, %v519
        %v521 = vsel %vm515, %v518, %v520
        %v522 = vsel %vm514, %v501, %v504
        %v523 = vsel %vm517, %v510, 920167782
        %v524 = vsel %vm516, %v507, %v523
        %v525 = vsel %vm515, %v522, %v524
        %v526 = vsel %vm514, %v504, %v507
        %v527 = vsel %vm517, %v513, 1326507024
        %v528 = vsel %vm516, %v510, %v527
        %v529 = vsel %vm515, %v526, %v528
        %v530 = vshll.u32 %v490, 8
        %v531 = vand.u32 %v530, 65535
        %v532 = vshrl.u32 %v530, 16
        %v533 = vand.u32 %v529, 65535
        %v534 = vshrl.u32 %v529, 16
        %v535 = vmul.u32 %v531, %v533
        %v536 = vmul.u32 %v531, %v534
        %v537 = vmul.u32 %v532, %v533
        %v538 = vmul.u32 %v532, %v534
        %v539 = vshll.u32 %v536, 16
        %v540 = vshrl.u32 %v536, 16
        %v541 = vshll.u32 %v537, 16
        %v542 = vshrl.u32 %v537, 16
        %vm543 = vc.u32 %v535, %v539
        %v544 = vsel %vm543, 1, 0
        %v545 = vadd.s32 %v535, %v539
        %v546 = vadd.s32 %v538, %v544
        %vm547 = vc.u32 %v545, %v541
        %v548 = vsel %vm547, 1, 0
        %v549 = vadd.s32 %v545, %v541
        %v550 = vadd.s32 %v546, %v548
        %v551 = vadd.s32 %v550, %v540
        %v552 = vadd.s32 %v551, %v542
        %v553 = vand.u32 %v530, 65535
        %v554 = vshrl.u32 %v530, 16
        %v555 = vand.u32 %v525, 65535
        %v556 = vshrl.u32 %v525, 16
        %v557 = vmul.u32 %v553, %v555
        %v558 = vmul.u32 %v553, %v556
        %v559 = vmul.u32 %v554, %v555
        %v560 = vmul.u32 %v554, %v556
        %v561 = vshll.u32 %v558, 16
        %v562 = vshrl.u32 %v558, 16
        %v563 = vshll.u32 %v559, 16
        %v564 = vshrl.u32 %v559, 16
        %vm565 = vc.u32 %v557, %v561
        %v566 = vsel %vm565, 1, 0
        %v567 = vadd.s32 %v557, %v561
        %v568 = vadd.s32 %v560, %v566
        %vm569 = vc.u32 %v567, %v563
        %v570 = vsel %vm569, 1, 0
        %v571 = vadd.s32 %v567, %v563
        %v572 = vadd.s32 %v568, %v570
        %v573 = vadd.s32 %v572, %v562
        %v574 = vadd.s32 %v573, %v564
        %v575 = vmul.u32 %v530, %v521
        %v576 = vadd.s32 %v552, %v571
        %vm577 = vc.u32 %v552, %v571
        %v578 = vadd.s32 %v574, 1
        %v579 = vsel %vm577, %v578, %v574
        %v580 = vadd.s32 %v575, %v579
        %v581 = vadd.s32 %v580, 536870912
        %v582 = vshrl.u32 %v581, 30
        %v583 = vshll.u32 %v582, 30
        %v584 = vsub.s32 %v580, %v583
        %vm585 = vcmp.lt.s32.totalorder %v584, 0
        %v586 = vsub.s32 0, %v584
        %v587 = vsel %vm585, %v586, %v584
        %v588 = vclz %v587
        %v589 = vsub.s32 %v588, 2
        %vm590 = vcmp.gt.s32.totalorder 0, %v589
        %v591 = vsel %vm590, 0, %v589
        %v592 = vsub.s32 32, %v591
        %v593 = vshll.u32 %v584, %v591
        %v594 = vshrl.u32 %v576, %v592
        %v595 = vor.u32 %v593, %v594
        %v596 = vsub.s32 4294967266, %v591
        %v597 = vadd.s32 %v596, 127
        %v598 = vshll.u32 %v597, 23
        %v599 = vor.u32 4788187, %v598
        %v600 = vand.u32 2147483647, %v599
        %v602 = vcvt.s32.f32 %v595
        %v603 = vmul.f32 %v602, %v600
        %v604 = vxor.u32 %v603, 2147483648
        %v605 = vsel %vm484, %v604, %v603
        %v606 = vsub.s32 4, %v582
        %v607 = vsel %vm484, %v606, %v582
        %v608 = vsel %vm483, %v312, %v605
        %v609 = vsel %vm483, 0, %v607
        %v610 = vmul.f32 %v608, %v608
        %v611 = vmul.f32 %v610, -0.001358992
        %v612 = vadd.f32 %v611, 0.041655596
        %v613 = vmul.f32 %v610, %v612
        %v614 = vadd.f32 %v613, -0.4999988
        %v615 = vmul.f32 %v610, %v614
        %v616 = vadd.f32 1.0, %v615
        %v617 = vmul.f32 %v608, %v608
        %v618 = vmul.f32 %v617, -0.00019511016
        %v619 = vadd.f32 %v618, 0.008332121
        %v620 = vmul.f32 %v617, %v619
        %v621 = vadd.f32 %v620, -0.16666654
        %v622 = vmul.f32 %v617, %v621
        %v623 = vadd.f32 %v622, 1.0
        %v624 = vmul.f32 %v623, %v608
        %vm625 = vweird.f32 %v312
        %v626 = vadd.s32 %v609, 3
        %v627 = vand.u32 %v626, 3
        %vm628 = vcmp.lt.s32.totalorder %v627, 2
        %vm629 = vcmp.eq.s32.totalorder %v627, 0
        %v630 = vxor.u32 %v624, 2147483648
        %v631 = vsel %vm629, %v616, %v630
        %vm632 = vcmp.eq.s32.totalorder %v627, 2
        %v633 = vxor.u32 %v616, 2147483648
        %v634 = vsel %vm632, %v633, %v624
        %v635 = vsel %vm628, %v631, %v634
        %v636 = vsel %vm625, nan, %v635
        %v637 = vand.u32 2147483647, %v313
        %vm638 = vcmp.le.f32.partialorder %v637, 0.7853982
        %vm639 = vcmp.lt.s32.totalorder %v313, 0
        %v640 = vand.u32 %v313, 2139095040
        %v641 = vshrl.u32 %v640, 23
        %v642 = vsub.s32 %v641, 127
        %v643 = vand.u32 2147483647, %v313
        %v644 = vand.u32 %v643, 8388607
        %v645 = vor.u32 %v644, 8388608
        %v646 = vsub.s32 0, %v645
        %v647 = vadd.s32 %v642, 1
        %vm648 = vcmp.gt.s32.totalorder %v647, 0
        %v649 = vsel %vm648, %v647, 0
        %v650 = vshrl.u32 %v649, 5
        %v651 = vand.u32 %v649, 31
        %v652 = vsub.s32 32, %v651
        %v653 = vshrl.u32 683565275, %v652
        %v654 = vshll.u32 683565275, %v651
        %v655 = vshrl.u32 2475754826, %v652
        %v656 = vor.u32 %v654, %v655
        %v657 = vshll.u32 2475754826, %v651
        %v658 = vshrl.u32 2131351028, %v652
        %v659 = vor.u32 %v657, %v658
        %v660 = vshll.u32 2131351028, %v651
        %v661 = vshrl.u32 2102212464, %v652
        %v662 = vor.u32 %v660, %v661
        %v663 = vshll.u32 2102212464, %v651
        %v664 = vshrl.u32 920167782, %v652
        %v665 = vor.u32 %v663, %v664
        %v666 = vshll.u32 920167782, %v651
        %v667 = vshrl.u32 1326507024, %v652
        %v668 = vor.u32 %v666, %v667
        %vm669 = vcmp.lt.s32.totalorder %v650, 1
        %vm670 = vcmp.lt.s32.totalorder %v650, 2
        %vm671 = vcmp.lt.s32.totalorder %v650, 3
        %vm672 = vcmp.lt.s32.totalorder %v650, 4
        %v673 = vsel %vm669, %v653, %v656
        %v674 = vsel %vm672, %v662, 2102212464
        %v675 = vsel %vm671, %v659, %v674
        %v676 = vsel %vm670, %v673, %v675
        %v677 = vsel %vm669, %v656, %v659
        %v678 = vsel %vm672, %v665, 920167782
        %v679 = vsel %vm671, %v662, %v678
        %v680 = vsel %vm670, %v677, %v679
        %v681 = vsel %vm669, %v659, %v662
        %v682 = vsel %vm672, %v668, 1326507024
        %v683 = vsel %vm671, %v665, %v682
        %v684 = vsel %vm670, %v681, %v683
        %v685 = vshll.u32 %v645, 8
        %v686 = vand.u32 %v685, 65535
        %v687 = vshrl.u32 %v685, 16
        %v688 = vand.u32 %v684, 65535
        %v689 = vshrl.u32 %v684, 16
        %v690 = vmul.u32 %v686, %v688
        %v691 = vmul.u32 %v686, %v689
        %v692 = vmul.u32 %v687, %v688
        %v693 = vmul.u32 %v687, %v689
        %v694 = vshll.u32 %v691, 16
        %v695 = vshrl.u32 %v691, 16
        %v696 = vshll.u32 %v692, 16
        %v697 = vshrl.u32 %v692, 16
        %vm698 = vc.u32 %v690, %v694
        %v699 = vsel %vm698, 1, 0
        %v700 = vadd.s32 %v690, %v694
        %v701 = vadd.s32 %v693, %v699
        %vm702 = vc.u32 %v700, %v696
        %v703 = vsel %vm702, 1, 0
        %v704 = vadd.s32 %v700, %v696
        %v705 = vadd.s32 %v701, %v703
        %v706 = vadd.s32 %v705, %v695
        %v707 = vadd.s32 %v706, %v697
        %v708 = vand.u32 %v685, 65535
        %v709 = vshrl.u32 %v685, 16
        %v710 = vand.u32 %v680, 65535
        %v711 = vshrl.u32 %v680, 16
        %v712 = vmul.u32 %v708, %v710
        %v713 = vmul.u32 %v708, %v711
        %v714 = vmul.u32 %v709, %v710
        %v715 = vmul.u32 %v709, %v711
        %v716 = vshll.u32 %v713, 16
        %v717 = vshrl.u32 %v713, 16
        %v718 = vshll.u32 %v714, 16
        %v719 = vshrl.u32 %v714, 16
        %vm720 = vc.u32 %v712, %v716
        %v721 = vsel %vm720, 1, 0
        %v722 = vadd.s32 %v712, %v716
        %v723 = vadd.s32 %v715, %v721
        %vm724 = vc.u32 %v722, %v718
        %v725 = vsel %vm724, 1, 0
        %v726 = vadd.s32 %v722, %v718
        %v727 = vadd.s32 %v723, %v725
        %v728 = vadd.s32 %v727, %v717
        %v729 = vadd.s32 %v728, %v719
        %v730 = vmul.u32 %v685, %v676
        %v731 = vadd.s32 %v707, %v726
        %vm732 = vc.u32 %v707, %v726
        %v733 = vadd.s32 %v729, 1
        %v734 = vsel %vm732, %v733, %v729
        %v735 = vadd.s32 %v730, %v734
        %v736 = vadd.s32 %v735, 536870912
        %v737 = vshrl.u32 %v736, 30
        %v738 = vshll.u32 %v737, 30
        %v739 = vsub.s32 %v735, %v738
        %vm740 = vcmp.lt.s32.totalorder %v739, 0
        %v741 = vsub.s32 0, %v739
        %v742 = vsel %vm740, %v741, %v739
        %v743 = vclz %v742
        %v744 = vsub.s32 %v743, 2
        %vm745 = vcmp.gt.s32.totalorder 0, %v744
        %v746 = vsel %vm745, 0, %v744
        %v747 = vsub.s32 32, %v746
        %v748 = vshll.u32 %v739, %v746
        %v749 = vshrl.u32 %v731, %v747
        %v750 = vor.u32 %v748, %v749
        %v751 = vsub.s32 4294967266, %v746
        %v752 = vadd.s32 %v751, 127
        %v753 = vshll.u32 %v752, 23
        %v754 = vor.u32 4788187, %v753
        %v755 = vand.u32 2147483647, %v754
        %v757 = vcvt.s32.f32 %v750
        %v758 = vmul.f32 %v757, %v755
        %v759 = vxor.u32 %v758, 2147483648
        %v760 = vsel %vm639, %v759, %v758
        %v761 = vsub.s32 4, %v737
        %v762 = vsel %vm639, %v761, %v737
        %v763 = vsel %vm638, %v313, %v760
        %v764 = vsel %vm638, 0, %v762
        %v765 = vmul.f32 %v763, %v763
        %v766 = vmul.f32 %v765, -0.001358992
        %v767 = vadd.f32 %v766, 0.041655596
        %v768 = vmul.f32 %v765, %v767
        %v769 = vadd.f32 %v768, -0.4999988
        %v770 = vmul.f32 %v765, %v769
        %v771 = vadd.f32 1.0, %v770
        %v772 = vmul.f32 %v763, %v763
        %v773 = vmul.f32 %v772, -0.00019511016
        %v774 = vadd.f32 %v773, 0.008332121
        %v775 = vmul.f32 %v772, %v774
        %v776 = vadd.f32 %v775, -0.16666654
        %v777 = vmul.f32 %v772, %v776
        %v778 = vadd.f32 %v777, 1.0
        %v779 = vmul.f32 %v778, %v763
        %vm780 = vweird.f32 %v313
        %v781 = vadd.s32 %v764, 3
        %v782 = vand.u32 %v781, 3
        %vm783 = vcmp.lt.s32.totalorder %v782, 2
        %vm784 = vcmp.eq.s32.totalorder %v782, 0
        %v785 = vxor.u32 %v779, 2147483648
        %v786 = vsel %vm784, %v771, %v785
        %vm787 = vcmp.eq.s32.totalorder %v782, 2
        %v788 = vxor.u32 %v771, 2147483648
        %v789 = vsel %vm787, %v788, %v779
        %v790 = vsel %vm783, %v786, %v789
        %v791 = vsel %vm780, nan, %v790
        %v792 = vand.u32 2147483647, %v314
        %vm793 = vcmp.le.f32.partialorder %v792, 0.7853982
        %vm794 = vcmp.lt.s32.totalorder %v314, 0
        %v795 = vand.u32 %v314, 2139095040
        %v796 = vshrl.u32 %v795, 23
        %v797 = vsub.s32 %v796, 127
        %v798 = vand.u32 2147483647, %v314
        %v799 = vand.u32 %v798, 8388607
        %v800 = vor.u32 %v799, 8388608
        %v801 = vsub.s32 0, %v800
        %v802 = vadd.s32 %v797, 1
        %vm803 = vcmp.gt.s32.totalorder %v802, 0
        %v804 = vsel %vm803, %v802, 0
        %v805 = vshrl.u32 %v804, 5
        %v806 = vand.u32 %v804, 31
        %v807 = vsub.s32 32, %v806
        %v808 = vshrl.u32 683565275, %v807
        %v809 = vshll.u32 683565275, %v806
        %v810 = vshrl.u32 2475754826, %v807
        %v811 = vor.u32 %v809, %v810
        %v812 = vshll.u32 2475754826, %v806
        %v813 = vshrl.u32 2131351028, %v807
        %v814 = vor.u32 %v812, %v813
        %v815 = vshll.u32 2131351028, %v806
        %v816 = vshrl.u32 2102212464, %v807
        %v817 = vor.u32 %v815, %v816
        %v818 = vshll.u32 2102212464, %v806
        %v819 = vshrl.u32 920167782, %v807
        %v820 = vor.u32 %v818, %v819
        %v821 = vshll.u32 920167782, %v806
        %v822 = vshrl.u32 1326507024, %v807
        %v823 = vor.u32 %v821, %v822
        %vm824 = vcmp.lt.s32.totalorder %v805, 1
        %vm825 = vcmp.lt.s32.totalorder %v805, 2
        %vm826 = vcmp.lt.s32.totalorder %v805, 3
        %vm827 = vcmp.lt.s32.totalorder %v805, 4
        %v828 = vsel %vm824, %v808, %v811
        %v829 = vsel %vm827, %v817, 2102212464
        %v830 = vsel %vm826, %v814, %v829
        %v831 = vsel %vm825, %v828, %v830
        %v832 = vsel %vm824, %v811, %v814
        %v833 = vsel %vm827, %v820, 920167782
        %v834 = vsel %vm826, %v817, %v833
        %v835 = vsel %vm825, %v832, %v834
        %v836 = vsel %vm824, %v814, %v817
        %v837 = vsel %vm827, %v823, 1326507024
        %v838 = vsel %vm826, %v820, %v837
        %v839 = vsel %vm825, %v836, %v838
        %v840 = vshll.u32 %v800, 8
        %v841 = vand.u32 %v840, 65535
        %v842 = vshrl.u32 %v840, 16
        %v843 = vand.u32 %v839, 65535
        %v844 = vshrl.u32 %v839, 16
        %v845 = vmul.u32 %v841, %v843
        %v846 = vmul.u32 %v841, %v844
        %v847 = vmul.u32 %v842, %v843
        %v848 = vmul.u32 %v842, %v844
        %v849 = vshll.u32 %v846, 16
        %v850 = vshrl.u32 %v846, 16
        %v851 = vshll.u32 %v847, 16
        %v852 = vshrl.u32 %v847, 16
        %vm853 = vc.u32 %v845, %v849
        %v854 = vsel %vm853, 1, 0
        %v855 = vadd.s32 %v845, %v849
        %v856 = vadd.s32 %v848, %v854
        %vm857 = vc.u32 %v855, %v851
        %v858 = vsel %vm857, 1, 0
        %v859 = vadd.s32 %v855, %v851
        %v860 = vadd.s32 %v856, %v858
        %v861 = vadd.s32 %v860, %v850
        %v862 = vadd.s32 %v861, %v852
        %v863 = vand.u32 %v840, 65535
        %v864 = vshrl.u32 %v840, 16
        %v865 = vand.u32 %v835, 65535
        %v866 = vshrl.u32 %v835, 16
        %v867 = vmul.u32 %v863, %v865
        %v868 = vmul.u32 %v863, %v866
        %v869 = vmul.u32 %v864, %v865
        %v870 = vmul.u32 %v864, %v866
        %v871 = vshll.u32 %v868, 16
        %v872 = vshrl.u32 %v868, 16
        %v873 = vshll.u32 %v869, 16
        %v874 = vshrl.u32 %v869, 16
        %vm875 = vc.u32 %v867, %v871
        %v876 = vsel %vm875, 1, 0
        %v877 = vadd.s32 %v867, %v871
        %v878 = vadd.s32 %v870, %v876
        %vm879 = vc.u32 %v877, %v873
        %v880 = vsel %vm879, 1, 0
        %v881 = vadd.s32 %v877, %v873
        %v882 = vadd.s32 %v878, %v880
        %v883 = vadd.s32 %v882, %v872
        %v884 = vadd.s32 %v883, %v874
        %v885 = vmul.u32 %v840, %v831
        %v886 = vadd.s32 %v862, %v881
        %vm887 = vc.u32 %v862, %v881
        %v888 = vadd.s32 %v884, 1
        %v889 = vsel %vm887, %v888, %v884
        %v890 = vadd.s32 %v885, %v889
        %v891 = vadd.s32 %v890, 536870912
        %v892 = vshrl.u32 %v891, 30
        %v893 = vshll.u32 %v892, 30
        %v894 = vsub.s32 %v890, %v893
        %vm895 = vcmp.lt.s32.totalorder %v894, 0
        %v896 = vsub.s32 0, %v894
        %v897 = vsel %vm895, %v896, %v894
        %v898 = vclz %v897
        %v899 = vsub.s32 %v898, 2
        %vm900 = vcmp.gt.s32.totalorder 0, %v899
        %v901 = vsel %vm900, 0, %v899
        %v902 = vsub.s32 32, %v901
        %v903 = vshll.u32 %v894, %v901
        %v904 = vshrl.u32 %v886, %v902
        %v905 = vor.u32 %v903, %v904
        %v906 = vsub.s32 4294967266, %v901
        %v907 = vadd.s32 %v906, 127
        %v908 = vshll.u32 %v907, 23
        %v909 = vor.u32 4788187, %v908
        %v910 = vand.u32 2147483647, %v909
        %v912 = vcvt.s32.f32 %v905
        %v913 = vmul.f32 %v912, %v910
        %v914 = vxor.u32 %v913, 2147483648
        %v915 = vsel %vm794, %v914, %v913
        %v916 = vsub.s32 4, %v892
        %v917 = vsel %vm794, %v916, %v892
        %v918 = vsel %vm793, %v314, %v915
        %v919 = vsel %vm793, 0, %v917
        %v920 = vmul.f32 %v918, %v918
        %v921 = vmul.f32 %v920, -0.001358992
        %v922 = vadd.f32 %v921, 0.041655596
        %v923 = vmul.f32 %v920, %v922
        %v924 = vadd.f32 %v923, -0.4999988
        %v925 = vmul.f32 %v920, %v924
        %v926 = vadd.f32 1.0, %v925
        %v927 = vmul.f32 %v918, %v918
        %v928 = vmul.f32 %v927, -0.00019511016
        %v929 = vadd.f32 %v928, 0.008332121
        %v930 = vmul.f32 %v927, %v929
        %v931 = vadd.f32 %v930, -0.16666654
        %v932 = vmul.f32 %v927, %v931
        %v933 = vadd.f32 %v932, 1.0
        %v934 = vmul.f32 %v933, %v918
        %vm935 = vweird.f32 %v314
        %v936 = vadd.s32 %v919, 3
        %v937 = vand.u32 %v936, 3
        %vm938 = vcmp.lt.s32.totalorder %v937, 2
        %vm939 = vcmp.eq.s32.totalorder %v937, 0
        %v940 = vxor.u32 %v934, 2147483648
        %v941 = vsel %vm939, %v926, %v940
        %vm942 = vcmp.eq.s32.totalorder %v937, 2
        %v943 = vxor.u32 %v926, 2147483648
        %v944 = vsel %vm942, %v943, %v934
        %v945 = vsel %vm938, %v941, %v944
        %v946 = vsel %vm935, nan, %v945
        %v947 = vand.u32 2147483647, %v315
        %vm948 = vcmp.le.f32.partialorder %v947, 0.7853982
        %vm949 = vcmp.lt.s32.totalorder %v315, 0
        %v950 = vand.u32 %v315, 2139095040
        %v951 = vshrl.u32 %v950, 23
        %v952 = vsub.s32 %v951, 127
        %v953 = vand.u32 2147483647, %v315
        %v954 = vand.u32 %v953, 8388607
        %v955 = vor.u32 %v954, 8388608
        %v956 = vsub.s32 0, %v955
        %v957 = vadd.s32 %v952, 1
        %vm958 = vcmp.gt.s32.totalorder %v957, 0
        %v959 = vsel %vm958, %v957, 0
        %v960 = vshrl.u32 %v959, 5
        %v961 = vand.u32 %v959, 31
        %v962 = vsub.s32 32, %v961
        %v963 = vshrl.u32 683565275, %v962
        %v964 = vshll.u32 683565275, %v961
        %v965 = vshrl.u32 2475754826, %v962
        %v966 = vor.u32 %v964, %v965
        %v967 = vshll.u32 2475754826, %v961
        %v968 = vshrl.u32 2131351028, %v962
        %v969 = vor.u32 %v967, %v968
        %v970 = vshll.u32 2131351028, %v961
        %v971 = vshrl.u32 2102212464, %v962
        %v972 = vor.u32 %v970, %v971
        %v973 = vshll.u32 2102212464, %v961
        %v974 = vshrl.u32 920167782, %v962
        %v975 = vor.u32 %v973, %v974
        %v976 = vshll.u32 920167782, %v961
        %v977 = vshrl.u32 1326507024, %v962
        %v978 = vor.u32 %v976, %v977
        %vm979 = vcmp.lt.s32.totalorder %v960, 1
        %vm980 = vcmp.lt.s32.totalorder %v960, 2
        %vm981 = vcmp.lt.s32.totalorder %v960, 3
        %vm982 = vcmp.lt.s32.totalorder %v960, 4
        %v983 = vsel %vm979, %v963, %v966
        %v984 = vsel %vm982, %v972, 2102212464
        %v985 = vsel %vm981, %v969, %v984
        %v986 = vsel %vm980, %v983, %v985
        %v987 = vsel %vm979, %v966, %v969
        %v988 = vsel %vm982, %v975, 920167782
        %v989 = vsel %vm981, %v972, %v988
        %v990 = vsel %vm980, %v987, %v989
        %v991 = vsel %vm979, %v969, %v972
        %v992 = vsel %vm982, %v978, 1326507024
        %v993 = vsel %vm981, %v975, %v992
        %v994 = vsel %vm980, %v991, %v993
        %v995 = vshll.u32 %v955, 8
        %v996 = vand.u32 %v995, 65535
        %v997 = vshrl.u32 %v995, 16
        %v998 = vand.u32 %v994, 65535
        %v999 = vshrl.u32 %v994, 16
        %v1000 = vmul.u32 %v996, %v998
        %v1001 = vmul.u32 %v996, %v999
        %v1002 = vmul.u32 %v997, %v998
        %v1003 = vmul.u32 %v997, %v999
        %v1004 = vshll.u32 %v1001, 16
        %v1005 = vshrl.u32 %v1001, 16
        %v1006 = vshll.u32 %v1002, 16
        %v1007 = vshrl.u32 %v1002, 16
        %vm1008 = vc.u32 %v1000, %v1004
        %v1009 = vsel %vm1008, 1, 0
        %v1010 = vadd.s32 %v1000, %v1004
        %v1011 = vadd.s32 %v1003, %v1009
        %vm1012 = vc.u32 %v1010, %v1006
        %v1013 = vsel %vm1012, 1, 0
        %v1014 = vadd.s32 %v1010, %v1006
        %v1015 = vadd.s32 %v1011, %v1013
        %v1016 = vadd.s32 %v1015, %v1005
        %v1017 = vadd.s32 %v1016, %v1007
        %v1018 = vand.u32 %v995, 65535
        %v1019 = vshrl.u32 %v995, 16
        %v1020 = vand.u32 %v990, 65535
        %v1021 = vshrl.u32 %v990, 16
        %v1022 = vmul.u32 %v1018, %v1020
        %v1023 = vmul.u32 %v1018, %v1021
        %v1024 = vmul.u32 %v1019, %v1020
        %v1025 = vmul.u32 %v1019, %v1021
        %v1026 = vshll.u32 %v1023, 16
        %v1027 = vshrl.u32 %v1023, 16
        %v1028 = vshll.u32 %v1024, 16
        %v1029 = vshrl.u32 %v1024, 16
        %vm1030 = vc.u32 %v1022, %v1026
        %v1031 = vsel %vm1030, 1, 0
        %v1032 = vadd.s32 %v1022, %v1026
        %v1033 = vadd.s32 %v1025, %v1031
        %vm1034 = vc.u32 %v1032, %v1028
        %v1035 = vsel %vm1034, 1, 0
        %v1036 = vadd.s32 %v1032, %v1028
        %v1037 = vadd.s32 %v1033, %v1035
        %v1038 = vadd.s32 %v1037, %v1027
        %v1039 = vadd.s32 %v1038, %v1029
        %v1040 = vmul.u32 %v995, %v986
        %v1041 = vadd.s32 %v1017, %v1036
        %vm1042 = vc.u32 %v1017, %v1036
        %v1043 = vadd.s32 %v1039, 1
        %v1044 = vsel %vm1042, %v1043, %v1039
        %v1045 = vadd.s32 %v1040, %v1044
        %v1046 = vadd.s32 %v1045, 536870912
        %v1047 = vshrl.u32 %v1046, 30
        %v1048 = vshll.u32 %v1047, 30
        %v1049 = vsub.s32 %v1045, %v1048
        %vm1050 = vcmp.lt.s32.totalorder %v1049, 0
        %v1051 = vsub.s32 0, %v1049
        %v1052 = vsel %vm1050, %v1051, %v1049
        %v1053 = vclz %v1052
        %v1054 = vsub.s32 %v1053, 2
        %vm1055 = vcmp.gt.s32.totalorder 0, %v1054
        %v1056 = vsel %vm1055, 0, %v1054
        %v1057 = vsub.s32 32, %v1056
        %v1058 = vshll.u32 %v1049, %v1056
        %v1059 = vshrl.u32 %v1041, %v1057
        %v1060 = vor.u32 %v1058, %v1059
        %v1061 = vsub.s32 4294967266, %v1056
        %v1062 = vadd.s32 %v1061, 127
        %v1063 = vshll.u32 %v1062, 23
        %v1064 = vor.u32 4788187, %v1063
        %v1065 = vand.u32 2147483647, %v1064
        %v1067 = vcvt.s32.f32 %v1060
        %v1068 = vmul.f32 %v1067, %v1065
        %v1069 = vxor.u32 %v1068, 2147483648
        %v1070 = vsel %vm949, %v1069, %v1068
        %v1071 = vsub.s32 4, %v1047
        %v1072 = vsel %vm949, %v1071, %v1047
        %v1073 = vsel %vm948, %v315, %v1070
        %v1074 = vsel %vm948, 0, %v1072
        %v1075 = vmul.f32 %v1073, %v1073
        %v1076 = vmul.f32 %v1075, -0.001358992
        %v1077 = vadd.f32 %v1076, 0.041655596
        %v1078 = vmul.f32 %v1075, %v1077
        %v1079 = vadd.f32 %v1078, -0.4999988
        %v1080 = vmul.f32 %v1075, %v1079
        %v1081 = vadd.f32 1.0, %v1080
        %v1082 = vmul.f32 %v1073, %v1073
        %v1083 = vmul.f32 %v1082, -0.00019511016
        %v1084 = vadd.f32 %v1083, 0.008332121
        %v1085 = vmul.f32 %v1082, %v1084
        %v1086 = vadd.f32 %v1085, -0.16666654
        %v1087 = vmul.f32 %v1082, %v1086
        %v1088 = vadd.f32 %v1087, 1.0
        %v1089 = vmul.f32 %v1088, %v1073
        %vm1090 = vweird.f32 %v315
        %v1091 = vadd.s32 %v1074, 3
        %v1092 = vand.u32 %v1091, 3
        %vm1093 = vcmp.lt.s32.totalorder %v1092, 2
        %vm1094 = vcmp.eq.s32.totalorder %v1092, 0
        %v1095 = vxor.u32 %v1089, 2147483648
        %v1096 = vsel %vm1094, %v1081, %v1095
        %vm1097 = vcmp.eq.s32.totalorder %v1092, 2
        %v1098 = vxor.u32 %v1081, 2147483648
        %v1099 = vsel %vm1097, %v1098, %v1089
        %v1100 = vsel %vm1093, %v1096, %v1099
        %v1101 = vsel %vm1090, nan, %v1100
        %v1102 = vand.u32 2147483647, %v316
        %vm1103 = vcmp.le.f32.partialorder %v1102, 0.7853982
        %vm1104 = vcmp.lt.s32.totalorder %v316, 0
        %v1105 = vand.u32 %v316, 2139095040
        %v1106 = vshrl.u32 %v1105, 23
        %v1107 = vsub.s32 %v1106, 127
        %v1108 = vand.u32 2147483647, %v316
        %v1109 = vand.u32 %v1108, 8388607
        %v1110 = vor.u32 %v1109, 8388608
        %v1111 = vsub.s32 0, %v1110
        %v1112 = vadd.s32 %v1107, 1
        %vm1113 = vcmp.gt.s32.totalorder %v1112, 0
        %v1114 = vsel %vm1113, %v1112, 0
        %v1115 = vshrl.u32 %v1114, 5
        %v1116 = vand.u32 %v1114, 31
        %v1117 = vsub.s32 32, %v1116
        %v1118 = vshrl.u32 683565275, %v1117
        %v1119 = vshll.u32 683565275, %v1116
        %v1120 = vshrl.u32 2475754826, %v1117
        %v1121 = vor.u32 %v1119, %v1120
        %v1122 = vshll.u32 2475754826, %v1116
        %v1123 = vshrl.u32 2131351028, %v1117
        %v1124 = vor.u32 %v1122, %v1123
        %v1125 = vshll.u32 2131351028, %v1116
        %v1126 = vshrl.u32 2102212464, %v1117
        %v1127 = vor.u32 %v1125, %v1126
        %v1128 = vshll.u32 2102212464, %v1116
        %v1129 = vshrl.u32 920167782, %v1117
        %v1130 = vor.u32 %v1128, %v1129
        %v1131 = vshll.u32 920167782, %v1116
        %v1132 = vshrl.u32 1326507024, %v1117
        %v1133 = vor.u32 %v1131, %v1132
        %vm1134 = vcmp.lt.s32.totalorder %v1115, 1
        %vm1135 = vcmp.lt.s32.totalorder %v1115, 2
        %vm1136 = vcmp.lt.s32.totalorder %v1115, 3
        %vm1137 = vcmp.lt.s32.totalorder %v1115, 4
        %v1138 = vsel %vm1134, %v1118, %v1121
        %v1139 = vsel %vm1137, %v1127, 2102212464
        %v1140 = vsel %vm1136, %v1124, %v1139
        %v1141 = vsel %vm1135, %v1138, %v1140
        %v1142 = vsel %vm1134, %v1121, %v1124
        %v1143 = vsel %vm1137, %v1130, 920167782
        %v1144 = vsel %vm1136, %v1127, %v1143
        %v1145 = vsel %vm1135, %v1142, %v1144
        %v1146 = vsel %vm1134, %v1124, %v1127
        %v1147 = vsel %vm1137, %v1133, 1326507024
        %v1148 = vsel %vm1136, %v1130, %v1147
        %v1149 = vsel %vm1135, %v1146, %v1148
        %v1150 = vshll.u32 %v1110, 8
        %v1151 = vand.u32 %v1150, 65535
        %v1152 = vshrl.u32 %v1150, 16
        %v1153 = vand.u32 %v1149, 65535
        %v1154 = vshrl.u32 %v1149, 16
        %v1155 = vmul.u32 %v1151, %v1153
        %v1156 = vmul.u32 %v1151, %v1154
        %v1157 = vmul.u32 %v1152, %v1153
        %v1158 = vmul.u32 %v1152, %v1154
        %v1159 = vshll.u32 %v1156, 16
        %v1160 = vshrl.u32 %v1156, 16
        %v1161 = vshll.u32 %v1157, 16
        %v1162 = vshrl.u32 %v1157, 16
        %vm1163 = vc.u32 %v1155, %v1159
        %v1164 = vsel %vm1163, 1, 0
        %v1165 = vadd.s32 %v1155, %v1159
        %v1166 = vadd.s32 %v1158, %v1164
        %vm1167 = vc.u32 %v1165, %v1161
        %v1168 = vsel %vm1167, 1, 0
        %v1169 = vadd.s32 %v1165, %v1161
        %v1170 = vadd.s32 %v1166, %v1168
        %v1171 = vadd.s32 %v1170, %v1160
        %v1172 = vadd.s32 %v1171, %v1162
        %v1173 = vand.u32 %v1150, 65535
        %v1174 = vshrl.u32 %v1150, 16
        %v1175 = vand.u32 %v1145, 65535
        %v1176 = vshrl.u32 %v1145, 16
        %v1177 = vmul.u32 %v1173, %v1175
        %v1178 = vmul.u32 %v1173, %v1176
        %v1179 = vmul.u32 %v1174, %v1175
        %v1180 = vmul.u32 %v1174, %v1176
        %v1181 = vshll.u32 %v1178, 16
        %v1182 = vshrl.u32 %v1178, 16
        %v1183 = vshll.u32 %v1179, 16
        %v1184 = vshrl.u32 %v1179, 16
        %vm1185 = vc.u32 %v1177, %v1181
        %v1186 = vsel %vm1185, 1, 0
        %v1187 = vadd.s32 %v1177, %v1181
        %v1188 = vadd.s32 %v1180, %v1186
        %vm1189 = vc.u32 %v1187, %v1183
        %v1190 = vsel %vm1189, 1, 0
        %v1191 = vadd.s32 %v1187, %v1183
        %v1192 = vadd.s32 %v1188, %v1190
        %v1193 = vadd.s32 %v1192, %v1182
        %v1194 = vadd.s32 %v1193, %v1184
        %v1195 = vmul.u32 %v1150, %v1141
        %v1196 = vadd.s32 %v1172, %v1191
        %vm1197 = vc.u32 %v1172, %v1191
        %v1198 = vadd.s32 %v1194, 1
        %v1199 = vsel %vm1197, %v1198, %v1194
        %v1200 = vadd.s32 %v1195, %v1199
        %v1201 = vadd.s32 %v1200, 536870912
        %v1202 = vshrl.u32 %v1201, 30
        %v1203 = vshll.u32 %v1202, 30
        %v1204 = vsub.s32 %v1200, %v1203
        %vm1205 = vcmp.lt.s32.totalorder %v1204, 0
        %v1206 = vsub.s32 0, %v1204
        %v1207 = vsel %vm1205, %v1206, %v1204
        %v1208 = vclz %v1207
        %v1209 = vsub.s32 %v1208, 2
        %vm1210 = vcmp.gt.s32.totalorder 0, %v1209
        %v1211 = vsel %vm1210, 0, %v1209
        %v1212 = vsub.s32 32, %v1211
        %v1213 = vshll.u32 %v1204, %v1211
        %v1214 = vshrl.u32 %v1196, %v1212
        %v1215 = vor.u32 %v1213, %v1214
        %v1216 = vsub.s32 4294967266, %v1211
        %v1217 = vadd.s32 %v1216, 127
        %v1218 = vshll.u32 %v1217, 23
        %v1219 = vor.u32 4788187, %v1218
        %v1220 = vand.u32 2147483647, %v1219
        %v1222 = vcvt.s32.f32 %v1215
        %v1223 = vmul.f32 %v1222, %v1220
        %v1224 = vxor.u32 %v1223, 2147483648
        %v1225 = vsel %vm1104, %v1224, %v1223
        %v1226 = vsub.s32 4, %v1202
        %v1227 = vsel %vm1104, %v1226, %v1202
        %v1228 = vsel %vm1103, %v316, %v1225
        %v1229 = vsel %vm1103, 0, %v1227
        %v1230 = vmul.f32 %v1228, %v1228
        %v1231 = vmul.f32 %v1230, -0.001358992
        %v1232 = vadd.f32 %v1231, 0.041655596
        %v1233 = vmul.f32 %v1230, %v1232
        %v1234 = vadd.f32 %v1233, -0.4999988
        %v1235 = vmul.f32 %v1230, %v1234
        %v1236 = vadd.f32 1.0, %v1235
        %v1237 = vmul.f32 %v1228, %v1228
        %v1238 = vmul.f32 %v1237, -0.00019511016
        %v1239 = vadd.f32 %v1238, 0.008332121
        %v1240 = vmul.f32 %v1237, %v1239
        %v1241 = vadd.f32 %v1240, -0.16666654
        %v1242 = vmul.f32 %v1237, %v1241
        %v1243 = vadd.f32 %v1242, 1.0
        %v1244 = vmul.f32 %v1243, %v1228
        %vm1245 = vweird.f32 %v316
        %v1246 = vadd.s32 %v1229, 3
        %v1247 = vand.u32 %v1246, 3
        %vm1248 = vcmp.lt.s32.totalorder %v1247, 2
        %vm1249 = vcmp.eq.s32.totalorder %v1247, 0
        %v1250 = vxor.u32 %v1244, 2147483648
        %v1251 = vsel %vm1249, %v1236, %v1250
        %vm1252 = vcmp.eq.s32.totalorder %v1247, 2
        %v1253 = vxor.u32 %v1236, 2147483648
        %v1254 = vsel %vm1252, %v1253, %v1244
        %v1255 = vsel %vm1248, %v1251, %v1254
        %v1256 = vsel %vm1245, nan, %v1255
        %v1257 = vand.u32 2147483647, %v317
        %vm1258 = vcmp.le.f32.partialorder %v1257, 0.7853982
        %vm1259 = vcmp.lt.s32.totalorder %v317, 0
        %v1260 = vand.u32 %v317, 2139095040
        %v1261 = vshrl.u32 %v1260, 23
        %v1262 = vsub.s32 %v1261, 127
        %v1263 = vand.u32 2147483647, %v317
        %v1264 = vand.u32 %v1263, 8388607
        %v1265 = vor.u32 %v1264, 8388608
        %v1266 = vsub.s32 0, %v1265
        %v1267 = vadd.s32 %v1262, 1
        %vm1268 = vcmp.gt.s32.totalorder %v1267, 0
        %v1269 = vsel %vm1268, %v1267, 0
        %v1270 = vshrl.u32 %v1269, 5
        %v1271 = vand.u32 %v1269, 31
        %v1272 = vsub.s32 32, %v1271
        %v1273 = vshrl.u32 683565275, %v1272
        %v1274 = vshll.u32 683565275, %v1271
        %v1275 = vshrl.u32 2475754826, %v1272
        %v1276 = vor.u32 %v1274, %v1275
        %v1277 = vshll.u32 2475754826, %v1271
        %v1278 = vshrl.u32 2131351028, %v1272
        %v1279 = vor.u32 %v1277, %v1278
        %v1280 = vshll.u32 2131351028, %v1271
        %v1281 = vshrl.u32 2102212464, %v1272
        %v1282 = vor.u32 %v1280, %v1281
        %v1283 = vshll.u32 2102212464, %v1271
        %v1284 = vshrl.u32 920167782, %v1272
        %v1285 = vor.u32 %v1283, %v1284
        %v1286 = vshll.u32 920167782, %v1271
        %v1287 = vshrl.u32 1326507024, %v1272
        %v1288 = vor.u32 %v1286, %v1287
        %vm1289 = vcmp.lt.s32.totalorder %v1270, 1
        %vm1290 = vcmp.lt.s32.totalorder %v1270, 2
        %vm1291 = vcmp.lt.s32.totalorder %v1270, 3
        %vm1292 = vcmp.lt.s32.totalorder %v1270, 4
        %v1293 = vsel %vm1289, %v1273, %v1276
        %v1294 = vsel %vm1292, %v1282, 2102212464
        %v1295 = vsel %vm1291, %v1279, %v1294
        %v1296 = vsel %vm1290, %v1293, %v1295
        %v1297 = vsel %vm1289, %v1276, %v1279
        %v1298 = vsel %vm1292, %v1285, 920167782
        %v1299 = vsel %vm1291, %v1282, %v1298
        %v1300 = vsel %vm1290, %v1297, %v1299
        %v1301 = vsel %vm1289, %v1279, %v1282
        %v1302 = vsel %vm1292, %v1288, 1326507024
        %v1303 = vsel %vm1291, %v1285, %v1302
        %v1304 = vsel %vm1290, %v1301, %v1303
        %v1305 = vshll.u32 %v1265, 8
        %v1306 = vand.u32 %v1305, 65535
        %v1307 = vshrl.u32 %v1305, 16
        %v1308 = vand.u32 %v1304, 65535
        %v1309 = vshrl.u32 %v1304, 16
        %v1310 = vmul.u32 %v1306, %v1308
        %v1311 = vmul.u32 %v1306, %v1309
        %v1312 = vmul.u32 %v1307, %v1308
        %v1313 = vmul.u32 %v1307, %v1309
        %v1314 = vshll.u32 %v1311, 16
        %v1315 = vshrl.u32 %v1311, 16
        %v1316 = vshll.u32 %v1312, 16
        %v1317 = vshrl.u32 %v1312, 16
        %vm1318 = vc.u32 %v1310, %v1314
        %v1319 = vsel %vm1318, 1, 0
        %v1320 = vadd.s32 %v1310, %v1314
        %v1321 = vadd.s32 %v1313, %v1319
        %vm1322 = vc.u32 %v1320, %v1316
        %v1323 = vsel %vm1322, 1, 0
        %v1324 = vadd.s32 %v1320, %v1316
        %v1325 = vadd.s32 %v1321, %v1323
        %v1326 = vadd.s32 %v1325, %v1315
        %v1327 = vadd.s32 %v1326, %v1317
        %v1328 = vand.u32 %v1305, 65535
        %v1329 = vshrl.u32 %v1305, 16
        %v1330 = vand.u32 %v1300, 65535
        %v1331 = vshrl.u32 %v1300, 16
        %v1332 = vmul.u32 %v1328, %v1330
        %v1333 = vmul.u32 %v1328, %v1331
        %v1334 = vmul.u32 %v1329, %v1330
        %v1335 = vmul.u32 %v1329, %v1331
        %v1336 = vshll.u32 %v1333, 16
        %v1337 = vshrl.u32 %v1333, 16
        %v1338 = vshll.u32 %v1334, 16
        %v1339 = vshrl.u32 %v1334, 16
        %vm1340 = vc.u32 %v1332, %v1336
        %v1341 = vsel %vm1340, 1, 0
        %v1342 = vadd.s32 %v1332, %v1336
        %v1343 = vadd.s32 %v1335, %v1341
        %vm1344 = vc.u32 %v1342, %v1338
        %v1345 = vsel %vm1344, 1, 0
        %v1346 = vadd.s32 %v1342, %v1338
        %v1347 = vadd.s32 %v1343, %v1345
        %v1348 = vadd.s32 %v1347, %v1337
        %v1349 = vadd.s32 %v1348, %v1339
        %v1350 = vmul.u32 %v1305, %v1296
        %v1351 = vadd.s32 %v1327, %v1346
        %vm1352 = vc.u32 %v1327, %v1346
        %v1353 = vadd.s32 %v1349, 1
        %v1354 = vsel %vm1352, %v1353, %v1349
        %v1355 = vadd.s32 %v1350, %v1354
        %v1356 = vadd.s32 %v1355, 536870912
        %v1357 = vshrl.u32 %v1356, 30
        %v1358 = vshll.u32 %v1357, 30
        %v1359 = vsub.s32 %v1355, %v1358
        %vm1360 = vcmp.lt.s32.totalorder %v1359, 0
        %v1361 = vsub.s32 0, %v1359
        %v1362 = vsel %vm1360, %v1361, %v1359
        %v1363 = vclz %v1362
        %v1364 = vsub.s32 %v1363, 2
        %vm1365 = vcmp.gt.s32.totalorder 0, %v1364
        %v1366 = vsel %vm1365, 0, %v1364
        %v1367 = vsub.s32 32, %v1366
        %v1368 = vshll.u32 %v1359, %v1366
        %v1369 = vshrl.u32 %v1351, %v1367
        %v1370 = vor.u32 %v1368, %v1369
        %v1371 = vsub.s32 4294967266, %v1366
        %v1372 = vadd.s32 %v1371, 127
        %v1373 = vshll.u32 %v1372, 23
        %v1374 = vor.u32 4788187, %v1373
        %v1375 = vand.u32 2147483647, %v1374
        %v1377 = vcvt.s32.f32 %v1370
        %v1378 = vmul.f32 %v1377, %v1375
        %v1379 = vxor.u32 %v1378, 2147483648
        %v1380 = vsel %vm1259, %v1379, %v1378
        %v1381 = vsub.s32 4, %v1357
        %v1382 = vsel %vm1259, %v1381, %v1357
        %v1383 = vsel %vm1258, %v317, %v1380
        %v1384 = vsel %vm1258, 0, %v1382
        %v1385 = vmul.f32 %v1383, %v1383
        %v1386 = vmul.f32 %v1385, -0.001358992
        %v1387 = vadd.f32 %v1386, 0.041655596
        %v1388 = vmul.f32 %v1385, %v1387
        %v1389 = vadd.f32 %v1388, -0.4999988
        %v1390 = vmul.f32 %v1385, %v1389
        %v1391 = vadd.f32 1.0, %v1390
        %v1392 = vmul.f32 %v1383, %v1383
        %v1393 = vmul.f32 %v1392, -0.00019511016
        %v1394 = vadd.f32 %v1393, 0.008332121
        %v1395 = vmul.f32 %v1392, %v1394
        %v1396 = vadd.f32 %v1395, -0.16666654
        %v1397 = vmul.f32 %v1392, %v1396
        %v1398 = vadd.f32 %v1397, 1.0
        %v1399 = vmul.f32 %v1398, %v1383
        %vm1400 = vweird.f32 %v317
        %v1401 = vadd.s32 %v1384, 3
        %v1402 = vand.u32 %v1401, 3
        %vm1403 = vcmp.lt.s32.totalorder %v1402, 2
        %vm1404 = vcmp.eq.s32.totalorder %v1402, 0
        %v1405 = vxor.u32 %v1399, 2147483648
        %v1406 = vsel %vm1404, %v1391, %v1405
        %vm1407 = vcmp.eq.s32.totalorder %v1402, 2
        %v1408 = vxor.u32 %v1391, 2147483648
        %v1409 = vsel %vm1407, %v1408, %v1399
        %v1410 = vsel %vm1403, %v1406, %v1409
        %v1411 = vsel %vm1400, nan, %v1410
        %v1412 = vand.u32 2147483647, %v318
        %vm1413 = vcmp.le.f32.partialorder %v1412, 0.7853982
        %vm1414 = vcmp.lt.s32.totalorder %v318, 0
        %v1415 = vand.u32 %v318, 2139095040
        %v1416 = vshrl.u32 %v1415, 23
        %v1417 = vsub.s32 %v1416, 127
        %v1418 = vand.u32 2147483647, %v318
        %v1419 = vand.u32 %v1418, 8388607
        %v1420 = vor.u32 %v1419, 8388608
        %v1421 = vsub.s32 0, %v1420
        %v1422 = vadd.s32 %v1417, 1
        %vm1423 = vcmp.gt.s32.totalorder %v1422, 0
        %v1424 = vsel %vm1423, %v1422, 0
        %v1425 = vshrl.u32 %v1424, 5
        %v1426 = vand.u32 %v1424, 31
        %v1427 = vsub.s32 32, %v1426
        %v1428 = vshrl.u32 683565275, %v1427
        %v1429 = vshll.u32 683565275, %v1426
        %v1430 = vshrl.u32 2475754826, %v1427
        %v1431 = vor.u32 %v1429, %v1430
        %v1432 = vshll.u32 2475754826, %v1426
        %v1433 = vshrl.u32 2131351028, %v1427
        %v1434 = vor.u32 %v1432, %v1433
        %v1435 = vshll.u32 2131351028, %v1426
        %v1436 = vshrl.u32 2102212464, %v1427
        %v1437 = vor.u32 %v1435, %v1436
        %v1438 = vshll.u32 2102212464, %v1426
        %v1439 = vshrl.u32 920167782, %v1427
        %v1440 = vor.u32 %v1438, %v1439
        %v1441 = vshll.u32 920167782, %v1426
        %v1442 = vshrl.u32 1326507024, %v1427
        %v1443 = vor.u32 %v1441, %v1442
        %vm1444 = vcmp.lt.s32.totalorder %v1425, 1
        %vm1445 = vcmp.lt.s32.totalorder %v1425, 2
        %vm1446 = vcmp.lt.s32.totalorder %v1425, 3
        %vm1447 = vcmp.lt.s32.totalorder %v1425, 4
        %v1448 = vsel %vm1444, %v1428, %v1431
        %v1449 = vsel %vm1447, %v1437, 2102212464
        %v1450 = vsel %vm1446, %v1434, %v1449
        %v1451 = vsel %vm1445, %v1448, %v1450
        %v1452 = vsel %vm1444, %v1431, %v1434
        %v1453 = vsel %vm1447, %v1440, 920167782
        %v1454 = vsel %vm1446, %v1437, %v1453
        %v1455 = vsel %vm1445, %v1452, %v1454
        %v1456 = vsel %vm1444, %v1434, %v1437
        %v1457 = vsel %vm1447, %v1443, 1326507024
        %v1458 = vsel %vm1446, %v1440, %v1457
        %v1459 = vsel %vm1445, %v1456, %v1458
        %v1460 = vshll.u32 %v1420, 8
        %v1461 = vand.u32 %v1460, 65535
        %v1462 = vshrl.u32 %v1460, 16
        %v1463 = vand.u32 %v1459, 65535
        %v1464 = vshrl.u32 %v1459, 16
        %v1465 = vmul.u32 %v1461, %v1463
        %v1466 = vmul.u32 %v1461, %v1464
        %v1467 = vmul.u32 %v1462, %v1463
        %v1468 = vmul.u32 %v1462, %v1464
        %v1469 = vshll.u32 %v1466, 16
        %v1470 = vshrl.u32 %v1466, 16
        %v1471 = vshll.u32 %v1467, 16
        %v1472 = vshrl.u32 %v1467, 16
        %vm1473 = vc.u32 %v1465, %v1469
        %v1474 = vsel %vm1473, 1, 0
        %v1475 = vadd.s32 %v1465, %v1469
        %v1476 = vadd.s32 %v1468, %v1474
        %vm1477 = vc.u32 %v1475, %v1471
        %v1478 = vsel %vm1477, 1, 0
        %v1479 = vadd.s32 %v1475, %v1471
        %v1480 = vadd.s32 %v1476, %v1478
        %v1481 = vadd.s32 %v1480, %v1470
        %v1482 = vadd.s32 %v1481, %v1472
        %v1483 = vand.u32 %v1460, 65535
        %v1484 = vshrl.u32 %v1460, 16
        %v1485 = vand.u32 %v1455, 65535
        %v1486 = vshrl.u32 %v1455, 16
        %v1487 = vmul.u32 %v1483, %v1485
        %v1488 = vmul.u32 %v1483, %v1486
        %v1489 = vmul.u32 %v1484, %v1485
        %v1490 = vmul.u32 %v1484, %v1486
        %v1491 = vshll.u32 %v1488, 16
        %v1492 = vshrl.u32 %v1488, 16
        %v1493 = vshll.u32 %v1489, 16
        %v1494 = vshrl.u32 %v1489, 16
        %vm1495 = vc.u32 %v1487, %v1491
        %v1496 = vsel %vm1495, 1, 0
        %v1497 = vadd.s32 %v1487, %v1491
        %v1498 = vadd.s32 %v1490, %v1496
        %vm1499 = vc.u32 %v1497, %v1493
        %v1500 = vsel %vm1499, 1, 0
        %v1501 = vadd.s32 %v1497, %v1493
        %v1502 = vadd.s32 %v1498, %v1500
        %v1503 = vadd.s32 %v1502, %v1492
        %v1504 = vadd.s32 %v1503, %v1494
        %v1505 = vmul.u32 %v1460, %v1451
        %v1506 = vadd.s32 %v1482, %v1501
        %vm1507 = vc.u32 %v1482, %v1501
        %v1508 = vadd.s32 %v1504, 1
        %v1509 = vsel %vm1507, %v1508, %v1504
        %v1510 = vadd.s32 %v1505, %v1509
        %v1511 = vadd.s32 %v1510, 536870912
        %v1512 = vshrl.u32 %v1511, 30
        %v1513 = vshll.u32 %v1512, 30
        %v1514 = vsub.s32 %v1510, %v1513
        %vm1515 = vcmp.lt.s32.totalorder %v1514, 0
        %v1516 = vsub.s32 0, %v1514
        %v1517 = vsel %vm1515, %v1516, %v1514
        %v1518 = vclz %v1517
        %v1519 = vsub.s32 %v1518, 2
        %vm1520 = vcmp.gt.s32.totalorder 0, %v1519
        %v1521 = vsel %vm1520, 0, %v1519
        %v1522 = vsub.s32 32, %v1521
        %v1523 = vshll.u32 %v1514, %v1521
        %v1524 = vshrl.u32 %v1506, %v1522
        %v1525 = vor.u32 %v1523, %v1524
        %v1526 = vsub.s32 4294967266, %v1521
        %v1527 = vadd.s32 %v1526, 127
        %v1528 = vshll.u32 %v1527, 23
        %v1529 = vor.u32 4788187, %v1528
        %v1530 = vand.u32 2147483647, %v1529
        %v1532 = vcvt.s32.f32 %v1525
        %v1533 = vmul.f32 %v1532, %v1530
        %v1534 = vxor.u32 %v1533, 2147483648
        %v1535 = vsel %vm1414, %v1534, %v1533
        %v1536 = vsub.s32 4, %v1512
        %v1537 = vsel %vm1414, %v1536, %v1512
        %v1538 = vsel %vm1413, %v318, %v1535
        %v1539 = vsel %vm1413, 0, %v1537
        %v1540 = vmul.f32 %v1538, %v1538
        %v1541 = vmul.f32 %v1540, -0.001358992
        %v1542 = vadd.f32 %v1541, 0.041655596
        %v1543 = vmul.f32 %v1540, %v1542
        %v1544 = vadd.f32 %v1543, -0.4999988
        %v1545 = vmul.f32 %v1540, %v1544
        %v1546 = vadd.f32 1.0, %v1545
        %v1547 = vmul.f32 %v1538, %v1538
        %v1548 = vmul.f32 %v1547, -0.00019511016
        %v1549 = vadd.f32 %v1548, 0.008332121
        %v1550 = vmul.f32 %v1547, %v1549
        %v1551 = vadd.f32 %v1550, -0.16666654
        %v1552 = vmul.f32 %v1547, %v1551
        %v1553 = vadd.f32 %v1552, 1.0
        %v1554 = vmul.f32 %v1553, %v1538
        %vm1555 = vweird.f32 %v318
        %v1556 = vadd.s32 %v1539, 3
        %v1557 = vand.u32 %v1556, 3
        %vm1558 = vcmp.lt.s32.totalorder %v1557, 2
        %vm1559 = vcmp.eq.s32.totalorder %v1557, 0
        %v1560 = vxor.u32 %v1554, 2147483648
        %v1561 = vsel %vm1559, %v1546, %v1560
        %vm1562 = vcmp.eq.s32.totalorder %v1557, 2
        %v1563 = vxor.u32 %v1546, 2147483648
        %v1564 = vsel %vm1562, %v1563, %v1554
        %v1565 = vsel %vm1558, %v1561, %v1564
        %v1566 = vsel %vm1555, nan, %v1565
        %v1567 = vand.u32 2147483647, %v319
        %vm1568 = vcmp.le.f32.partialorder %v1567, 0.7853982
        %vm1569 = vcmp.lt.s32.totalorder %v319, 0
        %v1570 = vand.u32 %v319, 2139095040
        %v1571 = vshrl.u32 %v1570, 23
        %v1572 = vsub.s32 %v1571, 127
        %v1573 = vand.u32 2147483647, %v319
        %v1574 = vand.u32 %v1573, 8388607
        %v1575 = vor.u32 %v1574, 8388608
        %v1576 = vsub.s32 0, %v1575
        %v1577 = vadd.s32 %v1572, 1
        %vm1578 = vcmp.gt.s32.totalorder %v1577, 0
        %v1579 = vsel %vm1578, %v1577, 0
        %v1580 = vshrl.u32 %v1579, 5
        %v1581 = vand.u32 %v1579, 31
        %v1582 = vsub.s32 32, %v1581
        %v1583 = vshrl.u32 683565275, %v1582
        %v1584 = vshll.u32 683565275, %v1581
        %v1585 = vshrl.u32 2475754826, %v1582
        %v1586 = vor.u32 %v1584, %v1585
        %v1587 = vshll.u32 2475754826, %v1581
        %v1588 = vshrl.u32 2131351028, %v1582
        %v1589 = vor.u32 %v1587, %v1588
        %v1590 = vshll.u32 2131351028, %v1581
        %v1591 = vshrl.u32 2102212464, %v1582
        %v1592 = vor.u32 %v1590, %v1591
        %v1593 = vshll.u32 2102212464, %v1581
        %v1594 = vshrl.u32 920167782, %v1582
        %v1595 = vor.u32 %v1593, %v1594
        %v1596 = vshll.u32 920167782, %v1581
        %v1597 = vshrl.u32 1326507024, %v1582
        %v1598 = vor.u32 %v1596, %v1597
        %vm1599 = vcmp.lt.s32.totalorder %v1580, 1
        %vm1600 = vcmp.lt.s32.totalorder %v1580, 2
        %vm1601 = vcmp.lt.s32.totalorder %v1580, 3
        %vm1602 = vcmp.lt.s32.totalorder %v1580, 4
        %v1603 = vsel %vm1599, %v1583, %v1586
        %v1604 = vsel %vm1602, %v1592, 2102212464
        %v1605 = vsel %vm1601, %v1589, %v1604
        %v1606 = vsel %vm1600, %v1603, %v1605
        %v1607 = vsel %vm1599, %v1586, %v1589
        %v1608 = vsel %vm1602, %v1595, 920167782
        %v1609 = vsel %vm1601, %v1592, %v1608
        %v1610 = vsel %vm1600, %v1607, %v1609
        %v1611 = vsel %vm1599, %v1589, %v1592
        %v1612 = vsel %vm1602, %v1598, 1326507024
        %v1613 = vsel %vm1601, %v1595, %v1612
        %v1614 = vsel %vm1600, %v1611, %v1613
        %v1615 = vshll.u32 %v1575, 8
        %v1616 = vand.u32 %v1615, 65535
        %v1617 = vshrl.u32 %v1615, 16
        %v1618 = vand.u32 %v1614, 65535
        %v1619 = vshrl.u32 %v1614, 16
        %v1620 = vmul.u32 %v1616, %v1618
        %v1621 = vmul.u32 %v1616, %v1619
        %v1622 = vmul.u32 %v1617, %v1618
        %v1623 = vmul.u32 %v1617, %v1619
        %v1624 = vshll.u32 %v1621, 16
        %v1625 = vshrl.u32 %v1621, 16
        %v1626 = vshll.u32 %v1622, 16
        %v1627 = vshrl.u32 %v1622, 16
        %vm1628 = vc.u32 %v1620, %v1624
        %v1629 = vsel %vm1628, 1, 0
        %v1630 = vadd.s32 %v1620, %v1624
        %v1631 = vadd.s32 %v1623, %v1629
        %vm1632 = vc.u32 %v1630, %v1626
        %v1633 = vsel %vm1632, 1, 0
        %v1634 = vadd.s32 %v1630, %v1626
        %v1635 = vadd.s32 %v1631, %v1633
        %v1636 = vadd.s32 %v1635, %v1625
        %v1637 = vadd.s32 %v1636, %v1627
        %v1638 = vand.u32 %v1615, 65535
        %v1639 = vshrl.u32 %v1615, 16
        %v1640 = vand.u32 %v1610, 65535
        %v1641 = vshrl.u32 %v1610, 16
        %v1642 = vmul.u32 %v1638, %v1640
        %v1643 = vmul.u32 %v1638, %v1641
        %v1644 = vmul.u32 %v1639, %v1640
        %v1645 = vmul.u32 %v1639, %v1641
        %v1646 = vshll.u32 %v1643, 16
        %v1647 = vshrl.u32 %v1643, 16
        %v1648 = vshll.u32 %v1644, 16
        %v1649 = vshrl.u32 %v1644, 16
        %vm1650 = vc.u32 %v1642, %v1646
        %v1651 = vsel %vm1650, 1, 0
        %v1652 = vadd.s32 %v1642, %v1646
        %v1653 = vadd.s32 %v1645, %v1651
        %vm1654 = vc.u32 %v1652, %v1648
        %v1655 = vsel %vm1654, 1, 0
        %v1656 = vadd.s32 %v1652, %v1648
        %v1657 = vadd.s32 %v1653, %v1655
        %v1658 = vadd.s32 %v1657, %v1647
        %v1659 = vadd.s32 %v1658, %v1649
        %v1660 = vmul.u32 %v1615, %v1606
        %v1661 = vadd.s32 %v1637, %v1656
        %vm1662 = vc.u32 %v1637, %v1656
        %v1663 = vadd.s32 %v1659, 1
        %v1664 = vsel %vm1662, %v1663, %v1659
        %v1665 = vadd.s32 %v1660, %v1664
        %v1666 = vadd.s32 %v1665, 536870912
        %v1667 = vshrl.u32 %v1666, 30
        %v1668 = vshll.u32 %v1667, 30
        %v1669 = vsub.s32 %v1665, %v1668
        %vm1670 = vcmp.lt.s32.totalorder %v1669, 0
        %v1671 = vsub.s32 0, %v1669
        %v1672 = vsel %vm1670, %v1671, %v1669
        %v1673 = vclz %v1672
        %v1674 = vsub.s32 %v1673, 2
        %vm1675 = vcmp.gt.s32.totalorder 0, %v1674
        %v1676 = vsel %vm1675, 0, %v1674
        %v1677 = vsub.s32 32, %v1676
        %v1678 = vshll.u32 %v1669, %v1676
        %v1679 = vshrl.u32 %v1661, %v1677
        %v1680 = vor.u32 %v1678, %v1679
        %v1681 = vsub.s32 4294967266, %v1676
        %v1682 = vadd.s32 %v1681, 127
        %v1683 = vshll.u32 %v1682, 23
        %v1684 = vor.u32 4788187, %v1683
        %v1685 = vand.u32 2147483647, %v1684
        %v1687 = vcvt.s32.f32 %v1680
        %v1688 = vmul.f32 %v1687, %v1685
        %v1689 = vxor.u32 %v1688, 2147483648
        %v1690 = vsel %vm1569, %v1689, %v1688
        %v1691 = vsub.s32 4, %v1667
        %v1692 = vsel %vm1569, %v1691, %v1667
        %v1693 = vsel %vm1568, %v319, %v1690
        %v1694 = vsel %vm1568, 0, %v1692
        %v1695 = vmul.f32 %v1693, %v1693
        %v1696 = vmul.f32 %v1695, -0.001358992
        %v1697 = vadd.f32 %v1696, 0.041655596
        %v1698 = vmul.f32 %v1695, %v1697
        %v1699 = vadd.f32 %v1698, -0.4999988
        %v1700 = vmul.f32 %v1695, %v1699
        %v1701 = vadd.f32 1.0, %v1700
        %v1702 = vmul.f32 %v1693, %v1693
        %v1703 = vmul.f32 %v1702, -0.00019511016
        %v1704 = vadd.f32 %v1703, 0.008332121
        %v1705 = vmul.f32 %v1702, %v1704
        %v1706 = vadd.f32 %v1705, -0.16666654
        %v1707 = vmul.f32 %v1702, %v1706
        %v1708 = vadd.f32 %v1707, 1.0
        %v1709 = vmul.f32 %v1708, %v1693
        %vm1710 = vweird.f32 %v319
        %v1711 = vadd.s32 %v1694, 3
        %v1712 = vand.u32 %v1711, 3
        %vm1713 = vcmp.lt.s32.totalorder %v1712, 2
        %vm1714 = vcmp.eq.s32.totalorder %v1712, 0
        %v1715 = vxor.u32 %v1709, 2147483648
        %v1716 = vsel %vm1714, %v1701, %v1715
        %vm1717 = vcmp.eq.s32.totalorder %v1712, 2
        %v1718 = vxor.u32 %v1701, 2147483648
        %v1719 = vsel %vm1717, %v1718, %v1709
        %v1720 = vsel %vm1713, %v1716, %v1719
        %v1721 = vsel %vm1710, nan, %v1720
        %v1722 = vand.u32 2147483647, %v320
        %vm1723 = vcmp.le.f32.partialorder %v1722, 0.7853982
        %vm1724 = vcmp.lt.s32.totalorder %v320, 0
        %v1725 = vand.u32 %v320, 2139095040
        %v1726 = vshrl.u32 %v1725, 23
        %v1727 = vsub.s32 %v1726, 127
        %v1728 = vand.u32 2147483647, %v320
        %v1729 = vand.u32 %v1728, 8388607
        %v1730 = vor.u32 %v1729, 8388608
        %v1731 = vsub.s32 0, %v1730
        %v1732 = vadd.s32 %v1727, 1
        %vm1733 = vcmp.gt.s32.totalorder %v1732, 0
        %v1734 = vsel %vm1733, %v1732, 0
        %v1735 = vshrl.u32 %v1734, 5
        %v1736 = vand.u32 %v1734, 31
        %v1737 = vsub.s32 32, %v1736
        %v1738 = vshrl.u32 683565275, %v1737
        %v1739 = vshll.u32 683565275, %v1736
        %v1740 = vshrl.u32 2475754826, %v1737
        %v1741 = vor.u32 %v1739, %v1740
        %v1742 = vshll.u32 2475754826, %v1736
        %v1743 = vshrl.u32 2131351028, %v1737
        %v1744 = vor.u32 %v1742, %v1743
        %v1745 = vshll.u32 2131351028, %v1736
        %v1746 = vshrl.u32 2102212464, %v1737
        %v1747 = vor.u32 %v1745, %v1746
        %v1748 = vshll.u32 2102212464, %v1736
        %v1749 = vshrl.u32 920167782, %v1737
        %v1750 = vor.u32 %v1748, %v1749
        %v1751 = vshll.u32 920167782, %v1736
        %v1752 = vshrl.u32 1326507024, %v1737
        %v1753 = vor.u32 %v1751, %v1752
        %vm1754 = vcmp.lt.s32.totalorder %v1735, 1
        %vm1755 = vcmp.lt.s32.totalorder %v1735, 2
        %vm1756 = vcmp.lt.s32.totalorder %v1735, 3
        %vm1757 = vcmp.lt.s32.totalorder %v1735, 4
        %v1758 = vsel %vm1754, %v1738, %v1741
        %v1759 = vsel %vm1757, %v1747, 2102212464
        %v1760 = vsel %vm1756, %v1744, %v1759
        %v1761 = vsel %vm1755, %v1758, %v1760
        %v1762 = vsel %vm1754, %v1741, %v1744
        %v1763 = vsel %vm1757, %v1750, 920167782
        %v1764 = vsel %vm1756, %v1747, %v1763
        %v1765 = vsel %vm1755, %v1762, %v1764
        %v1766 = vsel %vm1754, %v1744, %v1747
        %v1767 = vsel %vm1757, %v1753, 1326507024
        %v1768 = vsel %vm1756, %v1750, %v1767
        %v1769 = vsel %vm1755, %v1766, %v1768
        %v1770 = vshll.u32 %v1730, 8
        %v1771 = vand.u32 %v1770, 65535
        %v1772 = vshrl.u32 %v1770, 16
        %v1773 = vand.u32 %v1769, 65535
        %v1774 = vshrl.u32 %v1769, 16
        %v1775 = vmul.u32 %v1771, %v1773
        %v1776 = vmul.u32 %v1771, %v1774
        %v1777 = vmul.u32 %v1772, %v1773
        %v1778 = vmul.u32 %v1772, %v1774
        %v1779 = vshll.u32 %v1776, 16
        %v1780 = vshrl.u32 %v1776, 16
        %v1781 = vshll.u32 %v1777, 16
        %v1782 = vshrl.u32 %v1777, 16
        %vm1783 = vc.u32 %v1775, %v1779
        %v1784 = vsel %vm1783, 1, 0
        %v1785 = vadd.s32 %v1775, %v1779
        %v1786 = vadd.s32 %v1778, %v1784
        %vm1787 = vc.u32 %v1785, %v1781
        %v1788 = vsel %vm1787, 1, 0
        %v1789 = vadd.s32 %v1785, %v1781
        %v1790 = vadd.s32 %v1786, %v1788
        %v1791 = vadd.s32 %v1790, %v1780
        %v1792 = vadd.s32 %v1791, %v1782
        %v1793 = vand.u32 %v1770, 65535
        %v1794 = vshrl.u32 %v1770, 16
        %v1795 = vand.u32 %v1765, 65535
        %v1796 = vshrl.u32 %v1765, 16
        %v1797 = vmul.u32 %v1793, %v1795
        %v1798 = vmul.u32 %v1793, %v1796
        %v1799 = vmul.u32 %v1794, %v1795
        %v1800 = vmul.u32 %v1794, %v1796
        %v1801 = vshll.u32 %v1798, 16
        %v1802 = vshrl.u32 %v1798, 16
        %v1803 = vshll.u32 %v1799, 16
        %v1804 = vshrl.u32 %v1799, 16
        %vm1805 = vc.u32 %v1797, %v1801
        %v1806 = vsel %vm1805, 1, 0
        %v1807 = vadd.s32 %v1797, %v1801
        %v1808 = vadd.s32 %v1800, %v1806
        %vm1809 = vc.u32 %v1807, %v1803
        %v1810 = vsel %vm1809, 1, 0
        %v1811 = vadd.s32 %v1807, %v1803
        %v1812 = vadd.s32 %v1808, %v1810
        %v1813 = vadd.s32 %v1812, %v1802
        %v1814 = vadd.s32 %v1813, %v1804
        %v1815 = vmul.u32 %v1770, %v1761
        %v1816 = vadd.s32 %v1792, %v1811
        %vm1817 = vc.u32 %v1792, %v1811
        %v1818 = vadd.s32 %v1814, 1
        %v1819 = vsel %vm1817, %v1818, %v1814
        %v1820 = vadd.s32 %v1815, %v1819
        %v1821 = vadd.s32 %v1820, 536870912
        %v1822 = vshrl.u32 %v1821, 30
        %v1823 = vshll.u32 %v1822, 30
        %v1824 = vsub.s32 %v1820, %v1823
        %vm1825 = vcmp.lt.s32.totalorder %v1824, 0
        %v1826 = vsub.s32 0, %v1824
        %v1827 = vsel %vm1825, %v1826, %v1824
        %v1828 = vclz %v1827
        %v1829 = vsub.s32 %v1828, 2
        %vm1830 = vcmp.gt.s32.totalorder 0, %v1829
        %v1831 = vsel %vm1830, 0, %v1829
        %v1832 = vsub.s32 32, %v1831
        %v1833 = vshll.u32 %v1824, %v1831
        %v1834 = vshrl.u32 %v1816, %v1832
        %v1835 = vor.u32 %v1833, %v1834
        %v1836 = vsub.s32 4294967266, %v1831
        %v1837 = vadd.s32 %v1836, 127
        %v1838 = vshll.u32 %v1837, 23
        %v1839 = vor.u32 4788187, %v1838
        %v1840 = vand.u32 2147483647, %v1839
        %v1842 = vcvt.s32.f32 %v1835
        %v1843 = vmul.f32 %v1842, %v1840
        %v1844 = vxor.u32 %v1843, 2147483648
        %v1845 = vsel %vm1724, %v1844, %v1843
        %v1846 = vsub.s32 4, %v1822
        %v1847 = vsel %vm1724, %v1846, %v1822
        %v1848 = vsel %vm1723, %v320, %v1845
        %v1849 = vsel %vm1723, 0, %v1847
        %v1850 = vmul.f32 %v1848, %v1848
        %v1851 = vmul.f32 %v1850, -0.001358992
        %v1852 = vadd.f32 %v1851, 0.041655596
        %v1853 = vmul.f32 %v1850, %v1852
        %v1854 = vadd.f32 %v1853, -0.4999988
        %v1855 = vmul.f32 %v1850, %v1854
        %v1856 = vadd.f32 1.0, %v1855
        %v1857 = vmul.f32 %v1848, %v1848
        %v1858 = vmul.f32 %v1857, -0.00019511016
        %v1859 = vadd.f32 %v1858, 0.008332121
        %v1860 = vmul.f32 %v1857, %v1859
        %v1861 = vadd.f32 %v1860, -0.16666654
        %v1862 = vmul.f32 %v1857, %v1861
        %v1863 = vadd.f32 %v1862, 1.0
        %v1864 = vmul.f32 %v1863, %v1848
        %vm1865 = vweird.f32 %v320
        %v1866 = vadd.s32 %v1849, 3
        %v1867 = vand.u32 %v1866, 3
        %vm1868 = vcmp.lt.s32.totalorder %v1867, 2
        %vm1869 = vcmp.eq.s32.totalorder %v1867, 0
        %v1870 = vxor.u32 %v1864, 2147483648
        %v1871 = vsel %vm1869, %v1856, %v1870
        %vm1872 = vcmp.eq.s32.totalorder %v1867, 2
        %v1873 = vxor.u32 %v1856, 2147483648
        %v1874 = vsel %vm1872, %v1873, %v1864
        %v1875 = vsel %vm1868, %v1871, %v1874
        %v1876 = vsel %vm1865, nan, %v1875
        %v1877 = vand.u32 2147483647, %v321
        %vm1878 = vcmp.le.f32.partialorder %v1877, 0.7853982
        %vm1879 = vcmp.lt.s32.totalorder %v321, 0
        %v1880 = vand.u32 %v321, 2139095040
        %v1881 = vshrl.u32 %v1880, 23
        %v1882 = vsub.s32 %v1881, 127
        %v1883 = vand.u32 2147483647, %v321
        %v1884 = vand.u32 %v1883, 8388607
        %v1885 = vor.u32 %v1884, 8388608
        %v1886 = vsub.s32 0, %v1885
        %v1887 = vadd.s32 %v1882, 1
        %vm1888 = vcmp.gt.s32.totalorder %v1887, 0
        %v1889 = vsel %vm1888, %v1887, 0
        %v1890 = vshrl.u32 %v1889, 5
        %v1891 = vand.u32 %v1889, 31
        %v1892 = vsub.s32 32, %v1891
        %v1893 = vshrl.u32 683565275, %v1892
        %v1894 = vshll.u32 683565275, %v1891
        %v1895 = vshrl.u32 2475754826, %v1892
        %v1896 = vor.u32 %v1894, %v1895
        %v1897 = vshll.u32 2475754826, %v1891
        %v1898 = vshrl.u32 2131351028, %v1892
        %v1899 = vor.u32 %v1897, %v1898
        %v1900 = vshll.u32 2131351028, %v1891
        %v1901 = vshrl.u32 2102212464, %v1892
        %v1902 = vor.u32 %v1900, %v1901
        %v1903 = vshll.u32 2102212464, %v1891
        %v1904 = vshrl.u32 920167782, %v1892
        %v1905 = vor.u32 %v1903, %v1904
        %v1906 = vshll.u32 920167782, %v1891
        %v1907 = vshrl.u32 1326507024, %v1892
        %v1908 = vor.u32 %v1906, %v1907
        %vm1909 = vcmp.lt.s32.totalorder %v1890, 1
        %vm1910 = vcmp.lt.s32.totalorder %v1890, 2
        %vm1911 = vcmp.lt.s32.totalorder %v1890, 3
        %vm1912 = vcmp.lt.s32.totalorder %v1890, 4
        %v1913 = vsel %vm1909, %v1893, %v1896
        %v1914 = vsel %vm1912, %v1902, 2102212464
        %v1915 = vsel %vm1911, %v1899, %v1914
        %v1916 = vsel %vm1910, %v1913, %v1915
        %v1917 = vsel %vm1909, %v1896, %v1899
        %v1918 = vsel %vm1912, %v1905, 920167782
        %v1919 = vsel %vm1911, %v1902, %v1918
        %v1920 = vsel %vm1910, %v1917, %v1919
        %v1921 = vsel %vm1909, %v1899, %v1902
        %v1922 = vsel %vm1912, %v1908, 1326507024
        %v1923 = vsel %vm1911, %v1905, %v1922
        %v1924 = vsel %vm1910, %v1921, %v1923
        %v1925 = vshll.u32 %v1885, 8
        %v1926 = vand.u32 %v1925, 65535
        %v1927 = vshrl.u32 %v1925, 16
        %v1928 = vand.u32 %v1924, 65535
        %v1929 = vshrl.u32 %v1924, 16
        %v1930 = vmul.u32 %v1926, %v1928
        %v1931 = vmul.u32 %v1926, %v1929
        %v1932 = vmul.u32 %v1927, %v1928
        %v1933 = vmul.u32 %v1927, %v1929
        %v1934 = vshll.u32 %v1931, 16
        %v1935 = vshrl.u32 %v1931, 16
        %v1936 = vshll.u32 %v1932, 16
        %v1937 = vshrl.u32 %v1932, 16
        %vm1938 = vc.u32 %v1930, %v1934
        %v1939 = vsel %vm1938, 1, 0
        %v1940 = vadd.s32 %v1930, %v1934
        %v1941 = vadd.s32 %v1933, %v1939
        %vm1942 = vc.u32 %v1940, %v1936
        %v1943 = vsel %vm1942, 1, 0
        %v1944 = vadd.s32 %v1940, %v1936
        %v1945 = vadd.s32 %v1941, %v1943
        %v1946 = vadd.s32 %v1945, %v1935
        %v1947 = vadd.s32 %v1946, %v1937
        %v1948 = vand.u32 %v1925, 65535
        %v1949 = vshrl.u32 %v1925, 16
        %v1950 = vand.u32 %v1920, 65535
        %v1951 = vshrl.u32 %v1920, 16
        %v1952 = vmul.u32 %v1948, %v1950
        %v1953 = vmul.u32 %v1948, %v1951
        %v1954 = vmul.u32 %v1949, %v1950
        %v1955 = vmul.u32 %v1949, %v1951
        %v1956 = vshll.u32 %v1953, 16
        %v1957 = vshrl.u32 %v1953, 16
        %v1958 = vshll.u32 %v1954, 16
        %v1959 = vshrl.u32 %v1954, 16
        %vm1960 = vc.u32 %v1952, %v1956
        %v1961 = vsel %vm1960, 1, 0
        %v1962 = vadd.s32 %v1952, %v1956
        %v1963 = vadd.s32 %v1955, %v1961
        %vm1964 = vc.u32 %v1962, %v1958
        %v1965 = vsel %vm1964, 1, 0
        %v1966 = vadd.s32 %v1962, %v1958
        %v1967 = vadd.s32 %v1963, %v1965
        %v1968 = vadd.s32 %v1967, %v1957
        %v1969 = vadd.s32 %v1968, %v1959
        %v1970 = vmul.u32 %v1925, %v1916
        %v1971 = vadd.s32 %v1947, %v1966
        %vm1972 = vc.u32 %v1947, %v1966
        %v1973 = vadd.s32 %v1969, 1
        %v1974 = vsel %vm1972, %v1973, %v1969
        %v1975 = vadd.s32 %v1970, %v1974
        %v1976 = vadd.s32 %v1975, 536870912
        %v1977 = vshrl.u32 %v1976, 30
        %v1978 = vshll.u32 %v1977, 30
        %v1979 = vsub.s32 %v1975, %v1978
        %vm1980 = vcmp.lt.s32.totalorder %v1979, 0
        %v1981 = vsub.s32 0, %v1979
        %v1982 = vsel %vm1980, %v1981, %v1979
        %v1983 = vclz %v1982
        %v1984 = vsub.s32 %v1983, 2
        %vm1985 = vcmp.gt.s32.totalorder 0, %v1984
        %v1986 = vsel %vm1985, 0, %v1984
        %v1987 = vsub.s32 32, %v1986
        %v1988 = vshll.u32 %v1979, %v1986
        %v1989 = vshrl.u32 %v1971, %v1987
        %v1990 = vor.u32 %v1988, %v1989
        %v1991 = vsub.s32 4294967266, %v1986
        %v1992 = vadd.s32 %v1991, 127
        %v1993 = vshll.u32 %v1992, 23
        %v1994 = vor.u32 4788187, %v1993
        %v1995 = vand.u32 2147483647, %v1994
        %v1997 = vcvt.s32.f32 %v1990
        %v1998 = vmul.f32 %v1997, %v1995
        %v1999 = vxor.u32 %v1998, 2147483648
        %v2000 = vsel %vm1879, %v1999, %v1998
        %v2001 = vsub.s32 4, %v1977
        %v2002 = vsel %vm1879, %v2001, %v1977
        %v2003 = vsel %vm1878, %v321, %v2000
        %v2004 = vsel %vm1878, 0, %v2002
        %v2005 = vmul.f32 %v2003, %v2003
        %v2006 = vmul.f32 %v2005, -0.001358992
        %v2007 = vadd.f32 %v2006, 0.041655596
        %v2008 = vmul.f32 %v2005, %v2007
        %v2009 = vadd.f32 %v2008, -0.4999988
        %v2010 = vmul.f32 %v2005, %v2009
        %v2011 = vadd.f32 1.0, %v2010
        %v2012 = vmul.f32 %v2003, %v2003
        %v2013 = vmul.f32 %v2012, -0.00019511016
        %v2014 = vadd.f32 %v2013, 0.008332121
        %v2015 = vmul.f32 %v2012, %v2014
        %v2016 = vadd.f32 %v2015, -0.16666654
        %v2017 = vmul.f32 %v2012, %v2016
        %v2018 = vadd.f32 %v2017, 1.0
        %v2019 = vmul.f32 %v2018, %v2003
        %vm2020 = vweird.f32 %v321
        %v2021 = vadd.s32 %v2004, 3
        %v2022 = vand.u32 %v2021, 3
        %vm2023 = vcmp.lt.s32.totalorder %v2022, 2
        %vm2024 = vcmp.eq.s32.totalorder %v2022, 0
        %v2025 = vxor.u32 %v2019, 2147483648
        %v2026 = vsel %vm2024, %v2011, %v2025
        %vm2027 = vcmp.eq.s32.totalorder %v2022, 2
        %v2028 = vxor.u32 %v2011, 2147483648
        %v2029 = vsel %vm2027, %v2028, %v2019
        %v2030 = vsel %vm2023, %v2026, %v2029
        %v2031 = vsel %vm2020, nan, %v2030
        %v2032 = vand.u32 2147483647, %v322
        %vm2033 = vcmp.le.f32.partialorder %v2032, 0.7853982
        %vm2034 = vcmp.lt.s32.totalorder %v322, 0
        %v2035 = vand.u32 %v322, 2139095040
        %v2036 = vshrl.u32 %v2035, 23
        %v2037 = vsub.s32 %v2036, 127
        %v2038 = vand.u32 2147483647, %v322
        %v2039 = vand.u32 %v2038, 8388607
        %v2040 = vor.u32 %v2039, 8388608
        %v2041 = vsub.s32 0, %v2040
        %v2042 = vadd.s32 %v2037, 1
        %vm2043 = vcmp.gt.s32.totalorder %v2042, 0
        %v2044 = vsel %vm2043, %v2042, 0
        %v2045 = vshrl.u32 %v2044, 5
        %v2046 = vand.u32 %v2044, 31
        %v2047 = vsub.s32 32, %v2046
        %v2048 = vshrl.u32 683565275, %v2047
        %v2049 = vshll.u32 683565275, %v2046
        %v2050 = vshrl.u32 2475754826, %v2047
        %v2051 = vor.u32 %v2049, %v2050
        %v2052 = vshll.u32 2475754826, %v2046
        %v2053 = vshrl.u32 2131351028, %v2047
        %v2054 = vor.u32 %v2052, %v2053
        %v2055 = vshll.u32 2131351028, %v2046
        %v2056 = vshrl.u32 2102212464, %v2047
        %v2057 = vor.u32 %v2055, %v2056
        %v2058 = vshll.u32 2102212464, %v2046
        %v2059 = vshrl.u32 920167782, %v2047
        %v2060 = vor.u32 %v2058, %v2059
        %v2061 = vshll.u32 920167782, %v2046
        %v2062 = vshrl.u32 1326507024, %v2047
        %v2063 = vor.u32 %v2061, %v2062
        %vm2064 = vcmp.lt.s32.totalorder %v2045, 1
        %vm2065 = vcmp.lt.s32.totalorder %v2045, 2
        %vm2066 = vcmp.lt.s32.totalorder %v2045, 3
        %vm2067 = vcmp.lt.s32.totalorder %v2045, 4
        %v2068 = vsel %vm2064, %v2048, %v2051
        %v2069 = vsel %vm2067, %v2057, 2102212464
        %v2070 = vsel %vm2066, %v2054, %v2069
        %v2071 = vsel %vm2065, %v2068, %v2070
        %v2072 = vsel %vm2064, %v2051, %v2054
        %v2073 = vsel %vm2067, %v2060, 920167782
        %v2074 = vsel %vm2066, %v2057, %v2073
        %v2075 = vsel %vm2065, %v2072, %v2074
        %v2076 = vsel %vm2064, %v2054, %v2057
        %v2077 = vsel %vm2067, %v2063, 1326507024
        %v2078 = vsel %vm2066, %v2060, %v2077
        %v2079 = vsel %vm2065, %v2076, %v2078
        %v2080 = vshll.u32 %v2040, 8
        %v2081 = vand.u32 %v2080, 65535
        %v2082 = vshrl.u32 %v2080, 16
        %v2083 = vand.u32 %v2079, 65535
        %v2084 = vshrl.u32 %v2079, 16
        %v2085 = vmul.u32 %v2081, %v2083
        %v2086 = vmul.u32 %v2081, %v2084
        %v2087 = vmul.u32 %v2082, %v2083
        %v2088 = vmul.u32 %v2082, %v2084
        %v2089 = vshll.u32 %v2086, 16
        %v2090 = vshrl.u32 %v2086, 16
        %v2091 = vshll.u32 %v2087, 16
        %v2092 = vshrl.u32 %v2087, 16
        %vm2093 = vc.u32 %v2085, %v2089
        %v2094 = vsel %vm2093, 1, 0
        %v2095 = vadd.s32 %v2085, %v2089
        %v2096 = vadd.s32 %v2088, %v2094
        %vm2097 = vc.u32 %v2095, %v2091
        %v2098 = vsel %vm2097, 1, 0
        %v2099 = vadd.s32 %v2095, %v2091
        %v2100 = vadd.s32 %v2096, %v2098
        %v2101 = vadd.s32 %v2100, %v2090
        %v2102 = vadd.s32 %v2101, %v2092
        %v2103 = vand.u32 %v2080, 65535
        %v2104 = vshrl.u32 %v2080, 16
        %v2105 = vand.u32 %v2075, 65535
        %v2106 = vshrl.u32 %v2075, 16
        %v2107 = vmul.u32 %v2103, %v2105
        %v2108 = vmul.u32 %v2103, %v2106
        %v2109 = vmul.u32 %v2104, %v2105
        %v2110 = vmul.u32 %v2104, %v2106
        %v2111 = vshll.u32 %v2108, 16
        %v2112 = vshrl.u32 %v2108, 16
        %v2113 = vshll.u32 %v2109, 16
        %v2114 = vshrl.u32 %v2109, 16
        %vm2115 = vc.u32 %v2107, %v2111
        %v2116 = vsel %vm2115, 1, 0
        %v2117 = vadd.s32 %v2107, %v2111
        %v2118 = vadd.s32 %v2110, %v2116
        %vm2119 = vc.u32 %v2117, %v2113
        %v2120 = vsel %vm2119, 1, 0
        %v2121 = vadd.s32 %v2117, %v2113
        %v2122 = vadd.s32 %v2118, %v2120
        %v2123 = vadd.s32 %v2122, %v2112
        %v2124 = vadd.s32 %v2123, %v2114
        %v2125 = vmul.u32 %v2080, %v2071
        %v2126 = vadd.s32 %v2102, %v2121
        %vm2127 = vc.u32 %v2102, %v2121
        %v2128 = vadd.s32 %v2124, 1
        %v2129 = vsel %vm2127, %v2128, %v2124
        %v2130 = vadd.s32 %v2125, %v2129
        %v2131 = vadd.s32 %v2130, 536870912
        %v2132 = vshrl.u32 %v2131, 30
        %v2133 = vshll.u32 %v2132, 30
        %v2134 = vsub.s32 %v2130, %v2133
        %vm2135 = vcmp.lt.s32.totalorder %v2134, 0
        %v2136 = vsub.s32 0, %v2134
        %v2137 = vsel %vm2135, %v2136, %v2134
        %v2138 = vclz %v2137
        %v2139 = vsub.s32 %v2138, 2
        %vm2140 = vcmp.gt.s32.totalorder 0, %v2139
        %v2141 = vsel %vm2140, 0, %v2139
        %v2142 = vsub.s32 32, %v2141
        %v2143 = vshll.u32 %v2134, %v2141
        %v2144 = vshrl.u32 %v2126, %v2142
        %v2145 = vor.u32 %v2143, %v2144
        %v2146 = vsub.s32 4294967266, %v2141
        %v2147 = vadd.s32 %v2146, 127
        %v2148 = vshll.u32 %v2147, 23
        %v2149 = vor.u32 4788187, %v2148
        %v2150 = vand.u32 2147483647, %v2149
        %v2152 = vcvt.s32.f32 %v2145
        %v2153 = vmul.f32 %v2152, %v2150
        %v2154 = vxor.u32 %v2153, 2147483648
        %v2155 = vsel %vm2034, %v2154, %v2153
        %v2156 = vsub.s32 4, %v2132
        %v2157 = vsel %vm2034, %v2156, %v2132
        %v2158 = vsel %vm2033, %v322, %v2155
        %v2159 = vsel %vm2033, 0, %v2157
        %v2160 = vmul.f32 %v2158, %v2158
        %v2161 = vmul.f32 %v2160, -0.001358992
        %v2162 = vadd.f32 %v2161, 0.041655596
        %v2163 = vmul.f32 %v2160, %v2162
        %v2164 = vadd.f32 %v2163, -0.4999988
        %v2165 = vmul.f32 %v2160, %v2164
        %v2166 = vadd.f32 1.0, %v2165
        %v2167 = vmul.f32 %v2158, %v2158
        %v2168 = vmul.f32 %v2167, -0.00019511016
        %v2169 = vadd.f32 %v2168, 0.008332121
        %v2170 = vmul.f32 %v2167, %v2169
        %v2171 = vadd.f32 %v2170, -0.16666654
        %v2172 = vmul.f32 %v2167, %v2171
        %v2173 = vadd.f32 %v2172, 1.0
        %v2174 = vmul.f32 %v2173, %v2158
        %vm2175 = vweird.f32 %v322
        %v2176 = vadd.s32 %v2159, 3
        %v2177 = vand.u32 %v2176, 3
        %vm2178 = vcmp.lt.s32.totalorder %v2177, 2
        %vm2179 = vcmp.eq.s32.totalorder %v2177, 0
        %v2180 = vxor.u32 %v2174, 2147483648
        %v2181 = vsel %vm2179, %v2166, %v2180
        %vm2182 = vcmp.eq.s32.totalorder %v2177, 2
        %v2183 = vxor.u32 %v2166, 2147483648
        %v2184 = vsel %vm2182, %v2183, %v2174
        %v2185 = vsel %vm2178, %v2181, %v2184
        %v2186 = vsel %vm2175, nan, %v2185
        %v2187 = vand.u32 2147483647, %v323
        %vm2188 = vcmp.le.f32.partialorder %v2187, 0.7853982
        %vm2189 = vcmp.lt.s32.totalorder %v323, 0
        %v2190 = vand.u32 %v323, 2139095040
        %v2191 = vshrl.u32 %v2190, 23
        %v2192 = vsub.s32 %v2191, 127
        %v2193 = vand.u32 2147483647, %v323
        %v2194 = vand.u32 %v2193, 8388607
        %v2195 = vor.u32 %v2194, 8388608
        %v2196 = vsub.s32 0, %v2195
        %v2197 = vadd.s32 %v2192, 1
        %vm2198 = vcmp.gt.s32.totalorder %v2197, 0
        %v2199 = vsel %vm2198, %v2197, 0
        %v2200 = vshrl.u32 %v2199, 5
        %v2201 = vand.u32 %v2199, 31
        %v2202 = vsub.s32 32, %v2201
        %v2203 = vshrl.u32 683565275, %v2202
        %v2204 = vshll.u32 683565275, %v2201
        %v2205 = vshrl.u32 2475754826, %v2202
        %v2206 = vor.u32 %v2204, %v2205
        %v2207 = vshll.u32 2475754826, %v2201
        %v2208 = vshrl.u32 2131351028, %v2202
        %v2209 = vor.u32 %v2207, %v2208
        %v2210 = vshll.u32 2131351028, %v2201
        %v2211 = vshrl.u32 2102212464, %v2202
        %v2212 = vor.u32 %v2210, %v2211
        %v2213 = vshll.u32 2102212464, %v2201
        %v2214 = vshrl.u32 920167782, %v2202
        %v2215 = vor.u32 %v2213, %v2214
        %v2216 = vshll.u32 920167782, %v2201
        %v2217 = vshrl.u32 1326507024, %v2202
        %v2218 = vor.u32 %v2216, %v2217
        %vm2219 = vcmp.lt.s32.totalorder %v2200, 1
        %vm2220 = vcmp.lt.s32.totalorder %v2200, 2
        %vm2221 = vcmp.lt.s32.totalorder %v2200, 3
        %vm2222 = vcmp.lt.s32.totalorder %v2200, 4
        %v2223 = vsel %vm2219, %v2203, %v2206
        %v2224 = vsel %vm2222, %v2212, 2102212464
        %v2225 = vsel %vm2221, %v2209, %v2224
        %v2226 = vsel %vm2220, %v2223, %v2225
        %v2227 = vsel %vm2219, %v2206, %v2209
        %v2228 = vsel %vm2222, %v2215, 920167782
        %v2229 = vsel %vm2221, %v2212, %v2228
        %v2230 = vsel %vm2220, %v2227, %v2229
        %v2231 = vsel %vm2219, %v2209, %v2212
        %v2232 = vsel %vm2222, %v2218, 1326507024
        %v2233 = vsel %vm2221, %v2215, %v2232
        %v2234 = vsel %vm2220, %v2231, %v2233
        %v2235 = vshll.u32 %v2195, 8
        %v2236 = vand.u32 %v2235, 65535
        %v2237 = vshrl.u32 %v2235, 16
        %v2238 = vand.u32 %v2234, 65535
        %v2239 = vshrl.u32 %v2234, 16
        %v2240 = vmul.u32 %v2236, %v2238
        %v2241 = vmul.u32 %v2236, %v2239
        %v2242 = vmul.u32 %v2237, %v2238
        %v2243 = vmul.u32 %v2237, %v2239
        %v2244 = vshll.u32 %v2241, 16
        %v2245 = vshrl.u32 %v2241, 16
        %v2246 = vshll.u32 %v2242, 16
        %v2247 = vshrl.u32 %v2242, 16
        %vm2248 = vc.u32 %v2240, %v2244
        %v2249 = vsel %vm2248, 1, 0
        %v2250 = vadd.s32 %v2240, %v2244
        %v2251 = vadd.s32 %v2243, %v2249
        %vm2252 = vc.u32 %v2250, %v2246
        %v2253 = vsel %vm2252, 1, 0
        %v2254 = vadd.s32 %v2250, %v2246
        %v2255 = vadd.s32 %v2251, %v2253
        %v2256 = vadd.s32 %v2255, %v2245
        %v2257 = vadd.s32 %v2256, %v2247
        %v2258 = vand.u32 %v2235, 65535
        %v2259 = vshrl.u32 %v2235, 16
        %v2260 = vand.u32 %v2230, 65535
        %v2261 = vshrl.u32 %v2230, 16
        %v2262 = vmul.u32 %v2258, %v2260
        %v2263 = vmul.u32 %v2258, %v2261
        %v2264 = vmul.u32 %v2259, %v2260
        %v2265 = vmul.u32 %v2259, %v2261
        %v2266 = vshll.u32 %v2263, 16
        %v2267 = vshrl.u32 %v2263, 16
        %v2268 = vshll.u32 %v2264, 16
        %v2269 = vshrl.u32 %v2264, 16
        %vm2270 = vc.u32 %v2262, %v2266
        %v2271 = vsel %vm2270, 1, 0
        %v2272 = vadd.s32 %v2262, %v2266
        %v2273 = vadd.s32 %v2265, %v2271
        %vm2274 = vc.u32 %v2272, %v2268
        %v2275 = vsel %vm2274, 1, 0
        %v2276 = vadd.s32 %v2272, %v2268
        %v2277 = vadd.s32 %v2273, %v2275
        %v2278 = vadd.s32 %v2277, %v2267
        %v2279 = vadd.s32 %v2278, %v2269
        %v2280 = vmul.u32 %v2235, %v2226
        %v2281 = vadd.s32 %v2257, %v2276
        %vm2282 = vc.u32 %v2257, %v2276
        %v2283 = vadd.s32 %v2279, 1
        %v2284 = vsel %vm2282, %v2283, %v2279
        %v2285 = vadd.s32 %v2280, %v2284
        %v2286 = vadd.s32 %v2285, 536870912
        %v2287 = vshrl.u32 %v2286, 30
        %v2288 = vshll.u32 %v2287, 30
        %v2289 = vsub.s32 %v2285, %v2288
        %vm2290 = vcmp.lt.s32.totalorder %v2289, 0
        %v2291 = vsub.s32 0, %v2289
        %v2292 = vsel %vm2290, %v2291, %v2289
        %v2293 = vclz %v2292
        %v2294 = vsub.s32 %v2293, 2
        %vm2295 = vcmp.gt.s32.totalorder 0, %v2294
        %v2296 = vsel %vm2295, 0, %v2294
        %v2297 = vsub.s32 32, %v2296
        %v2298 = vshll.u32 %v2289, %v2296
        %v2299 = vshrl.u32 %v2281, %v2297
        %v2300 = vor.u32 %v2298, %v2299
        %v2301 = vsub.s32 4294967266, %v2296
        %v2302 = vadd.s32 %v2301, 127
        %v2303 = vshll.u32 %v2302, 23
        %v2304 = vor.u32 4788187, %v2303
        %v2305 = vand.u32 2147483647, %v2304
        %v2307 = vcvt.s32.f32 %v2300
        %v2308 = vmul.f32 %v2307, %v2305
        %v2309 = vxor.u32 %v2308, 2147483648
        %v2310 = vsel %vm2189, %v2309, %v2308
        %v2311 = vsub.s32 4, %v2287
        %v2312 = vsel %vm2189, %v2311, %v2287
        %v2313 = vsel %vm2188, %v323, %v2310
        %v2314 = vsel %vm2188, 0, %v2312
        %v2315 = vmul.f32 %v2313, %v2313
        %v2316 = vmul.f32 %v2315, -0.001358992
        %v2317 = vadd.f32 %v2316, 0.041655596
        %v2318 = vmul.f32 %v2315, %v2317
        %v2319 = vadd.f32 %v2318, -0.4999988
        %v2320 = vmul.f32 %v2315, %v2319
        %v2321 = vadd.f32 1.0, %v2320
        %v2322 = vmul.f32 %v2313, %v2313
        %v2323 = vmul.f32 %v2322, -0.00019511016
        %v2324 = vadd.f32 %v2323, 0.008332121
        %v2325 = vmul.f32 %v2322, %v2324
        %v2326 = vadd.f32 %v2325, -0.16666654
        %v2327 = vmul.f32 %v2322, %v2326
        %v2328 = vadd.f32 %v2327, 1.0
        %v2329 = vmul.f32 %v2328, %v2313
        %vm2330 = vweird.f32 %v323
        %v2331 = vadd.s32 %v2314, 3
        %v2332 = vand.u32 %v2331, 3
        %vm2333 = vcmp.lt.s32.totalorder %v2332, 2
        %vm2334 = vcmp.eq.s32.totalorder %v2332, 0
        %v2335 = vxor.u32 %v2329, 2147483648
        %v2336 = vsel %vm2334, %v2321, %v2335
        %vm2337 = vcmp.eq.s32.totalorder %v2332, 2
        %v2338 = vxor.u32 %v2321, 2147483648
        %v2339 = vsel %vm2337, %v2338, %v2329
        %v2340 = vsel %vm2333, %v2336, %v2339
        %v2341 = vsel %vm2330, nan, %v2340
        %v2342 = vand.u32 2147483647, %v324
        %vm2343 = vcmp.le.f32.partialorder %v2342, 0.7853982
        %vm2344 = vcmp.lt.s32.totalorder %v324, 0
        %v2345 = vand.u32 %v324, 2139095040
        %v2346 = vshrl.u32 %v2345, 23
        %v2347 = vsub.s32 %v2346, 127
        %v2348 = vand.u32 2147483647, %v324
        %v2349 = vand.u32 %v2348, 8388607
        %v2350 = vor.u32 %v2349, 8388608
        %v2351 = vsub.s32 0, %v2350
        %v2352 = vadd.s32 %v2347, 1
        %vm2353 = vcmp.gt.s32.totalorder %v2352, 0
        %v2354 = vsel %vm2353, %v2352, 0
        %v2355 = vshrl.u32 %v2354, 5
        %v2356 = vand.u32 %v2354, 31
        %v2357 = vsub.s32 32, %v2356
        %v2358 = vshrl.u32 683565275, %v2357
        %v2359 = vshll.u32 683565275, %v2356
        %v2360 = vshrl.u32 2475754826, %v2357
        %v2361 = vor.u32 %v2359, %v2360
        %v2362 = vshll.u32 2475754826, %v2356
        %v2363 = vshrl.u32 2131351028, %v2357
        %v2364 = vor.u32 %v2362, %v2363
        %v2365 = vshll.u32 2131351028, %v2356
        %v2366 = vshrl.u32 2102212464, %v2357
        %v2367 = vor.u32 %v2365, %v2366
        %v2368 = vshll.u32 2102212464, %v2356
        %v2369 = vshrl.u32 920167782, %v2357
        %v2370 = vor.u32 %v2368, %v2369
        %v2371 = vshll.u32 920167782, %v2356
        %v2372 = vshrl.u32 1326507024, %v2357
        %v2373 = vor.u32 %v2371, %v2372
        %vm2374 = vcmp.lt.s32.totalorder %v2355, 1
        %vm2375 = vcmp.lt.s32.totalorder %v2355, 2
        %vm2376 = vcmp.lt.s32.totalorder %v2355, 3
        %vm2377 = vcmp.lt.s32.totalorder %v2355, 4
        %v2378 = vsel %vm2374, %v2358, %v2361
        %v2379 = vsel %vm2377, %v2367, 2102212464
        %v2380 = vsel %vm2376, %v2364, %v2379
        %v2381 = vsel %vm2375, %v2378, %v2380
        %v2382 = vsel %vm2374, %v2361, %v2364
        %v2383 = vsel %vm2377, %v2370, 920167782
        %v2384 = vsel %vm2376, %v2367, %v2383
        %v2385 = vsel %vm2375, %v2382, %v2384
        %v2386 = vsel %vm2374, %v2364, %v2367
        %v2387 = vsel %vm2377, %v2373, 1326507024
        %v2388 = vsel %vm2376, %v2370, %v2387
        %v2389 = vsel %vm2375, %v2386, %v2388
        %v2390 = vshll.u32 %v2350, 8
        %v2391 = vand.u32 %v2390, 65535
        %v2392 = vshrl.u32 %v2390, 16
        %v2393 = vand.u32 %v2389, 65535
        %v2394 = vshrl.u32 %v2389, 16
        %v2395 = vmul.u32 %v2391, %v2393
        %v2396 = vmul.u32 %v2391, %v2394
        %v2397 = vmul.u32 %v2392, %v2393
        %v2398 = vmul.u32 %v2392, %v2394
        %v2399 = vshll.u32 %v2396, 16
        %v2400 = vshrl.u32 %v2396, 16
        %v2401 = vshll.u32 %v2397, 16
        %v2402 = vshrl.u32 %v2397, 16
        %vm2403 = vc.u32 %v2395, %v2399
        %v2404 = vsel %vm2403, 1, 0
        %v2405 = vadd.s32 %v2395, %v2399
        %v2406 = vadd.s32 %v2398, %v2404
        %vm2407 = vc.u32 %v2405, %v2401
        %v2408 = vsel %vm2407, 1, 0
        %v2409 = vadd.s32 %v2405, %v2401
        %v2410 = vadd.s32 %v2406, %v2408
        %v2411 = vadd.s32 %v2410, %v2400
        %v2412 = vadd.s32 %v2411, %v2402
        %v2413 = vand.u32 %v2390, 65535
        %v2414 = vshrl.u32 %v2390, 16
        %v2415 = vand.u32 %v2385, 65535
        %v2416 = vshrl.u32 %v2385, 16
        %v2417 = vmul.u32 %v2413, %v2415
        %v2418 = vmul.u32 %v2413, %v2416
        %v2419 = vmul.u32 %v2414, %v2415
        %v2420 = vmul.u32 %v2414, %v2416
        %v2421 = vshll.u32 %v2418, 16
        %v2422 = vshrl.u32 %v2418, 16
        %v2423 = vshll.u32 %v2419, 16
        %v2424 = vshrl.u32 %v2419, 16
        %vm2425 = vc.u32 %v2417, %v2421
        %v2426 = vsel %vm2425, 1, 0
        %v2427 = vadd.s32 %v2417, %v2421
        %v2428 = vadd.s32 %v2420, %v2426
        %vm2429 = vc.u32 %v2427, %v2423
        %v2430 = vsel %vm2429, 1, 0
        %v2431 = vadd.s32 %v2427, %v2423
        %v2432 = vadd.s32 %v2428, %v2430
        %v2433 = vadd.s32 %v2432, %v2422
        %v2434 = vadd.s32 %v2433, %v2424
        %v2435 = vmul.u32 %v2390, %v2381
        %v2436 = vadd.s32 %v2412, %v2431
        %vm2437 = vc.u32 %v2412, %v2431
        %v2438 = vadd.s32 %v2434, 1
        %v2439 = vsel %vm2437, %v2438, %v2434
        %v2440 = vadd.s32 %v2435, %v2439
        %v2441 = vadd.s32 %v2440, 536870912
        %v2442 = vshrl.u32 %v2441, 30
        %v2443 = vshll.u32 %v2442, 30
        %v2444 = vsub.s32 %v2440, %v2443
        %vm2445 = vcmp.lt.s32.totalorder %v2444, 0
        %v2446 = vsub.s32 0, %v2444
        %v2447 = vsel %vm2445, %v2446, %v2444
        %v2448 = vclz %v2447
        %v2449 = vsub.s32 %v2448, 2
        %vm2450 = vcmp.gt.s32.totalorder 0, %v2449
        %v2451 = vsel %vm2450, 0, %v2449
        %v2452 = vsub.s32 32, %v2451
        %v2453 = vshll.u32 %v2444, %v2451
        %v2454 = vshrl.u32 %v2436, %v2452
        %v2455 = vor.u32 %v2453, %v2454
        %v2456 = vsub.s32 4294967266, %v2451
        %v2457 = vadd.s32 %v2456, 127
        %v2458 = vshll.u32 %v2457, 23
        %v2459 = vor.u32 4788187, %v2458
        %v2460 = vand.u32 2147483647, %v2459
        %v2462 = vcvt.s32.f32 %v2455
        %v2463 = vmul.f32 %v2462, %v2460
        %v2464 = vxor.u32 %v2463, 2147483648
        %v2465 = vsel %vm2344, %v2464, %v2463
        %v2466 = vsub.s32 4, %v2442
        %v2467 = vsel %vm2344, %v2466, %v2442
        %v2468 = vsel %vm2343, %v324, %v2465
        %v2469 = vsel %vm2343, 0, %v2467
        %v2470 = vmul.f32 %v2468, %v2468
        %v2471 = vmul.f32 %v2470, -0.001358992
        %v2472 = vadd.f32 %v2471, 0.041655596
        %v2473 = vmul.f32 %v2470, %v2472
        %v2474 = vadd.f32 %v2473, -0.4999988
        %v2475 = vmul.f32 %v2470, %v2474
        %v2476 = vadd.f32 1.0, %v2475
        %v2477 = vmul.f32 %v2468, %v2468
        %v2478 = vmul.f32 %v2477, -0.00019511016
        %v2479 = vadd.f32 %v2478, 0.008332121
        %v2480 = vmul.f32 %v2477, %v2479
        %v2481 = vadd.f32 %v2480, -0.16666654
        %v2482 = vmul.f32 %v2477, %v2481
        %v2483 = vadd.f32 %v2482, 1.0
        %v2484 = vmul.f32 %v2483, %v2468
        %vm2485 = vweird.f32 %v324
        %v2486 = vadd.s32 %v2469, 3
        %v2487 = vand.u32 %v2486, 3
        %vm2488 = vcmp.lt.s32.totalorder %v2487, 2
        %vm2489 = vcmp.eq.s32.totalorder %v2487, 0
        %v2490 = vxor.u32 %v2484, 2147483648
        %v2491 = vsel %vm2489, %v2476, %v2490
        %vm2492 = vcmp.eq.s32.totalorder %v2487, 2
        %v2493 = vxor.u32 %v2476, 2147483648
        %v2494 = vsel %vm2492, %v2493, %v2484
        %v2495 = vsel %vm2488, %v2491, %v2494
        %v2496 = vsel %vm2485, nan, %v2495
        %v2497 = vand.u32 2147483647, %v325
        %vm2498 = vcmp.le.f32.partialorder %v2497, 0.7853982
        %vm2499 = vcmp.lt.s32.totalorder %v325, 0
        %v2500 = vand.u32 %v325, 2139095040
        %v2501 = vshrl.u32 %v2500, 23
        %v2502 = vsub.s32 %v2501, 127
        %v2503 = vand.u32 2147483647, %v325
        %v2504 = vand.u32 %v2503, 8388607
        %v2505 = vor.u32 %v2504, 8388608
        %v2506 = vsub.s32 0, %v2505
        %v2507 = vadd.s32 %v2502, 1
        %vm2508 = vcmp.gt.s32.totalorder %v2507, 0
        %v2509 = vsel %vm2508, %v2507, 0
        %v2510 = vshrl.u32 %v2509, 5
        %v2511 = vand.u32 %v2509, 31
        %v2512 = vsub.s32 32, %v2511
        %v2513 = vshrl.u32 683565275, %v2512
        %v2514 = vshll.u32 683565275, %v2511
        %v2515 = vshrl.u32 2475754826, %v2512
        %v2516 = vor.u32 %v2514, %v2515
        %v2517 = vshll.u32 2475754826, %v2511
        %v2518 = vshrl.u32 2131351028, %v2512
        %v2519 = vor.u32 %v2517, %v2518
        %v2520 = vshll.u32 2131351028, %v2511
        %v2521 = vshrl.u32 2102212464, %v2512
        %v2522 = vor.u32 %v2520, %v2521
        %v2523 = vshll.u32 2102212464, %v2511
        %v2524 = vshrl.u32 920167782, %v2512
        %v2525 = vor.u32 %v2523, %v2524
        %v2526 = vshll.u32 920167782, %v2511
        %v2527 = vshrl.u32 1326507024, %v2512
        %v2528 = vor.u32 %v2526, %v2527
        %vm2529 = vcmp.lt.s32.totalorder %v2510, 1
        %vm2530 = vcmp.lt.s32.totalorder %v2510, 2
        %vm2531 = vcmp.lt.s32.totalorder %v2510, 3
        %vm2532 = vcmp.lt.s32.totalorder %v2510, 4
        %v2533 = vsel %vm2529, %v2513, %v2516
        %v2534 = vsel %vm2532, %v2522, 2102212464
        %v2535 = vsel %vm2531, %v2519, %v2534
        %v2536 = vsel %vm2530, %v2533, %v2535
        %v2537 = vsel %vm2529, %v2516, %v2519
        %v2538 = vsel %vm2532, %v2525, 920167782
        %v2539 = vsel %vm2531, %v2522, %v2538
        %v2540 = vsel %vm2530, %v2537, %v2539
        %v2541 = vsel %vm2529, %v2519, %v2522
        %v2542 = vsel %vm2532, %v2528, 1326507024
        %v2543 = vsel %vm2531, %v2525, %v2542
        %v2544 = vsel %vm2530, %v2541, %v2543
        %v2545 = vshll.u32 %v2505, 8
        %v2546 = vand.u32 %v2545, 65535
        %v2547 = vshrl.u32 %v2545, 16
        %v2548 = vand.u32 %v2544, 65535
        %v2549 = vshrl.u32 %v2544, 16
        %v2550 = vmul.u32 %v2546, %v2548
        %v2551 = vmul.u32 %v2546, %v2549
        %v2552 = vmul.u32 %v2547, %v2548
        %v2553 = vmul.u32 %v2547, %v2549
        %v2554 = vshll.u32 %v2551, 16
        %v2555 = vshrl.u32 %v2551, 16
        %v2556 = vshll.u32 %v2552, 16
        %v2557 = vshrl.u32 %v2552, 16
        %vm2558 = vc.u32 %v2550, %v2554
        %v2559 = vsel %vm2558, 1, 0
        %v2560 = vadd.s32 %v2550, %v2554
        %v2561 = vadd.s32 %v2553, %v2559
        %vm2562 = vc.u32 %v2560, %v2556
        %v2563 = vsel %vm2562, 1, 0
        %v2564 = vadd.s32 %v2560, %v2556
        %v2565 = vadd.s32 %v2561, %v2563
        %v2566 = vadd.s32 %v2565, %v2555
        %v2567 = vadd.s32 %v2566, %v2557
        %v2568 = vand.u32 %v2545, 65535
        %v2569 = vshrl.u32 %v2545, 16
        %v2570 = vand.u32 %v2540, 65535
        %v2571 = vshrl.u32 %v2540, 16
        %v2572 = vmul.u32 %v2568, %v2570
        %v2573 = vmul.u32 %v2568, %v2571
        %v2574 = vmul.u32 %v2569, %v2570
        %v2575 = vmul.u32 %v2569, %v2571
        %v2576 = vshll.u32 %v2573, 16
        %v2577 = vshrl.u32 %v2573, 16
        %v2578 = vshll.u32 %v2574, 16
        %v2579 = vshrl.u32 %v2574, 16
        %vm2580 = vc.u32 %v2572, %v2576
        %v2581 = vsel %vm2580, 1, 0
        %v2582 = vadd.s32 %v2572, %v2576
        %v2583 = vadd.s32 %v2575, %v2581
        %vm2584 = vc.u32 %v2582, %v2578
        %v2585 = vsel %vm2584, 1, 0
        %v2586 = vadd.s32 %v2582, %v2578
        %v2587 = vadd.s32 %v2583, %v2585
        %v2588 = vadd.s32 %v2587, %v2577
        %v2589 = vadd.s32 %v2588, %v2579
        %v2590 = vmul.u32 %v2545, %v2536
        %v2591 = vadd.s32 %v2567, %v2586
        %vm2592 = vc.u32 %v2567, %v2586
        %v2593 = vadd.s32 %v2589, 1
        %v2594 = vsel %vm2592, %v2593, %v2589
        %v2595 = vadd.s32 %v2590, %v2594
        %v2596 = vadd.s32 %v2595, 536870912
        %v2597 = vshrl.u32 %v2596, 30
        %v2598 = vshll.u32 %v2597, 30
        %v2599 = vsub.s32 %v2595, %v2598
        %vm2600 = vcmp.lt.s32.totalorder %v2599, 0
        %v2601 = vsub.s32 0, %v2599
        %v2602 = vsel %vm2600, %v2601, %v2599
        %v2603 = vclz %v2602
        %v2604 = vsub.s32 %v2603, 2
        %vm2605 = vcmp.gt.s32.totalorder 0, %v2604
        %v2606 = vsel %vm2605, 0, %v2604
        %v2607 = vsub.s32 32, %v2606
        %v2608 = vshll.u32 %v2599, %v2606
        %v2609 = vshrl.u32 %v2591, %v2607
        %v2610 = vor.u32 %v2608, %v2609
        %v2611 = vsub.s32 4294967266, %v2606
        %v2612 = vadd.s32 %v2611, 127
        %v2613 = vshll.u32 %v2612, 23
        %v2614 = vor.u32 4788187, %v2613
        %v2615 = vand.u32 2147483647, %v2614
        %v2617 = vcvt.s32.f32 %v2610
        %v2618 = vmul.f32 %v2617, %v2615
        %v2619 = vxor.u32 %v2618, 2147483648
        %v2620 = vsel %vm2499, %v2619, %v2618
        %v2621 = vsub.s32 4, %v2597
        %v2622 = vsel %vm2499, %v2621, %v2597
        %v2623 = vsel %vm2498, %v325, %v2620
        %v2624 = vsel %vm2498, 0, %v2622
        %v2625 = vmul.f32 %v2623, %v2623
        %v2626 = vmul.f32 %v2625, -0.001358992
        %v2627 = vadd.f32 %v2626, 0.041655596
        %v2628 = vmul.f32 %v2625, %v2627
        %v2629 = vadd.f32 %v2628, -0.4999988
        %v2630 = vmul.f32 %v2625, %v2629
        %v2631 = vadd.f32 1.0, %v2630
        %v2632 = vmul.f32 %v2623, %v2623
        %v2633 = vmul.f32 %v2632, -0.00019511016
        %v2634 = vadd.f32 %v2633, 0.008332121
        %v2635 = vmul.f32 %v2632, %v2634
        %v2636 = vadd.f32 %v2635, -0.16666654
        %v2637 = vmul.f32 %v2632, %v2636
        %v2638 = vadd.f32 %v2637, 1.0
        %v2639 = vmul.f32 %v2638, %v2623
        %vm2640 = vweird.f32 %v325
        %v2641 = vadd.s32 %v2624, 3
        %v2642 = vand.u32 %v2641, 3
        %vm2643 = vcmp.lt.s32.totalorder %v2642, 2
        %vm2644 = vcmp.eq.s32.totalorder %v2642, 0
        %v2645 = vxor.u32 %v2639, 2147483648
        %v2646 = vsel %vm2644, %v2631, %v2645
        %vm2647 = vcmp.eq.s32.totalorder %v2642, 2
        %v2648 = vxor.u32 %v2631, 2147483648
        %v2649 = vsel %vm2647, %v2648, %v2639
        %v2650 = vsel %vm2643, %v2646, %v2649
        %v2651 = vsel %vm2640, nan, %v2650
        %v2652 = vand.u32 2147483647, %v326
        %vm2653 = vcmp.le.f32.partialorder %v2652, 0.7853982
        %vm2654 = vcmp.lt.s32.totalorder %v326, 0
        %v2655 = vand.u32 %v326, 2139095040
        %v2656 = vshrl.u32 %v2655, 23
        %v2657 = vsub.s32 %v2656, 127
        %v2658 = vand.u32 2147483647, %v326
        %v2659 = vand.u32 %v2658, 8388607
        %v2660 = vor.u32 %v2659, 8388608
        %v2661 = vsub.s32 0, %v2660
        %v2662 = vadd.s32 %v2657, 1
        %vm2663 = vcmp.gt.s32.totalorder %v2662, 0
        %v2664 = vsel %vm2663, %v2662, 0
        %v2665 = vshrl.u32 %v2664, 5
        %v2666 = vand.u32 %v2664, 31
        %v2667 = vsub.s32 32, %v2666
        %v2668 = vshrl.u32 683565275, %v2667
        %v2669 = vshll.u32 683565275, %v2666
        %v2670 = vshrl.u32 2475754826, %v2667
        %v2671 = vor.u32 %v2669, %v2670
        %v2672 = vshll.u32 2475754826, %v2666
        %v2673 = vshrl.u32 2131351028, %v2667
        %v2674 = vor.u32 %v2672, %v2673
        %v2675 = vshll.u32 2131351028, %v2666
        %v2676 = vshrl.u32 2102212464, %v2667
        %v2677 = vor.u32 %v2675, %v2676
        %v2678 = vshll.u32 2102212464, %v2666
        %v2679 = vshrl.u32 920167782, %v2667
        %v2680 = vor.u32 %v2678, %v2679
        %v2681 = vshll.u32 920167782, %v2666
        %v2682 = vshrl.u32 1326507024, %v2667
        %v2683 = vor.u32 %v2681, %v2682
        %vm2684 = vcmp.lt.s32.totalorder %v2665, 1
        %vm2685 = vcmp.lt.s32.totalorder %v2665, 2
        %vm2686 = vcmp.lt.s32.totalorder %v2665, 3
        %vm2687 = vcmp.lt.s32.totalorder %v2665, 4
        %v2688 = vsel %vm2684, %v2668, %v2671
        %v2689 = vsel %vm2687, %v2677, 2102212464
        %v2690 = vsel %vm2686, %v2674, %v2689
        %v2691 = vsel %vm2685, %v2688, %v2690
        %v2692 = vsel %vm2684, %v2671, %v2674
        %v2693 = vsel %vm2687, %v2680, 920167782
        %v2694 = vsel %vm2686, %v2677, %v2693
        %v2695 = vsel %vm2685, %v2692, %v2694
        %v2696 = vsel %vm2684, %v2674, %v2677
        %v2697 = vsel %vm2687, %v2683, 1326507024
        %v2698 = vsel %vm2686, %v2680, %v2697
        %v2699 = vsel %vm2685, %v2696, %v2698
        %v2700 = vshll.u32 %v2660, 8
        %v2701 = vand.u32 %v2700, 65535
        %v2702 = vshrl.u32 %v2700, 16
        %v2703 = vand.u32 %v2699, 65535
        %v2704 = vshrl.u32 %v2699, 16
        %v2705 = vmul.u32 %v2701, %v2703
        %v2706 = vmul.u32 %v2701, %v2704
        %v2707 = vmul.u32 %v2702, %v2703
        %v2708 = vmul.u32 %v2702, %v2704
        %v2709 = vshll.u32 %v2706, 16
        %v2710 = vshrl.u32 %v2706, 16
        %v2711 = vshll.u32 %v2707, 16
        %v2712 = vshrl.u32 %v2707, 16
        %vm2713 = vc.u32 %v2705, %v2709
        %v2714 = vsel %vm2713, 1, 0
        %v2715 = vadd.s32 %v2705, %v2709
        %v2716 = vadd.s32 %v2708, %v2714
        %vm2717 = vc.u32 %v2715, %v2711
        %v2718 = vsel %vm2717, 1, 0
        %v2719 = vadd.s32 %v2715, %v2711
        %v2720 = vadd.s32 %v2716, %v2718
        %v2721 = vadd.s32 %v2720, %v2710
        %v2722 = vadd.s32 %v2721, %v2712
        %v2723 = vand.u32 %v2700, 65535
        %v2724 = vshrl.u32 %v2700, 16
        %v2725 = vand.u32 %v2695, 65535
        %v2726 = vshrl.u32 %v2695, 16
        %v2727 = vmul.u32 %v2723, %v2725
        %v2728 = vmul.u32 %v2723, %v2726
        %v2729 = vmul.u32 %v2724, %v2725
        %v2730 = vmul.u32 %v2724, %v2726
        %v2731 = vshll.u32 %v2728, 16
        %v2732 = vshrl.u32 %v2728, 16
        %v2733 = vshll.u32 %v2729, 16
        %v2734 = vshrl.u32 %v2729, 16
        %vm2735 = vc.u32 %v2727, %v2731
        %v2736 = vsel %vm2735, 1, 0
        %v2737 = vadd.s32 %v2727, %v2731
        %v2738 = vadd.s32 %v2730, %v2736
        %vm2739 = vc.u32 %v2737, %v2733
        %v2740 = vsel %vm2739, 1, 0
        %v2741 = vadd.s32 %v2737, %v2733
        %v2742 = vadd.s32 %v2738, %v2740
        %v2743 = vadd.s32 %v2742, %v2732
        %v2744 = vadd.s32 %v2743, %v2734
        %v2745 = vmul.u32 %v2700, %v2691
        %v2746 = vadd.s32 %v2722, %v2741
        %vm2747 = vc.u32 %v2722, %v2741
        %v2748 = vadd.s32 %v2744, 1
        %v2749 = vsel %vm2747, %v2748, %v2744
        %v2750 = vadd.s32 %v2745, %v2749
        %v2751 = vadd.s32 %v2750, 536870912
        %v2752 = vshrl.u32 %v2751, 30
        %v2753 = vshll.u32 %v2752, 30
        %v2754 = vsub.s32 %v2750, %v2753
        %vm2755 = vcmp.lt.s32.totalorder %v2754, 0
        %v2756 = vsub.s32 0, %v2754
        %v2757 = vsel %vm2755, %v2756, %v2754
        %v2758 = vclz %v2757
        %v2759 = vsub.s32 %v2758, 2
        %vm2760 = vcmp.gt.s32.totalorder 0, %v2759
        %v2761 = vsel %vm2760, 0, %v2759
        %v2762 = vsub.s32 32, %v2761
        %v2763 = vshll.u32 %v2754, %v2761
        %v2764 = vshrl.u32 %v2746, %v2762
        %v2765 = vor.u32 %v2763, %v2764
        %v2766 = vsub.s32 4294967266, %v2761
        %v2767 = vadd.s32 %v2766, 127
        %v2768 = vshll.u32 %v2767, 23
        %v2769 = vor.u32 4788187, %v2768
        %v2770 = vand.u32 2147483647, %v2769
        %v2772 = vcvt.s32.f32 %v2765
        %v2773 = vmul.f32 %v2772, %v2770
        %v2774 = vxor.u32 %v2773, 2147483648
        %v2775 = vsel %vm2654, %v2774, %v2773
        %v2776 = vsub.s32 4, %v2752
        %v2777 = vsel %vm2654, %v2776, %v2752
        %v2778 = vsel %vm2653, %v326, %v2775
        %v2779 = vsel %vm2653, 0, %v2777
        %v2780 = vmul.f32 %v2778, %v2778
        %v2781 = vmul.f32 %v2780, -0.001358992
        %v2782 = vadd.f32 %v2781, 0.041655596
        %v2783 = vmul.f32 %v2780, %v2782
        %v2784 = vadd.f32 %v2783, -0.4999988
        %v2785 = vmul.f32 %v2780, %v2784
        %v2786 = vadd.f32 1.0, %v2785
        %v2787 = vmul.f32 %v2778, %v2778
        %v2788 = vmul.f32 %v2787, -0.00019511016
        %v2789 = vadd.f32 %v2788, 0.008332121
        %v2790 = vmul.f32 %v2787, %v2789
        %v2791 = vadd.f32 %v2790, -0.16666654
        %v2792 = vmul.f32 %v2787, %v2791
        %v2793 = vadd.f32 %v2792, 1.0
        %v2794 = vmul.f32 %v2793, %v2778
        %vm2795 = vweird.f32 %v326
        %v2796 = vadd.s32 %v2779, 3
        %v2797 = vand.u32 %v2796, 3
        %vm2798 = vcmp.lt.s32.totalorder %v2797, 2
        %vm2799 = vcmp.eq.s32.totalorder %v2797, 0
        %v2800 = vxor.u32 %v2794, 2147483648
        %v2801 = vsel %vm2799, %v2786, %v2800
        %vm2802 = vcmp.eq.s32.totalorder %v2797, 2
        %v2803 = vxor.u32 %v2786, 2147483648
        %v2804 = vsel %vm2802, %v2803, %v2794
        %v2805 = vsel %vm2798, %v2801, %v2804
        %v2806 = vsel %vm2795, nan, %v2805
        %2807 = vst [vmem:[%s207] sm:$0xff] %v481
        %2808 = vst [vmem:[%s207 + $0x8] sm:$0xff] %v636
        %2809 = vst [vmem:[%s207 + $0x10] sm:$0xff] %v791
        %2810 = vst [vmem:[%s207 + $0x18] sm:$0xff] %v946
        %2811 = vst [vmem:[%s207 + $0x20] sm:$0xff] %v1101
        %2812 = vst [vmem:[%s207 + $0x28] sm:$0xff] %v1256
        %2813 = vst [vmem:[%s207 + $0x30] sm:$0xff] %v1411
        %2814 = vst [vmem:[%s207 + $0x38] sm:$0xff] %v1566
        %2815 = vst [vmem:[%s207 + $0x40] sm:$0xff] %v1721
        %2816 = vst [vmem:[%s207 + $0x48] sm:$0xff] %v1876
        %2817 = vst [vmem:[%s207 + $0x50] sm:$0xff] %v2031
        %2818 = vst [vmem:[%s207 + $0x58] sm:$0xff] %v2186
        %2819 = vst [vmem:[%s207 + $0x60] sm:$0xff] %v2341
        %2820 = vst [vmem:[%s207 + $0x68] sm:$0xff] %v2496
        %2821 = vst [vmem:[%s207 + $0x70] sm:$0xff] %v2651
        %2822 = vst [vmem:[%s207 + $0x78] sm:$0xff] %v2806
        %s2823 = sand.u32 %s97, 1
        %s2824 = scalar_lea.sflag [#allocation4], %s2823
        %s2825 = sand.u32 %s97, 1
        %s2826 = smul.addr %s2825, 128
        %s2827 = scalar_lea.vmem [#allocation7], %s2826
        // Predicated region
        $region41: #{tpu_custom_call.1} parent=31 // pred_check
          %p2828 = pneg %p107
        $region42: #{tpu_custom_call.1} parent=31 // pred_check_branch
          %2830 = sbr.rel (%p2828) target = $region44
        $region43: #{tpu_custom_call.1} parent=31 // pred_region
          %s2831 = smul.u32 16, %s21
          %2833 = vsyncadd %s2824, 0
          %s2834 = smul.addr %s2831, 8
          %s2835 = scalar_lea.hbm %s3, %s2834
          %s2836 = sshll.u32 %s2827, 4
          %s2837 = int_to_ptr.vmem [resolvable:$true] %s2836
          %s2838 = sshll.u32 %s2835, 4
          %s2839 = int_to_ptr.hbm [resolvable:$true] %s2838
          %2844 = dma.vmem_to_hbm [thread:$0]  %s2837, 2048, %s2839, %s2824, 128, 128, 8
        $region44: #{tpu_custom_call.1} parent=31 // pred_fallthru
          _
      $region32: #{tpu_custom_call.1} parent=5 // pred_fallthru
        _
      %p2845 = scmp.le.s32.totalorder 2, %s16
      // Predicated region
      $region45: #{tpu_custom_call.1} parent=5 // pred_check
        %p2846 = pneg %p2845
      $region46: #{tpu_custom_call.1} parent=5 // pred_check_branch
        %2848 = sbr.rel (%p2846) target = $region48
      $region47: #{tpu_custom_call.1} parent=5 // pred_region
        %s2849 = ssub.s32 %s16, 2
        // Predicated region
        $region49: #{tpu_custom_call.1} parent=47 // pred_check
          %p2850 = pneg %p113
        $region50: #{tpu_custom_call.1} parent=47 // pred_check_branch
          %2852 = sbr.rel (%p2850) target = $region52
        $region51: #{tpu_custom_call.1} parent=47 // pred_region
          %s2853 = sand.u32 %s98, 1
          %s2854 = scalar_lea.sflag [#allocation4], %s2853
          %s2855 = sand.u32 %s98, 1
          %s2856 = smul.addr %s2855, 128
          %s2857 = scalar_lea.vmem [#allocation7], %s2856
          %2859 = dma.done %s2854, 2048
        $region52: #{tpu_custom_call.1} parent=47 // pred_fallthru
          _
      $region48: #{tpu_custom_call.1} parent=5 // pred_fallthru
        _
    $region6: #{tpu_custom_call.1} parent=1 // loop_footer
      %s20 = sadd.s32 1, %s16
    $region7: #{tpu_custom_call.1} parent=1 // loop_footer_branch
      %15 = sbr.rel target = $region3
    $region8: #{tpu_custom_call.1} parent=1 // loop_exit
      _
    %2860 = vsyncpa [#allocation3], 1
    %s2861 = scalar_lea.sflag [#allocation3], 1
    %2862 = vsyncpa %s2861, 1
    %2863 = vsyncpa [#allocation6], 1
    %2864 = vsyncpa [#allocation4], 1
    %s2865 = scalar_lea.sflag [#allocation4], 1
    %2866 = vsyncpa %s2865, 1

</llo_original>
